<compile_context>
chip_gen: v7x
topology: tpu7x:2x2x1
jax: 0.10.0
libtpu: 0.0.40
codegen_flags: <defaults>
</compile_context>

<pallas_src>
import functools

import jax
import jax.numpy as jnp
from jax.experimental import pallas as pl
from jax.experimental.pallas import tpu as pltpu


def _round_up(v, m):
    return ((v + m - 1) // m) * m


def _double_conv_kernel(x_hbm, w1_ref, b1_ref, w2_ref, b2_ref, o_ref,
                        xbuf, xsem, mid_ref, acc_ref, *,
                        TH, H, W, Wp, Cp_in, Cp_mid, Cp_out, num_h, small_cin):
    """One (batch n, row-tile h) grid step of DoubleConv.

    x_hbm  : HBM ref (pl.ANY).  small_cin: (N, Hp+2, Wp, Cp_in) conv1 im2col;
                                otherwise: (N, Hp+4, Wp+2, Cp_in) padded input.
    w1_ref : (Cp_in, Cp_mid) or (9*Cp_in, Cp_mid) bf16, BN1 scale folded in.
    b1_ref : (1, Cp_mid) f32 folded BN1 shift.
    w2_ref : (9*Cp_mid, Cp_out) bf16, BN2 scale folded in.
    b2_ref : (1, Cp_out) f32 folded BN2 shift.
    o_ref  : (TH, Wp, Cp_out) bf16 output row tile.
    xbuf   : (2, rows, cols, Cp_in) bf16 double-buffered input window.
    xsem   : DMA semaphores (2,).
    mid_ref: (TH+2, Wp+16, Cp_mid) bf16 conv1 output (+ zero halo columns).
    acc_ref: ((TH+2)*Wp, max(Cp_mid, Cp_out)) f32 accumulator (reused by conv2).
    """
    n = pl.program_id(0)
    h = pl.program_id(1)
    TH2 = TH + 2
    rows = TH2 if small_cin else TH + 4
    CL = 8                      # sublane-aligned start of mid's interior cols
    f32 = jnp.float32

    # ---- manual double-buffered DMA of the halo'd input row window ---------
    def window_copy(h_idx, slot):
        start = pl.multiple_of(h_idx * TH, 8)
        return pltpu.make_async_copy(x_hbm.at[n, pl.ds(start, rows)],
                                     xbuf.at[slot], xsem.at[slot])

    slot = jax.lax.rem(h, 2)

    @pl.when(h == 0)            # first tile of this image: nothing in flight
    def _():
        window_copy(h, slot).start()

    window_copy(h, slot).wait()  # copy for this tile (started here or at h-1)

    if num_h > 1:
        @pl.when(h + 1 < num_h)  # prefetch the next row tile of this image
        def _():
            window_copy(h + 1, 1 - slot).start()

    xv = xbuf[slot]

    # ---- conv1 (+ folded BN1) -> ReLU -> mid (bf16) -------------------------
    # Accumulator seeded by (first matmul + bias): no zeros pass, no separate
    # bias/epilogue add pass.
    if small_cin:
        # single K = Cp_in (=128) matmul on the wrapper-built im2col patch
        patch = xv.reshape(TH2 * Wp, Cp_in)
        acc_ref[0:TH2 * Wp, 0:Cp_mid] = (
            jnp.dot(patch, w1_ref[...], preferred_element_type=f32)
            + b1_ref[...])
    else:
        # 3 dx taps merged along lanes (K = 3*Cp_in); 3 dy matmuls accumulate
        # into the VMEM scratch.
        K1 = 3 * Cp_in
        xc = jnp.concatenate(
            [xv[:, 0:Wp, :], xv[:, 1:Wp + 1, :], xv[:, 2:Wp + 2, :]], axis=-1)
        acc_ref[0:TH2 * Wp, 0:Cp_mid] = (
            jnp.dot(xc[0:TH2].reshape(TH2 * Wp, K1), w1_ref[0:K1, :],
                    preferred_element_type=f32) + b1_ref[...])
        acc_ref[0:TH2 * Wp, 0:Cp_mid] += jnp.dot(
            xc[1:1 + TH2].reshape(TH2 * Wp, K1), w1_ref[K1:2 * K1, :],
            preferred_element_type=f32)
        acc_ref[0:TH2 * Wp, 0:Cp_mid] += jnp.dot(
            xc[2:2 + TH2].reshape(TH2 * Wp, K1), w1_ref[2 * K1:3 * K1, :],
            preferred_element_type=f32)

    y1 = jnp.maximum(acc_ref[0:TH2 * Wp, 0:Cp_mid], 0.0)
    # Direct, sublane-aligned interior store (no concatenate + full re-store).
    mid_ref[:, CL:CL + Wp, :] = y1.reshape(TH2, Wp, Cp_mid).astype(mid_ref.dtype)

    zcol = jnp.zeros((TH2, 1, Cp_mid), mid_ref.dtype)
    if W < Wp:
        # conv2's zero padding at the true right image edge lies inside the
        # interior store, so it is re-zeroed every step (one narrow column).
        mid_ref[:, CL + W:CL + W + 1, :] = zcol

    zrow = jnp.zeros((1, Wp + 2 * CL, Cp_mid), mid_ref.dtype)

    @pl.when(h == 0)
    def _():
        # Constant zero halo columns: written once per image (never touched by
        # the interior store), plus conv2's zero-padding row at the image top.
        mid_ref[:, CL - 1:CL, :] = zcol
        mid_ref[:, CL + Wp:CL + Wp + 1, :] = zcol
        mid_ref[0:1, :, :] = zrow

    m_bot = H - (num_h - 1) * TH + 1   # mid row holding the true bottom edge

    @pl.when(h == num_h - 1)
    def _():
        mid_ref[m_bot:m_bot + 1, :, :] = zrow

    # ---- conv2 (+ folded BN2) -> ReLU -> output (bf16) ----------------------
    K2 = 3 * Cp_mid
    mv = mid_ref[...]
    mc = jnp.concatenate(
        [mv[:, CL - 1:CL - 1 + Wp, :], mv[:, CL:CL + Wp, :],
         mv[:, CL + 1:CL + 1 + Wp, :]], axis=-1)
    acc_ref[0:TH * Wp, 0:Cp_out] = (
        jnp.dot(mc[0:TH].reshape(TH * Wp, K2), w2_ref[0:K2, :],
                preferred_element_type=f32) + b2_ref[...])
    acc_ref[0:TH * Wp, 0:Cp_out] += jnp.dot(
        mc[1:1 + TH].reshape(TH * Wp, K2), w2_ref[K2:2 * K2, :],
        preferred_element_type=f32)
    acc_ref[0:TH * Wp, 0:Cp_out] += jnp.dot(
        mc[2:2 + TH].reshape(TH * Wp, K2), w2_ref[2 * K2:3 * K2, :],
        preferred_element_type=f32)

    o_ref[...] = jnp.maximum(acc_ref[0:TH * Wp, 0:Cp_out], 0.0).reshape(
        TH, Wp, Cp_out).astype(o_ref.dtype)


# ------------------------------ wrapper --------------------------------------


def _fold_bn(gamma, beta, mean, var, eps):
    inv = gamma / jnp.sqrt(var + eps)
    return inv, beta - mean * inv


def _pack_w_taps(w, scale, cpi, cpo):
    """OIHW conv weight -> (9*cpi, cpo) bf16, rows ordered (ky, kx, ci_padded)."""
    ci, co = w.shape[1], w.shape[0]
    wt = jnp.transpose(w.astype(jnp.float32), (2, 3, 1, 0)) * scale   # (3,3,ci,co)
    wp = jnp.zeros((3, 3, cpi, cpo), jnp.float32).at[:, :, :ci, :co].set(wt)
    return wp.reshape(9 * cpi, cpo).astype(jnp.bfloat16)


def _pack_w_im2col(w, scale, cpo):
    """OIHW conv weight -> (128, cpo) bf16, rows ordered (ky, kx, ci), 9*ci<=128."""
    ci, co = w.shape[1], w.shape[0]
    wt = jnp.transpose(w.astype(jnp.float32), (2, 3, 1, 0)) * scale   # (3,3,ci,co)
    wp = jnp.zeros((128, cpo), jnp.float32).at[:9 * ci, :co].set(
        wt.reshape(9 * ci, co))
    return wp.astype(jnp.bfloat16)


def _vmem_estimate(TH, Wp, Cp_in, Cp_mid, Cp_out, small_cin):
    """Rough per-step VMEM working set in bytes (incl. pipelined buffers)."""
    TH2 = TH + 2
    if small_cin:
        xbuf = 2 * TH2 * Wp * Cp_in * 2
        xtmp = 0
        w1 = 2 * Cp_in * Cp_mid * 2
    else:
        xbuf = 2 * (TH + 4) * (Wp + 2) * Cp_in * 2
        xtmp = (TH + 4) * Wp * 3 * Cp_in * 2          # xc lane-concat temporary
        w1 = 2 * 9 * Cp_in * Cp_mid * 2
    w2 = 2 * 9 * Cp_mid * Cp_out * 2
    mid = TH2 * (Wp + 16) * Cp_mid * 2
    mtmp = 2 * TH2 * Wp * 3 * Cp_mid * 2              # mc + one patch relayout
    acc = TH2 * Wp * max(Cp_mid, Cp_out) * 4
    out = 2 * TH * Wp * Cp_out * 2
    return xbuf + xtmp + w1 + w2 + mid + mtmp + acc + out + (2 << 20)


def _pick_tile(H, Wp, Cp_in, Cp_mid, Cp_out, small_cin, row_tile):
    try:
        vmem_cap = int(pltpu.get_tpu_info().vmem_capacity_bytes)
    except Exception:                                  # unknown chip: assume v7x
        vmem_cap = 64 * 1024 * 1024
    if row_tile is None:
        budget = int(vmem_cap * 0.55)
        row_tile = 8
        for cand in (32, 24, 16, 8):                   # biggest row tile that fits
            if _vmem_estimate(cand, Wp, Cp_in, Cp_mid, Cp_out, small_cin) <= budget:
                row_tile = cand
                break
    TH = min(_round_up(row_tile, 8), _round_up(H, 8))
    est = _vmem_estimate(TH, Wp, Cp_in, Cp_mid, Cp_out, small_cin)
    vmem_limit = max(32 * 1024 * 1024,
                     min(int(est * 1.4) + (4 << 20), int(vmem_cap * 0.9)))
    return TH, vmem_limit


def double_conv(x_nchw, w1, g1, bt1, rm1, rv1, w2, g2, bt2, rm2, rv2,
                eps=1e-5, row_tile=None, out_dtype=None):
    """DoubleConv forward (eval-mode BatchNorm folded into the convolutions).

    x_nchw: (N, Cin, H, W) float32.  Returns (N, Cout, H, W); bf16 by default
    (downstream conv blocks take bf16); pass out_dtype=jnp.float32 otherwise.
    """
    N, Cin, H, W = x_nchw.shape
    Cmid, Cout = w1.shape[0], w2.shape[0]

    small_cin = 9 * Cin <= 128          # UNet-stem path: pack conv1's whole im2col
    Cp_in = 128 if small_cin else _round_up(Cin, 128)
    Cp_mid = _round_up(Cmid, 128)
    Cp_out = _round_up(Cout, 128)
    Cpa = max(Cp_mid, Cp_out)
    Wp = _round_up(W, 8)                # keep reshapes / big stores (8,128)-aligned

    TH, vmem_limit = _pick_tile(H, Wp, Cp_in, Cp_mid, Cp_out, small_cin, row_tile)
    num_h = -(-H // TH)
    Hp = num_h * TH                     # pad H up instead of shrinking the tile

    # Fold eval-mode BatchNorm: per-channel scale goes into the bf16 weights,
    # the shift becomes an f32 bias added on the accumulator.
    s1, sh1 = _fold_bn(g1, bt1, rm1, rv1, eps)
    s2, sh2 = _fold_bn(g2, bt2, rm2, rv2, eps)

    x = jnp.transpose(x_nchw, (0, 2, 3, 1)).astype(jnp.bfloat16)    # NHWC bf16
    if small_cin:
        # conv1 im2col built once in the wrapper: 9*Cin (<=128) channels per
        # pixel.  Same HBM footprint as padding Cin to 128, but conv1 becomes
        # a single K=128 matmul with no zero-tap waste.
        xs = jnp.pad(x, ((0, 0), (1, 1), (1, 1), (0, 0)))
        g = jnp.concatenate(
            [xs[:, dy:dy + H, dx:dx + W, :]
             for dy in range(3) for dx in range(3)], axis=-1)       # (N,H,W,9*Cin)
        x_in = jnp.pad(g, ((0, 0), (1, Hp - H + 1), (0, Wp - W),
                           (0, Cp_in - 9 * Cin)))                   # (N,Hp+2,Wp,128)
        in_rows = TH + 2
        w1p = _pack_w_im2col(w1, s1, Cp_mid)
        xbuf_shape = (2, in_rows, Wp, Cp_in)
    else:
        x_in = jnp.pad(x, ((0, 0), (2, Hp - H + 2), (1, Wp - W + 1),
                           (0, Cp_in - Cin)))                       # (N,Hp+4,Wp+2,Cp)
        in_rows = TH + 4
        w1p = _pack_w_taps(w1, s1, Cp_in, Cp_mid)
        xbuf_shape = (2, in_rows, Wp + 2, Cp_in)

    w2p = _pack_w_taps(w2, s2, Cp_mid, Cp_out)
    b1p = jnp.zeros((1, Cp_mid), jnp.float32).at[0, :Cmid].set(sh1)
    b2p = jnp.zeros((1, Cp_out), jnp.float32).at[0, :Cout].set(sh2)

    kernel = functools.partial(
        _double_conv_kernel, TH=TH, H=H, W=W, Wp=Wp, Cp_in=Cp_in,
        Cp_mid=Cp_mid, Cp_out=Cp_out, num_h=num_h, small_cin=small_cin)

    out = pl.pallas_call(
        kernel,
        out_shape=jax.ShapeDtypeStruct((N, Hp, Wp, Cp_out), jnp.bfloat16),
        grid_spec=pltpu.PrefetchScalarGridSpec(
            num_scalar_prefetch=0,
            grid=(N, num_h),
            in_specs=[
                pl.BlockSpec(memory_space=pl.ANY),        # input stays in HBM
                # Weight/bias blocks have constant index maps -> DMA'd once and
                # reused across the grid.
                # TODO(synk): on v7x (64 MiB VMEM) single-buffer these via
                # pipeline_mode=pl.Buffered(1) to reclaim the second buffer.
                pl.BlockSpec(w1p.shape, lambda n, h: (0, 0)),
                pl.BlockSpec((1, Cp_mid), lambda n, h: (0, 0)),
                pl.BlockSpec(w2p.shape, lambda n, h: (0, 0)),
                pl.BlockSpec((1, Cp_out), lambda n, h: (0, 0)),
            ],
            out_specs=pl.BlockSpec((None, TH, Wp, Cp_out),
                                   lambda n, h: (n, h, 0, 0)),
            scratch_shapes=[
                pltpu.VMEM(xbuf_shape, jnp.bfloat16),      # double-buffered input
                pltpu.SemaphoreType.DMA((2,)),
                pltpu.VMEM((TH + 2, Wp + 16, Cp_mid), jnp.bfloat16),   # mid + halo
                pltpu.VMEM(((TH + 2) * Wp, Cpa), jnp.float32),         # f32 acc
            ]),
        compiler_params=pltpu.CompilerParams(
            # batch axis parallel (megacore / v7x two TensorCores); row-tile axis
            # must stay sequential because of the manual input prefetch chain.
            dimension_semantics=("parallel", "arbitrary"),
            vmem_limit_bytes=vmem_limit),
    )(x_in, w1p, b1p, w2p, b2p)

    out = jnp.transpose(out[:, :H, :W, :Cout], (0, 3, 1, 2))
    if out_dtype is not None and out.dtype != out_dtype:
        out = out.astype(out_dtype)
    return out


def _reference(x_nchw, w1, g1, bt1, rm1, rv1, w2, g2, bt2, rm2, rv2, eps=1e-5):
    """Pure-JAX f32 reference: (Conv3x3 -> eval BN -> ReLU) x 2, NCHW."""
    def block(x, w, g, bt, rm, rv):
        y = jax.lax.conv_general_dilated(
            x, w, window_strides=(1, 1), padding=((1, 1), (1, 1)),
            dimension_numbers=("NCHW", "OIHW", "NCHW"))
        inv = g / jnp.sqrt(rv + eps)
        scale = inv.reshape(1, -1, 1, 1)
        shift = (bt - rm * inv).reshape(1, -1, 1, 1)
        return jnp.maximum(y * scale + shift, 0.0)

    return block(block(x_nchw, w1, g1, bt1, rm1, rv1), w2, g2, bt2, rm2, rv2)


if __name__ == "__main__":
    key = jax.random.PRNGKey(0)

    def make_params(k, cin, cout):
        ks = jax.random.split(k, 10)
        w1 = 0.1 * jax.random.normal(ks[0], (cout, cin, 3, 3), jnp.float32)
        w2 = 0.1 * jax.random.normal(ks[1], (cout, cout, 3, 3), jnp.float32)
        g1 = 1.0 + 0.1 * jax.random.normal(ks[2], (cout,), jnp.float32)
        bt1 = 0.1 * jax.random.normal(ks[3], (cout,), jnp.float32)
        rm1 = 0.1 * jax.random.normal(ks[4], (cout,), jnp.float32)
        rv1 = 1.0 + 0.1 * jax.random.uniform(ks[5], (cout,), jnp.float32)
        g2 = 1.0 + 0.1 * jax.random.normal(ks[6], (cout,), jnp.float32)
        bt2 = 0.1 * jax.random.normal(ks[7], (cout,), jnp.float32)
        rm2 = 0.1 * jax.random.normal(ks[8], (cout,), jnp.float32)
        rv2 = 1.0 + 0.1 * jax.random.uniform(ks[9], (cout,), jnp.float32)
        return (w1, g1, bt1, rm1, rv1, w2, g2, bt2, rm2, rv2)

    configs = [
        # (N, Cin, Cout, H, W, row_tile)
        (2, 4, 8, 16, 16, None),    # small-Cin im2col path (the spec's shapes)
        (2, 16, 16, 12, 12, None),  # large-Cin path + H/W padding
        (1, 4, 8, 20, 16, 8),       # multiple row tiles: manual DMA prefetch chain
    ]
    keys = jax.random.split(key, len(configs))
    for i, (N, Cin, Cout, H, W, rt) in enumerate(configs):
        kx, kp = jax.random.split(keys[i], 2)
        x = jax.random.normal(kx, (N, Cin, H, W), jnp.float32)
        params = make_params(kp, Cin, Cout)

        out = double_conv(x, *params, row_tile=rt)
        out = jax.block_until_ready(out)
        assert out.shape == (N, Cout, H, W), out.shape

        ref = _reference(x, *params)
        err = jnp.abs(out.astype(jnp.float32) - ref)
        max_err = float(jnp.max(err))
        mean_err = float(jnp.mean(err))
        # bf16 MXU operands + bf16 output => looser tolerance than pure f32.
        assert max_err < 1.5e-1 and mean_err < 2e-2, (i, max_err, mean_err)

    print("KERNEL_OK")
</pallas_src>

<mosaic_0001>
module attributes {stable_mosaic.version = 11 : i64} {
  func.func @_double_conv_kernel(%arg0: i32, %arg1: i32, %arg2: memref<2x18x16x128xbf16, #tpu.memory_space<any>>, %arg3: memref<128x128xbf16, #tpu.memory_space<vmem>>, %arg4: memref<1x128xf32, #tpu.memory_space<vmem>>, %arg5: memref<1152x128xbf16, #tpu.memory_space<vmem>>, %arg6: memref<1x128xf32, #tpu.memory_space<vmem>>, %arg7: memref<1x16x16x128xbf16, #tpu.memory_space<vmem>>, %arg8: memref<2x18x16x128xbf16, #tpu.memory_space<vmem>>, %arg9: memref<2x!tpu.dma_semaphore, #tpu.memory_space<semaphore_mem>>, %arg10: memref<18x32x128xbf16, #tpu.memory_space<vmem>>, %arg11: memref<288x128xf32, #tpu.memory_space<vmem>>) attributes {dimension_semantics = [#tpu.dimension_semantics<parallel>, #tpu.dimension_semantics<arbitrary>], iteration_bounds = array<i64: 2, 1>, scalar_prefetch = 0 : i64, scratch_operands = 4 : i64, tpu.core_type = #tpu.core_type<tc>, window_params = [{}, {pipeline_mode = #tpu.pipeline_mode<synchronous>, transform_indices = @transform_1, window_bounds = array<i64: 128, 128>}, {pipeline_mode = #tpu.pipeline_mode<synchronous>, transform_indices = @transform_2, window_bounds = array<i64: 1, 128>}, {pipeline_mode = #tpu.pipeline_mode<synchronous>, transform_indices = @transform_3, window_bounds = array<i64: 1152, 128>}, {pipeline_mode = #tpu.pipeline_mode<synchronous>, transform_indices = @transform_4, window_bounds = array<i64: 1, 128>}, {transform_indices = @transform_5, window_bounds = array<i64: 1, 16, 16, 128>}]} {
    %c2_i32 = arith.constant 2 : i32
    %0 = arith.remsi %arg1, %c2_i32 : i32
    %c0_i32 = arith.constant 0 : i32
    %1 = arith.cmpi eq, %arg1, %c0_i32 : i32
    %2 = arith.extui %1 : i1 to i32
    %c0_i32_0 = arith.constant 0 : i32
    %3 = arith.cmpi ne, %2, %c0_i32_0 : i32
    scf.if %3 {
      %c16_i32_54 = arith.constant 16 : i32
      %71 = arith.muli %arg1, %c16_i32_54 : i32
      %72 = tpu.assume_multiple %71, 8 : i32
      %c0_i32_55 = arith.constant 0 : i32
      %c0_i32_56 = arith.constant 0 : i32
      %73 = tpu.memref_slice %arg2[%arg0, %72, %c0_i32_55, %c0_i32_56] : memref<2x18x16x128xbf16, #tpu.memory_space<any>> -> memref<1x18x16x128xbf16, #tpu.memory_space<any>>
      %74 = tpu.memref_squeeze %73 : memref<1x18x16x128xbf16, #tpu.memory_space<any>> -> memref<18x16x128xbf16, #tpu.memory_space<any>>
      %c0_i32_57 = arith.constant 0 : i32
      %c0_i32_58 = arith.constant 0 : i32
      %c0_i32_59 = arith.constant 0 : i32
      %75 = tpu.memref_slice %arg8[%0, %c0_i32_57, %c0_i32_58, %c0_i32_59] : memref<2x18x16x128xbf16, #tpu.memory_space<vmem>> -> memref<1x18x16x128xbf16, #tpu.memory_space<vmem>>
      %76 = tpu.memref_squeeze %75 : memref<1x18x16x128xbf16, #tpu.memory_space<vmem>> -> memref<18x16x128xbf16, #tpu.memory_space<vmem>>
      %77 = tpu.memref_slice %arg9[%0] : memref<2x!tpu.dma_semaphore, #tpu.memory_space<semaphore_mem>> -> memref<1x!tpu.dma_semaphore, #tpu.memory_space<semaphore_mem>>
      %78 = tpu.memref_squeeze %77 : memref<1x!tpu.dma_semaphore, #tpu.memory_space<semaphore_mem>> -> memref<!tpu.dma_semaphore, #tpu.memory_space<semaphore_mem>>
      tpu.enqueue_dma source(%74 : memref<18x16x128xbf16, #tpu.memory_space<any>>) target(%76 : memref<18x16x128xbf16, #tpu.memory_space<vmem>>) target_semaphore(%78 : memref<!tpu.dma_semaphore, #tpu.memory_space<semaphore_mem>>)
    } else {
    }
    %c16_i32 = arith.constant 16 : i32
    %4 = arith.muli %arg1, %c16_i32 : i32
    %5 = tpu.assume_multiple %4, 8 : i32
    %c0_i32_1 = arith.constant 0 : i32
    %c0_i32_2 = arith.constant 0 : i32
    %6 = tpu.memref_slice %arg2[%arg0, %5, %c0_i32_1, %c0_i32_2] : memref<2x18x16x128xbf16, #tpu.memory_space<any>> -> memref<1x18x16x128xbf16, #tpu.memory_space<any>>
    %7 = tpu.memref_squeeze %6 : memref<1x18x16x128xbf16, #tpu.memory_space<any>> -> memref<18x16x128xbf16, #tpu.memory_space<any>>
    %c0_i32_3 = arith.constant 0 : i32
    %c0_i32_4 = arith.constant 0 : i32
    %c0_i32_5 = arith.constant 0 : i32
    %8 = tpu.memref_slice %arg8[%0, %c0_i32_3, %c0_i32_4, %c0_i32_5] : memref<2x18x16x128xbf16, #tpu.memory_space<vmem>> -> memref<1x18x16x128xbf16, #tpu.memory_space<vmem>>
    %9 = tpu.memref_squeeze %8 : memref<1x18x16x128xbf16, #tpu.memory_space<vmem>> -> memref<18x16x128xbf16, #tpu.memory_space<vmem>>
    %10 = tpu.memref_slice %arg9[%0] : memref<2x!tpu.dma_semaphore, #tpu.memory_space<semaphore_mem>> -> memref<1x!tpu.dma_semaphore, #tpu.memory_space<semaphore_mem>>
    %11 = tpu.memref_squeeze %10 : memref<1x!tpu.dma_semaphore, #tpu.memory_space<semaphore_mem>> -> memref<!tpu.dma_semaphore, #tpu.memory_space<semaphore_mem>>
    tpu.wait_dma2 semaphore(%11 : memref<!tpu.dma_semaphore, #tpu.memory_space<semaphore_mem>>) src(%7 : memref<18x16x128xbf16, #tpu.memory_space<any>>) dst(%9 : memref<18x16x128xbf16, #tpu.memory_space<vmem>>)
    %12 = arith.index_cast %0 : i32 to index
    %c0 = arith.constant 0 : index
    %c0_6 = arith.constant 0 : index
    %c0_7 = arith.constant 0 : index
    %13 = vector.load %arg8[%12, %c0, %c0_6, %c0_7] : memref<2x18x16x128xbf16, #tpu.memory_space<vmem>>, vector<1x18x16x128xbf16>
    %14 = vector.shape_cast %13 : vector<1x18x16x128xbf16> to vector<18x16x128xbf16>
    %15 = vector.shape_cast %14 : vector<18x16x128xbf16> to vector<288x128xbf16>
    %c0_8 = arith.constant 0 : index
    %c0_9 = arith.constant 0 : index
    %16 = vector.load %arg3[%c0_8, %c0_9] : memref<128x128xbf16, #tpu.memory_space<vmem>>, vector<128x128xbf16>
    %cst = arith.constant dense<0.000000e+00> : vector<288x128xf32>
    %17 = tpu.matmul %15, %16, %cst {dimension_numbers = #tpu.dot_dimension_numbers<[1], [0], [0], [1], [0, 0, 1, 1], [], []>} : vector<288x128xbf16>, vector<128x128xbf16>, vector<288x128xf32> -> vector<288x128xf32>
    %c0_10 = arith.constant 0 : index
    %c0_11 = arith.constant 0 : index
    %18 = vector.load %arg4[%c0_10, %c0_11] : memref<1x128xf32, #tpu.memory_space<vmem>>, vector<1x128xf32>
    %19 = vector.broadcast %18 : vector<1x128xf32> to vector<288x128xf32>
    %20 = arith.addf %17, %19 : vector<288x128xf32>
    %c0_12 = arith.constant 0 : index
    %c0_13 = arith.constant 0 : index
    %21 = vector.load %arg11[%c0_12, %c0_13] : memref<288x128xf32, #tpu.memory_space<vmem>>, vector<288x128xf32>
    tpu.vector_store %arg11[%c0_12, %c0_13], %20 {strides = array<i32>} : memref<288x128xf32, #tpu.memory_space<vmem>>, vector<288x128xf32>,
    %c0_14 = arith.constant 0 : index
    %c0_15 = arith.constant 0 : index
    %22 = vector.load %arg11[%c0_14, %c0_15] : memref<288x128xf32, #tpu.memory_space<vmem>>, vector<288x128xf32>
    %cst_16 = arith.constant 0.000000e+00 : f32
    %23 = vector.broadcast %cst_16 : f32 to vector<288x128xf32>
    %24 = arith.maximumf %22, %23 : vector<288x128xf32>
    %25 = vector.shape_cast %24 : vector<288x128xf32> to vector<18x16x128xf32>
    %26 = arith.truncf %25 : vector<18x16x128xf32> to vector<18x16x128xbf16>
    %c0_17 = arith.constant 0 : index
    %c8 = arith.constant 8 : index
    %c0_18 = arith.constant 0 : index
    %27 = vector.load %arg10[%c0_17, %c8, %c0_18] : memref<18x32x128xbf16, #tpu.memory_space<vmem>>, vector<18x16x128xbf16>
    tpu.vector_store %arg10[%c0_17, %c8, %c0_18], %26 {strides = array<i32>} : memref<18x32x128xbf16, #tpu.memory_space<vmem>>, vector<18x16x128xbf16>,
    %cst_19 = arith.constant 0.000000e+00 : bf16
    %28 = vector.broadcast %cst_19 : bf16 to vector<18x1x128xbf16>
    %cst_20 = arith.constant 0.000000e+00 : bf16
    %29 = vector.broadcast %cst_20 : bf16 to vector<1x32x128xbf16>
    %c0_i32_21 = arith.constant 0 : i32
    %30 = arith.cmpi eq, %arg1, %c0_i32_21 : i32
    %31 = arith.extui %30 : i1 to i32
    %c0_i32_22 = arith.constant 0 : i32
    %32 = arith.cmpi ne, %31, %c0_i32_22 : i32
    scf.if %32 {
      %c0_54 = arith.constant 0 : index
      %c7 = arith.constant 7 : index
      %c0_55 = arith.constant 0 : index
      %71 = vector.load %arg10[%c0_54, %c7, %c0_55] : memref<18x32x128xbf16, #tpu.memory_space<vmem>>, vector<18x1x128xbf16>
      tpu.vector_store %arg10[%c0_54, %c7, %c0_55], %28 {strides = array<i32>} : memref<18x32x128xbf16, #tpu.memory_space<vmem>>, vector<18x1x128xbf16>,
      %c0_56 = arith.constant 0 : index
      %c24 = arith.constant 24 : index
      %c0_57 = arith.constant 0 : index
      %72 = vector.load %arg10[%c0_56, %c24, %c0_57] : memref<18x32x128xbf16, #tpu.memory_space<vmem>>, vector<18x1x128xbf16>
      tpu.vector_store %arg10[%c0_56, %c24, %c0_57], %28 {strides = array<i32>} : memref<18x32x128xbf16, #tpu.memory_space<vmem>>, vector<18x1x128xbf16>,
      %c0_58 = arith.constant 0 : index
      %c0_59 = arith.constant 0 : index
      %c0_60 = arith.constant 0 : index
      %73 = vector.load %arg10[%c0_58, %c0_59, %c0_60] : memref<18x32x128xbf16, #tpu.memory_space<vmem>>, vector<1x32x128xbf16>
      tpu.vector_store %arg10[%c0_58, %c0_59, %c0_60], %29 {strides = array<i32>} : memref<18x32x128xbf16, #tpu.memory_space<vmem>>, vector<1x32x128xbf16>,
    } else {
    }
    %c0_i32_23 = arith.constant 0 : i32
    %33 = arith.cmpi eq, %arg1, %c0_i32_23 : i32
    %34 = arith.extui %33 : i1 to i32
    %c0_i32_24 = arith.constant 0 : i32
    %35 = arith.cmpi ne, %34, %c0_i32_24 : i32
    scf.if %35 {
      %c17 = arith.constant 17 : index
      %c0_54 = arith.constant 0 : index
      %c0_55 = arith.constant 0 : index
      %71 = vector.load %arg10[%c17, %c0_54, %c0_55] : memref<18x32x128xbf16, #tpu.memory_space<vmem>>, vector<1x32x128xbf16>
      tpu.vector_store %arg10[%c17, %c0_54, %c0_55], %29 {strides = array<i32>} : memref<18x32x128xbf16, #tpu.memory_space<vmem>>, vector<1x32x128xbf16>,
    } else {
    }
    %c0_25 = arith.constant 0 : index
    %c0_26 = arith.constant 0 : index
    %c0_27 = arith.constant 0 : index
    %36 = vector.load %arg10[%c0_25, %c0_26, %c0_27] : memref<18x32x128xbf16, #tpu.memory_space<vmem>>, vector<18x32x128xbf16>
    %37 = vector.extract_strided_slice %36 {offsets = [0, 7, 0], sizes = [18, 16, 128], strides = [1, 1, 1]} : vector<18x32x128xbf16> to vector<18x16x128xbf16>
    %38 = vector.extract_strided_slice %36 {offsets = [0, 8, 0], sizes = [18, 16, 128], strides = [1, 1, 1]} : vector<18x32x128xbf16> to vector<18x16x128xbf16>
    %39 = vector.extract_strided_slice %36 {offsets = [0, 9, 0], sizes = [18, 16, 128], strides = [1, 1, 1]} : vector<18x32x128xbf16> to vector<18x16x128xbf16>
    %40 = tpu.concatenate %37, %38, %39 in 2 : vector<18x16x128xbf16>, vector<18x16x128xbf16>, vector<18x16x128xbf16> -> vector<18x16x384xbf16>
    %41 = vector.extract_strided_slice %40 {offsets = [0, 0, 0], sizes = [16, 16, 384], strides = [1, 1, 1]} : vector<18x16x384xbf16> to vector<16x16x384xbf16>
    %42 = vector.shape_cast %41 : vector<16x16x384xbf16> to vector<256x384xbf16>
    %c0_28 = arith.constant 0 : index
    %c0_29 = arith.constant 0 : index
    %43 = vector.load %arg5[%c0_28, %c0_29] : memref<1152x128xbf16, #tpu.memory_space<vmem>>, vector<384x128xbf16>
    %cst_30 = arith.constant dense<0.000000e+00> : vector<256x128xf32>
    %44 = tpu.matmul %42, %43, %cst_30 {dimension_numbers = #tpu.dot_dimension_numbers<[1], [0], [0], [1], [0, 0, 1, 1], [], []>} : vector<256x384xbf16>, vector<384x128xbf16>, vector<256x128xf32> -> vector<256x128xf32>
    %c0_31 = arith.constant 0 : index
    %c0_32 = arith.constant 0 : index
    %45 = vector.load %arg6[%c0_31, %c0_32] : memref<1x128xf32, #tpu.memory_space<vmem>>, vector<1x128xf32>
    %46 = vector.broadcast %45 : vector<1x128xf32> to vector<256x128xf32>
    %47 = arith.addf %44, %46 : vector<256x128xf32>
    %c0_33 = arith.constant 0 : index
    %c0_34 = arith.constant 0 : index
    %48 = vector.load %arg11[%c0_33, %c0_34] : memref<288x128xf32, #tpu.memory_space<vmem>>, vector<256x128xf32>
    tpu.vector_store %arg11[%c0_33, %c0_34], %47 {strides = array<i32>} : memref<288x128xf32, #tpu.memory_space<vmem>>, vector<256x128xf32>,
    %c0_35 = arith.constant 0 : index
    %c0_36 = arith.constant 0 : index
    %49 = vector.load %arg11[%c0_35, %c0_36] : memref<288x128xf32, #tpu.memory_space<vmem>>, vector<256x128xf32>
    %50 = vector.extract_strided_slice %40 {offsets = [1, 0, 0], sizes = [16, 16, 384], strides = [1, 1, 1]} : vector<18x16x384xbf16> to vector<16x16x384xbf16>
    %51 = vector.shape_cast %50 : vector<16x16x384xbf16> to vector<256x384xbf16>
    %c384 = arith.constant 384 : index
    %c0_37 = arith.constant 0 : index
    %52 = vector.load %arg5[%c384, %c0_37] : memref<1152x128xbf16, #tpu.memory_space<vmem>>, vector<384x128xbf16>
    %cst_38 = arith.constant dense<0.000000e+00> : vector<256x128xf32>
    %53 = tpu.matmul %51, %52, %cst_38 {dimension_numbers = #tpu.dot_dimension_numbers<[1], [0], [0], [1], [0, 0, 1, 1], [], []>} : vector<256x384xbf16>, vector<384x128xbf16>, vector<256x128xf32> -> vector<256x128xf32>
    %54 = arith.addf %49, %53 : vector<256x128xf32>
    %c0_39 = arith.constant 0 : index
    %c0_40 = arith.constant 0 : index
    %55 = vector.load %arg11[%c0_39, %c0_40] : memref<288x128xf32, #tpu.memory_space<vmem>>, vector<256x128xf32>
    tpu.vector_store %arg11[%c0_39, %c0_40], %54 {strides = array<i32>} : memref<288x128xf32, #tpu.memory_space<vmem>>, vector<256x128xf32>,
    %c0_41 = arith.constant 0 : index
    %c0_42 = arith.constant 0 : index
    %56 = vector.load %arg11[%c0_41, %c0_42] : memref<288x128xf32, #tpu.memory_space<vmem>>, vector<256x128xf32>
    %57 = vector.extract_strided_slice %40 {offsets = [2, 0, 0], sizes = [16, 16, 384], strides = [1, 1, 1]} : vector<18x16x384xbf16> to vector<16x16x384xbf16>
    %58 = vector.shape_cast %57 : vector<16x16x384xbf16> to vector<256x384xbf16>
    %c768 = arith.constant 768 : index
    %c0_43 = arith.constant 0 : index
    %59 = vector.load %arg5[%c768, %c0_43] : memref<1152x128xbf16, #tpu.memory_space<vmem>>, vector<384x128xbf16>
    %cst_44 = arith.constant dense<0.000000e+00> : vector<256x128xf32>
    %60 = tpu.matmul %58, %59, %cst_44 {dimension_numbers = #tpu.dot_dimension_numbers<[1], [0], [0], [1], [0, 0, 1, 1], [], []>} : vector<256x384xbf16>, vector<384x128xbf16>, vector<256x128xf32> -> vector<256x128xf32>
    %61 = arith.addf %56, %60 : vector<256x128xf32>
    %c0_45 = arith.constant 0 : index
    %c0_46 = arith.constant 0 : index
    %62 = vector.load %arg11[%c0_45, %c0_46] : memref<288x128xf32, #tpu.memory_space<vmem>>, vector<256x128xf32>
    tpu.vector_store %arg11[%c0_45, %c0_46], %61 {strides = array<i32>} : memref<288x128xf32, #tpu.memory_space<vmem>>, vector<256x128xf32>,
    %c0_47 = arith.constant 0 : index
    %c0_48 = arith.constant 0 : index
    %63 = vector.load %arg11[%c0_47, %c0_48] : memref<288x128xf32, #tpu.memory_space<vmem>>, vector<256x128xf32>
    %cst_49 = arith.constant 0.000000e+00 : f32
    %64 = vector.broadcast %cst_49 : f32 to vector<256x128xf32>
    %65 = arith.maximumf %63, %64 : vector<256x128xf32>
    %66 = vector.shape_cast %65 : vector<256x128xf32> to vector<16x16x128xf32>
    %67 = arith.truncf %66 : vector<16x16x128xf32> to vector<16x16x128xbf16>
    %c0_50 = arith.constant 0 : index
    %c0_51 = arith.constant 0 : index
    %c0_52 = arith.constant 0 : index
    %c0_53 = arith.constant 0 : index
    %68 = vector.load %arg7[%c0_50, %c0_51, %c0_52, %c0_53] : memref<1x16x16x128xbf16, #tpu.memory_space<vmem>>, vector<1x16x16x128xbf16>
    %69 = vector.shape_cast %68 : vector<1x16x16x128xbf16> to vector<16x16x128xbf16>
    %70 = vector.shape_cast %67 : vector<16x16x128xbf16> to vector<1x16x16x128xbf16>
    tpu.vector_store %arg7[%c0_50, %c0_51, %c0_52, %c0_53], %70 {strides = array<i32>} : memref<1x16x16x128xbf16, #tpu.memory_space<vmem>>, vector<1x16x16x128xbf16>,
    return
  }
  func.func @transform_1(%arg0: i32, %arg1: i32) -> (i32, i32) {
    %c0_i32 = arith.constant 0 : i32
    %c0_i32_0 = arith.constant 0 : i32
    %c0_i32_1 = arith.constant 0 : i32
    return %c0_i32, %c0_i32_0 : i32, i32
  }
  func.func @transform_2(%arg0: i32, %arg1: i32) -> (i32, i32) {
    %c0_i32 = arith.constant 0 : i32
    %c0_i32_0 = arith.constant 0 : i32
    %c0_i32_1 = arith.constant 0 : i32
    return %c0_i32, %c0_i32_0 : i32, i32
  }
  func.func @transform_3(%arg0: i32, %arg1: i32) -> (i32, i32) {
    %c0_i32 = arith.constant 0 : i32
    %c0_i32_0 = arith.constant 0 : i32
    %c0_i32_1 = arith.constant 0 : i32
    return %c0_i32, %c0_i32_0 : i32, i32
  }
  func.func @transform_4(%arg0: i32, %arg1: i32) -> (i32, i32) {
    %c0_i32 = arith.constant 0 : i32
    %c0_i32_0 = arith.constant 0 : i32
    %c0_i32_1 = arith.constant 0 : i32
    return %c0_i32, %c0_i32_0 : i32, i32
  }
  func.func @transform_5(%arg0: i32, %arg1: i32) -> (i32, i32, i32, i32) {
    %c0_i32 = arith.constant 0 : i32
    %c0_i32_0 = arith.constant 0 : i32
    %c0_i32_1 = arith.constant 0 : i32
    return %arg0, %arg1, %c0_i32, %c0_i32_0 : i32, i32, i32, i32
  }
}

</mosaic_0001>

<llo_original>
// kernel: tpu_custom_call.1
$region0: #{tpu_custom_call.1}
  #allocation0 [shape = 'u32[]', space=smem, size = 0x4, offset = 0x4, fixed_abs, tag = 'smem constant byte address 0x4 - core index']
  #allocation1 [shape = 'u32[144,128]{1,0:T(1,128)}', space=vmem, size = 0x12000, scoped, tag = 'internal scratch']
  #allocation2 [shape = 'bf16[2,18,16,128]{3,2,1,0:T(16,128)(2,1)}', space=vmem, size = 0x24000, scoped, tag = 'scratch operand']
  #allocation3 [shape = 's32[2]{0}', space=sflag, size = 0x8, scoped, tag = 'scratch operand']
  #allocation4 [shape = 'bf16[18,32,128]{2,1,0:T(16,128)(2,1)}', space=vmem, size = 0x24000, scoped, tag = 'scratch operand']
  #allocation5 [shape = 'f32[288,128]{1,0:T(8,128)}', space=vmem, size = 0x24000, scoped, tag = 'scratch operand']
  #allocation12 [shape = 's32[]', space=sflag, size = 0x4, offset = 0, fixed_abs, tag = 'sflag constant byte address 0x0 - dummy sync flag']
  #allocation13 [shape = 's32[]', space=sflag, size = 0x4, offset = 0, fixed_abs, tag = 'sflag constant byte address 0x0 - dummy sync flag']
  #allocation14 [shape = 'u32[]', space=smem, size = 0x4, offset = 0x44, fixed_abs, tag = 'smem constant byte address 0x44 - assertion arg 0']
  #allocation15 [shape = 'u32[]', space=smem, size = 0x4, offset = 0x48, fixed_abs, tag = 'smem constant byte address 0x48 - assertion arg 1']
  %s0 = inlined_call_operand.hbm [shape: bf16[2,18,16,128], index: 0, kind: input, shape index: {}]
  %s1 = inlined_call_operand.hbm [shape: bf16[128,128], index: 1, kind: input, shape index: {}]
  %s2 = inlined_call_operand.vmem [shape: f32[1,128], index: 2, kind: input, shape index: {}]
  %s3 = inlined_call_operand.hbm [shape: bf16[1152,128], index: 3, kind: input, shape index: {}]
  %s4 = inlined_call_operand.vmem [shape: f32[1,128], index: 4, kind: input, shape index: {}]
  %s5 = inlined_call_operand.hbm [shape: bf16[2,16,16,128], index: 5, kind: output, shape index: {}]
  %s6 = sld [smem:[#allocation0]]
  $region69: #{tpu_custom_call.1} parent=0
    _
  %s8 = ssub.s32 1, %s6
  %s9 = scalar_select 0, %s8, %s6
  $region1: #{tpu_custom_call.1} parent=0
    #allocation6 [shape = 'u8[32768]{0}', space=vmem, size = 0x8000, scoped, tag = 'input window, operand 1, single buffered']
    #allocation7 [shape = 's32[2]{0}', space=sflag, size = 0x8, scoped, tag = 'scoped memory for tpu_custom_call.1']
    #allocation8 [shape = 's32[2]{0}', space=sflag, size = 0x8, scoped, tag = 'scoped memory for tpu_custom_call.1']
    #allocation9 [shape = 'u8[294912]{0}', space=vmem, size = 0x48000, scoped, tag = 'input window, operand 3, single buffered']
    #allocation10 [shape = 's32[1]{0}', space=sflag, size = 0x4, scoped, tag = 'scoped memory for tpu_custom_call.1']
    #allocation11 [shape = 'u8[131072]{0}', space=vmem, size = 0x20000, scoped, tag = 'output window, operand 0']
    %10 = vsyncpa [#allocation7], 0
    %11 = vsyncpa [#allocation10], 0
    %12 = vsyncpa [#allocation8], 0
    %s13 = scalar_lea.sflag [#allocation8], 1
    %14 = vsyncpa %s13, 0
    loop: start=0, step=1, limit=4
    $region2: #{tpu_custom_call.1} parent=1 // loop_pre_header
      _
    $region3: #{tpu_custom_call.1} parent=1 // loop_header
      %s16 = sphi 0, %s20
      %p17 = scmp.ge.s32.totalorder %s16, 4
      %s23 = sphi 0, %s35
      %s24 = sphi 0, %s31
      %s25 = sphi 0, %s23
      %s26 = sphi 0, %s24
      %s27 = sphi 0, %s25
      %s28 = sphi 0, %s26
      %s36 = sphi 0, %s36
      %s38 = sphi 0, %s36
      %s39 = sphi 0, %s38
      %s53 = sphi 0, %s39
      %s57 = sphi 0, %s57
      %s59 = sphi 0, %s57
      %s60 = sphi 0, %s59
      %s74 = sphi 0, %s60
      %s78 = sphi 0, %s78
      %s80 = sphi 0, %s78
      %s81 = sphi 0, %s80
      %s95 = sphi 0, %s81
      %s99 = sphi 0, %s99
      %s101 = sphi 0, %s99
      %s102 = sphi 0, %s101
      %s116 = sphi 0, %s102
      %s124 = sphi 0, %s126
      %s127 = sphi 0, %s124
      %s128 = sphi 0, %s127
      %s144 = sphi 0, %s128
    $region4: #{tpu_custom_call.1} parent=1 // loop_header_branch
      %19 = sbr.rel (%p17) target = $region8
    $region5: #{tpu_custom_call.1} parent=1 // loop_body
      %s21 = ssub.s32 %s16, 1
      %s22 = ssub.s32 %s16, 2
      %s29 = sadd.s32 1, %s24
      %p30 = scmp.ge.s32.totalorder %s29, 1
      %s31 = scalar_select %p30, 0, %s29
      %s32 = sadd.s32 1, %s23
      %s33 = scalar_select %p30, %s32, %s23
      %p34 = scmp.ge.s32.totalorder %s33, 2
      %s35 = scalar_select %p34, 0, %s33
      %s37 = sadd.s32 %s36, 1
      %p40 = scmp.eq.s32.totalorder %s16, 1
      %p41 = scmp.ne.s32.totalorder %s36, %s38
      %p42 = scmp.eq.s32.totalorder %s16, 0
      %p43 = por %p41, %p42
      %p44 = scmp.ne.s32.totalorder %s36, %s38
      %p45 = scmp.eq.s32.totalorder %s21, 1
      %p46 = por %p44, %p45
      %p47 = scmp.ne.s32.totalorder %s38, %s39
      %p48 = scmp.eq.s32.totalorder %s21, 0
      %p49 = por %p47, %p48
      %p50 = scmp.ne.s32.totalorder %s38, %s39
      %p51 = scmp.eq.s32.totalorder %s22, 1
      %p52 = por %p50, %p51
      %p54 = scmp.ne.s32.totalorder %s39, %s53
      %p55 = scmp.eq.s32.totalorder %s22, 0
      %p56 = por %p54, %p55
      %s58 = sadd.s32 %s57, 1
      %p61 = scmp.eq.s32.totalorder %s16, 1
      %p62 = scmp.ne.s32.totalorder %s57, %s59
      %p63 = scmp.eq.s32.totalorder %s16, 0
      %p64 = por %p62, %p63
      %p65 = scmp.ne.s32.totalorder %s57, %s59
      %p66 = scmp.eq.s32.totalorder %s21, 1
      %p67 = por %p65, %p66
      %p68 = scmp.ne.s32.totalorder %s59, %s60
      %p69 = scmp.eq.s32.totalorder %s21, 0
      %p70 = por %p68, %p69
      %p71 = scmp.ne.s32.totalorder %s59, %s60
      %p72 = scmp.eq.s32.totalorder %s22, 1
      %p73 = por %p71, %p72
      %p75 = scmp.ne.s32.totalorder %s60, %s74
      %p76 = scmp.eq.s32.totalorder %s22, 0
      %p77 = por %p75, %p76
      %s79 = sadd.s32 %s78, 1
      %p82 = scmp.eq.s32.totalorder %s16, 1
      %p83 = scmp.ne.s32.totalorder %s78, %s80
      %p84 = scmp.eq.s32.totalorder %s16, 0
      %p85 = por %p83, %p84
      %p86 = scmp.ne.s32.totalorder %s78, %s80
      %p87 = scmp.eq.s32.totalorder %s21, 1
      %p88 = por %p86, %p87
      %p89 = scmp.ne.s32.totalorder %s80, %s81
      %p90 = scmp.eq.s32.totalorder %s21, 0
      %p91 = por %p89, %p90
      %p92 = scmp.ne.s32.totalorder %s80, %s81
      %p93 = scmp.eq.s32.totalorder %s22, 1
      %p94 = por %p92, %p93
      %p96 = scmp.ne.s32.totalorder %s81, %s95
      %p97 = scmp.eq.s32.totalorder %s22, 0
      %p98 = por %p96, %p97
      %s100 = sadd.s32 %s99, 1
      %p103 = scmp.eq.s32.totalorder %s16, 1
      %p104 = scmp.ne.s32.totalorder %s99, %s101
      %p105 = scmp.eq.s32.totalorder %s16, 0
      %p106 = por %p104, %p105
      %p107 = scmp.ne.s32.totalorder %s99, %s101
      %p108 = scmp.eq.s32.totalorder %s21, 1
      %p109 = por %p107, %p108
      %p110 = scmp.ne.s32.totalorder %s101, %s102
      %p111 = scmp.eq.s32.totalorder %s21, 0
      %p112 = por %p110, %p111
      %p113 = scmp.ne.s32.totalorder %s101, %s102
      %p114 = scmp.eq.s32.totalorder %s22, 1
      %p115 = por %p113, %p114
      %p117 = scmp.ne.s32.totalorder %s102, %s116
      %p118 = scmp.eq.s32.totalorder %s22, 0
      %p119 = por %p117, %p118
      %s120 = ssub.s32 %s23, %s35
      %s121 = ssub.s32 %s24, %s31
      %s122 = sor.u32 %s120, %s121
      %p123 = scmp.eq.s32.totalorder %s122, 0
      %s125 = sadd.s32 %s124, 1
      %s126 = scalar_select %p123, %s124, %s125
      %p129 = pneg %p123
      %p130 = scmp.eq.s32.totalorder %s16, 1
      %p131 = por %p129, %p130
      %p132 = scmp.ne.s32.totalorder %s124, %s127
      %p133 = scmp.eq.s32.totalorder %s16, 0
      %p134 = por %p132, %p133
      %p135 = scmp.ne.s32.totalorder %s124, %s127
      %p136 = scmp.eq.s32.totalorder %s21, 1
      %p137 = por %p135, %p136
      %p138 = scmp.ne.s32.totalorder %s127, %s128
      %p139 = scmp.eq.s32.totalorder %s21, 0
      %p140 = por %p138, %p139
      %p141 = scmp.ne.s32.totalorder %s127, %s128
      %p142 = scmp.eq.s32.totalorder %s22, 1
      %p143 = por %p141, %p142
      %p145 = scmp.ne.s32.totalorder %s128, %s144
      %p146 = scmp.eq.s32.totalorder %s22, 0
      %p147 = por %p145, %p146
      %p148 = scmp.le.s32.totalorder 1, %s16
      %p149 = scmp.lt.s32.totalorder %s16, 3
      %p150 = pnand %p148, %p149
      %p151 = pneg %p150
      // Predicated region
      $region9: #{tpu_custom_call.1} parent=5 // pred_check
        _
      $region10: #{tpu_custom_call.1} parent=5 // pred_check_branch
        %153 = sbr.rel (%p150) target = $region12
      $region11: #{tpu_custom_call.1} parent=5 // pred_region
        %s154 = ssub.s32 %s16, 1
        // Predicated region
        $region13: #{tpu_custom_call.1} parent=11 // pred_check
          %p155 = pneg %p49
        $region14: #{tpu_custom_call.1} parent=11 // pred_check_branch
          %157 = sbr.rel (%p155) target = $region16
        $region15: #{tpu_custom_call.1} parent=11 // pred_region
          %s159 = ssub.s32 1024, 1024
          %160 = vsyncadd [#allocation7], %s159
          %s161 = sshll.u32 [#allocation6], 4
          %s162 = int_to_ptr.vmem [resolvable:$true] %s161
          %167 = dma.hbm_to_vmem [thread:$0]  %s1, 1024, %s162, [#allocation7], 64, 64, 4
        $region16: #{tpu_custom_call.1} parent=11 // pred_fallthru
          _
        // Predicated region
        $region17: #{tpu_custom_call.1} parent=11 // pred_check
          %p168 = pneg %p70
        $region18: #{tpu_custom_call.1} parent=11 // pred_check_branch
          %170 = sbr.rel (%p168) target = $region20
        $region19: #{tpu_custom_call.1} parent=11 // pred_region
          _
        $region20: #{tpu_custom_call.1} parent=11 // pred_fallthru
          _
        // Predicated region
        $region21: #{tpu_custom_call.1} parent=11 // pred_check
          %p171 = pneg %p91
        $region22: #{tpu_custom_call.1} parent=11 // pred_check_branch
          %173 = sbr.rel (%p171) target = $region24
        $region23: #{tpu_custom_call.1} parent=11 // pred_region
          %s175 = ssub.s32 9216, 9216
          %176 = vsyncadd [#allocation10], %s175
          %s177 = sshll.u32 [#allocation9], 4
          %s178 = int_to_ptr.vmem [resolvable:$true] %s177
          %183 = dma.hbm_to_vmem [thread:$0]  %s3, 9216, %s178, [#allocation10], 64, 64, 4
        $region24: #{tpu_custom_call.1} parent=11 // pred_fallthru
          _
        // Predicated region
        $region25: #{tpu_custom_call.1} parent=11 // pred_check
          %p184 = pneg %p112
        $region26: #{tpu_custom_call.1} parent=11 // pred_check_branch
          %186 = sbr.rel (%p184) target = $region28
        $region27: #{tpu_custom_call.1} parent=11 // pred_region
          _
        $region28: #{tpu_custom_call.1} parent=11 // pred_fallthru
          _
      $region12: #{tpu_custom_call.1} parent=5 // pred_fallthru
        _
      %p187 = scmp.lt.s32.totalorder %s16, 2
      // Predicated region
      $region29: #{tpu_custom_call.1} parent=5 // pred_check
        %p188 = pneg %p187
      $region30: #{tpu_custom_call.1} parent=5 // pred_check_branch
        %190 = sbr.rel (%p188) target = $region32
      $region31: #{tpu_custom_call.1} parent=5 // pred_region
        _
      $region32: #{tpu_custom_call.1} parent=5 // pred_fallthru
        _
      %p191 = scmp.le.s32.totalorder 1, %s16
      %p192 = scmp.lt.s32.totalorder %s16, 3
      %p193 = pnand %p191, %p192
      %p194 = pneg %p193
      // Predicated region
      $region33: #{tpu_custom_call.1} parent=5 // pred_check
        _
      $region34: #{tpu_custom_call.1} parent=5 // pred_check_branch
        %196 = sbr.rel (%p193) target = $region36
      $region35: #{tpu_custom_call.1} parent=5 // pred_region
        %s197 = ssub.s32 %s16, 1
        // Predicated region
        $region37: #{tpu_custom_call.1} parent=35 // pred_check
          %p198 = pneg %p49
        $region38: #{tpu_custom_call.1} parent=35 // pred_check_branch
          %200 = sbr.rel (%p198) target = $region40
        $region39: #{tpu_custom_call.1} parent=35 // pred_region
          %201 = dma.done [#allocation7], 1024
        $region40: #{tpu_custom_call.1} parent=35 // pred_fallthru
          _
        // Predicated region
        $region41: #{tpu_custom_call.1} parent=35 // pred_check
          %p202 = pneg %p91
        $region42: #{tpu_custom_call.1} parent=35 // pred_check_branch
          %204 = sbr.rel (%p202) target = $region44
        $region43: #{tpu_custom_call.1} parent=35 // pred_region
          %205 = dma.done [#allocation10], 9216
        $region44: #{tpu_custom_call.1} parent=35 // pred_fallthru
          _
        %p206 = pneg %p49
        %p207 = pneg %p46
        %p208 = pneg %p70
        %p209 = pneg %p67
        %p210 = pneg %p91
        %p211 = pneg %p88
        %p212 = pneg %p112
        %p213 = pneg %p109
        %p214 = pneg %p140
        %p215 = pneg %p137
        %s216 = sand.u32 %s127, 1
        %s217 = scalar_lea.sflag [#allocation8], %s216
        %s218 = sand.u32 %s127, 1
        %s219 = smul.addr %s218, 128
        %s220 = scalar_lea.vmem [#allocation11], %s219
        %s221 = smul.u32 16, %s26
        %p223 = scmp.lt.s32.totalorder %s26, 0
        %s224 = ssub.s32 0, %s26
        %s225 = scalar_select %p223, %s224, %s26
        %s226 = sand.u32 %s225, 1
        %s227 = ssub.s32 0, %s226
        %s228 = scalar_select %p223, %s227, %s226
        %p229 = scmp.eq.s32.totalorder %s26, 0
        // Predicated region
        $region45: #{tpu_custom_call.1} parent=35 // pred_check
          %p230 = pneg %p229
        $region46: #{tpu_custom_call.1} parent=35 // pred_check_branch
          %232 = sbr.rel (%p230) target = $region48
        $region47: #{tpu_custom_call.1} parent=35 // pred_region
          %s233 = smul.u32 %s26, 16
          %s234 = smul.u32 %s233, 2
          %s235 = smul.u32 %s25, 36
          %s236 = sadd.s32 %s234, %s235
          %s237 = smul.addr %s236, 64
          %s238 = scalar_lea.hbm %s0, %s237
          %s239 = smul.u32 %s228, 18
          %s240 = smul.addr %s239, 8
          %s241 = scalar_lea.vmem [#allocation2], %s240
          %s242 = scalar_lea.sflag [#allocation3], %s228
          // Predicated region
          $region49: #{tpu_custom_call.1} parent=47 // pred_check
            _
          $region50: #{tpu_custom_call.1} parent=47 // pred_check_branch
            %244 = sbr.rel target = $region52
          $region51: #{tpu_custom_call.1} parent=47 // pred_region
            %245 = sst [smem:[#allocation14]] [#allocation13]
            %246 = sst [smem:[#allocation15]] [#allocation12]
          $region52: #{tpu_custom_call.1} parent=47 // pred_fallthru
            _
          %248 = shalt.err (0)
          %s250 = sshll.u32 %s241, 4
          %s251 = int_to_ptr.vmem [resolvable:$true] %s250
          %253 = dma.hbm_to_vmem [thread:$0]  %s238, 2304, %s251, %s242
        $region48: #{tpu_custom_call.1} parent=35 // pred_fallthru
          _
        %s254 = smul.u32 %s26, 16
        %s255 = smul.u32 %s228, 18
        %s256 = smul.addr %s255, 8
        %s257 = scalar_lea.vmem [#allocation2], %s256
        %s258 = scalar_lea.sflag [#allocation3], %s228
        %s259 = smul.u32 4, 18
        %s260 = smul.u32 %s259, 2
        %s261 = smul.u32 %s260, 1
        %s262 = sshll.u32 %s261, 4
        %263 = dma.done %s258, %s262
        %v264 = vld [vmem:[%s257] sm:$0xff]
        %v265 = vld [vmem:[%s257 + $0x8] sm:$0xff]
        %v266 = vld [vmem:[%s257 + $0x10] sm:$0xff]
        %v267 = vld [vmem:[%s257 + $0x18] sm:$0xff]
        %v268 = vld [vmem:[%s257 + $0x20] sm:$0xff]
        %v269 = vld [vmem:[%s257 + $0x28] sm:$0xff]
        %v270 = vld [vmem:[%s257 + $0x30] sm:$0xff]
        %v271 = vld [vmem:[%s257 + $0x38] sm:$0xff]
        %v272 = vld [vmem:[%s257 + $0x40] sm:$0xff]
        %v273 = vld [vmem:[%s257 + $0x48] sm:$0xff]
        %v274 = vld [vmem:[%s257 + $0x50] sm:$0xff]
        %v275 = vld [vmem:[%s257 + $0x58] sm:$0xff]
        %v276 = vld [vmem:[%s257 + $0x60] sm:$0xff]
        %v277 = vld [vmem:[%s257 + $0x68] sm:$0xff]
        %v278 = vld [vmem:[%s257 + $0x70] sm:$0xff]
        %v279 = vld [vmem:[%s257 + $0x78] sm:$0xff]
        %v280 = vld [vmem:[%s257 + $0x80] sm:$0xff]
        %v281 = vld [vmem:[%s257 + $0x88] sm:$0xff]
        %v282 = vld [vmem:[#allocation6] sm:$0xf]
        %v283 = vld [vmem:[#allocation6 + $0x4] sm:$0xf]
        %v284 = vld [vmem:[#allocation6 + $0x8] sm:$0xf]
        %v285 = vld [vmem:[#allocation6 + $0xc] sm:$0xf]
        %v286 = vld [vmem:[#allocation6 + $0x10] sm:$0xf]
        %v287 = vld [vmem:[#allocation6 + $0x14] sm:$0xf]
        %v288 = vld [vmem:[#allocation6 + $0x18] sm:$0xf]
        %v289 = vld [vmem:[#allocation6 + $0x1c] sm:$0xf]
        %v290 = vld [vmem:[#allocation6 + $0x20] sm:$0xf]
        %v291 = vld [vmem:[#allocation6 + $0x24] sm:$0xf]
        %v292 = vld [vmem:[#allocation6 + $0x28] sm:$0xf]
        %v293 = vld [vmem:[#allocation6 + $0x2c] sm:$0xf]
        %v294 = vld [vmem:[#allocation6 + $0x30] sm:$0xf]
        %v295 = vld [vmem:[#allocation6 + $0x34] sm:$0xf]
        %v296 = vld [vmem:[#allocation6 + $0x38] sm:$0xf]
        %v297 = vld [vmem:[#allocation6 + $0x3c] sm:$0xf]
        %v298 = vld [vmem:[%s2] sm:$0x1]
        %v300 = vlaneseq
        %v301 = vshrl.u32 %v300, 7
        %v302 = vsub.s32 0, %v301
        %v303 = vrot.slane %v298, %v302
        %v321 = vunpack.c.l.b16 %v282
        %v322 = vunpack.c.l.b16 %v283
        %v323 = vunpack.c.l.b16 %v284
        %v324 = vunpack.c.l.b16 %v285
        %v325 = vunpack.c.l.b16 %v286
        %v326 = vunpack.c.l.b16 %v287
        %v327 = vunpack.c.l.b16 %v288
        %v328 = vunpack.c.l.b16 %v289
        %v329 = vunpack.c.l.b16 %v290
        %v330 = vunpack.c.l.b16 %v291
        %v331 = vunpack.c.l.b16 %v292
        %v332 = vunpack.c.l.b16 %v293
        %v333 = vunpack.c.l.b16 %v294
        %v334 = vunpack.c.l.b16 %v295
        %v335 = vunpack.c.l.b16 %v296
        %v336 = vunpack.c.l.b16 %v297
        %v337 = vpack.c.b16 %v322, %v321
        %v338 = vpack.c.b16 %v324, %v323
        %v339 = vpack.c.b16 %v326, %v325
        %v340 = vpack.c.b16 %v328, %v327
        %v341 = vpack.c.b16 %v330, %v329
        %v342 = vpack.c.b16 %v332, %v331
        %v343 = vpack.c.b16 %v334, %v333
        %v344 = vpack.c.b16 %v336, %v335
        %353 = vmatprep.subr.bf16.mxu0 0
        %354 = vmatpush1.bf16.msra.mxu0 %v337
        %355 = vmatprep.subr.bf16.mxu0 0
        %356 = vmatpush1.bf16.msra.mxu0 %v338
        %357 = vmatprep.subr.bf16.mxu0 0
        %358 = vmatpush1.bf16.msra.mxu0 %v339
        %359 = vmatprep.subr.bf16.mxu0 0
        %360 = vmatpush1.bf16.msra.mxu0 %v340
        %361 = vmatprep.subr.bf16.mxu0 0
        %362 = vmatpush1.bf16.msra.mxu0 %v341
        %363 = vmatprep.subr.bf16.mxu0 0
        %364 = vmatpush1.bf16.msra.mxu0 %v342
        %365 = vmatprep.subr.bf16.mxu0 0
        %366 = vmatpush1.bf16.msra.mxu0 %v343
        %367 = vmatprep.subr.bf16.mxu0 0
        %368 = vmatpush1.bf16.msra.mxu0 %v344
        %369 = vmatprep.subr.bf16.mxu0 0
        %370 = vmatpush1.bf16.msra.mxu0 0
        %371 = vmatprep.subr.bf16.mxu0 0
        %372 = vmatpush1.bf16.msra.mxu0 0
        %373 = vmatprep.subr.bf16.mxu0 0
        %374 = vmatpush1.bf16.msra.mxu0 0
        %375 = vmatprep.subr.bf16.mxu0 0
        %376 = vmatpush1.bf16.msra.mxu0 0
        %377 = vmatprep.subr.bf16.mxu0 0
        %378 = vmatpush1.bf16.msra.mxu0 0
        %379 = vmatprep.subr.bf16.mxu0 0
        %380 = vmatpush1.bf16.msra.mxu0 0
        %381 = vmatprep.subr.bf16.mxu0 0
        %382 = vmatpush1.bf16.msra.mxu0 0
        %383 = vmatprep.subr.bf16.mxu0 0
        %384 = vmatpush1.bf16.msra.mxu0 0
        %385 = vmatprep.mubr.bf16.mxu0 0
        %386 = vmatmul.mubr.bf16.gmra.mrb[0].mxu0 %v264
        %v387 = vpop.f32.mrb[0].mxu0
        %v388 = vadd.f32 %v303, %v387
        %v389 = vpop.f32.mrb[0].mxu0
        %v390 = vpop.f32.mrb[0].mxu0
        %v391 = vadd.f32 %v303, %v390
        %v392 = vpop.f32.mrb[0].mxu0
        %393 = vmatprep.mubr.bf16.mxu0 0
        %394 = vmatmul.mubr.bf16.gmra.mrb[0].mxu0 %v265
        %v395 = vpop.f32.mrb[0].mxu0
        %v396 = vadd.f32 %v303, %v395
        %v397 = vpop.f32.mrb[0].mxu0
        %v398 = vpop.f32.mrb[0].mxu0
        %v399 = vadd.f32 %v303, %v398
        %v400 = vpop.f32.mrb[0].mxu0
        %401 = vmatprep.mubr.bf16.mxu0 0
        %402 = vmatmul.mubr.bf16.gmra.mrb[0].mxu0 %v266
        %v403 = vpop.f32.mrb[0].mxu0
        %v404 = vadd.f32 %v303, %v403
        %v405 = vpop.f32.mrb[0].mxu0
        %v406 = vpop.f32.mrb[0].mxu0
        %v407 = vadd.f32 %v303, %v406
        %v408 = vpop.f32.mrb[0].mxu0
        %409 = vmatprep.mubr.bf16.mxu0 0
        %410 = vmatmul.mubr.bf16.gmra.mrb[0].mxu0 %v267
        %v411 = vpop.f32.mrb[0].mxu0
        %v412 = vadd.f32 %v303, %v411
        %v413 = vpop.f32.mrb[0].mxu0
        %v414 = vpop.f32.mrb[0].mxu0
        %v415 = vadd.f32 %v303, %v414
        %v416 = vpop.f32.mrb[0].mxu0
        %417 = vmatprep.mubr.bf16.mxu0 0
        %418 = vmatmul.mubr.bf16.gmra.mrb[0].mxu0 %v268
        %v419 = vpop.f32.mrb[0].mxu0
        %v420 = vadd.f32 %v303, %v419
        %v421 = vpop.f32.mrb[0].mxu0
        %v422 = vpop.f32.mrb[0].mxu0
        %v423 = vadd.f32 %v303, %v422
        %v424 = vpop.f32.mrb[0].mxu0
        %425 = vmatprep.mubr.bf16.mxu0 0
        %426 = vmatmul.mubr.bf16.gmra.mrb[0].mxu0 %v269
        %v427 = vpop.f32.mrb[0].mxu0
        %v428 = vadd.f32 %v303, %v427
        %v429 = vpop.f32.mrb[0].mxu0
        %v430 = vpop.f32.mrb[0].mxu0
        %v431 = vadd.f32 %v303, %v430
        %v432 = vpop.f32.mrb[0].mxu0
        %433 = vmatprep.mubr.bf16.mxu0 0
        %434 = vmatmul.mubr.bf16.gmra.mrb[0].mxu0 %v270
        %v435 = vpop.f32.mrb[0].mxu0
        %v436 = vadd.f32 %v303, %v435
        %v437 = vpop.f32.mrb[0].mxu0
        %v438 = vpop.f32.mrb[0].mxu0
        %v439 = vadd.f32 %v303, %v438
        %v440 = vpop.f32.mrb[0].mxu0
        %441 = vmatprep.mubr.bf16.mxu0 0
        %442 = vmatmul.mubr.bf16.gmra.mrb[0].mxu0 %v271
        %v443 = vpop.f32.mrb[0].mxu0
        %v444 = vadd.f32 %v303, %v443
        %v445 = vpop.f32.mrb[0].mxu0
        %v446 = vpop.f32.mrb[0].mxu0
        %v447 = vadd.f32 %v303, %v446
        %v448 = vpop.f32.mrb[0].mxu0
        %449 = vmatprep.mubr.bf16.mxu0 0
        %450 = vmatmul.mubr.bf16.gmra.mrb[0].mxu0 %v272
        %v451 = vpop.f32.mrb[0].mxu0
        %v452 = vadd.f32 %v303, %v451
        %v453 = vpop.f32.mrb[0].mxu0
        %v454 = vpop.f32.mrb[0].mxu0
        %v455 = vadd.f32 %v303, %v454
        %v456 = vpop.f32.mrb[0].mxu0
        %457 = vmatprep.mubr.bf16.mxu0 0
        %458 = vmatmul.mubr.bf16.gmra.mrb[0].mxu0 %v273
        %v459 = vpop.f32.mrb[0].mxu0
        %v460 = vadd.f32 %v303, %v459
        %v461 = vpop.f32.mrb[0].mxu0
        %v462 = vpop.f32.mrb[0].mxu0
        %v463 = vadd.f32 %v303, %v462
        %v464 = vpop.f32.mrb[0].mxu0
        %465 = vmatprep.mubr.bf16.mxu0 0
        %466 = vmatmul.mubr.bf16.gmra.mrb[0].mxu0 %v274
        %v467 = vpop.f32.mrb[0].mxu0
        %v468 = vadd.f32 %v303, %v467
        %v469 = vpop.f32.mrb[0].mxu0
        %v470 = vpop.f32.mrb[0].mxu0
        %v471 = vadd.f32 %v303, %v470
        %v472 = vpop.f32.mrb[0].mxu0
        %473 = vmatprep.mubr.bf16.mxu0 0
        %474 = vmatmul.mubr.bf16.gmra.mrb[0].mxu0 %v275
        %v475 = vpop.f32.mrb[0].mxu0
        %v476 = vadd.f32 %v303, %v475
        %v477 = vpop.f32.mrb[0].mxu0
        %v478 = vpop.f32.mrb[0].mxu0
        %v479 = vadd.f32 %v303, %v478
        %v480 = vpop.f32.mrb[0].mxu0
        %481 = vmatprep.mubr.bf16.mxu0 0
        %482 = vmatmul.mubr.bf16.gmra.mrb[0].mxu0 %v276
        %v483 = vpop.f32.mrb[0].mxu0
        %v484 = vadd.f32 %v303, %v483
        %v485 = vpop.f32.mrb[0].mxu0
        %v486 = vpop.f32.mrb[0].mxu0
        %v487 = vadd.f32 %v303, %v486
        %v488 = vpop.f32.mrb[0].mxu0
        %489 = vmatprep.mubr.bf16.mxu0 0
        %490 = vmatmul.mubr.bf16.gmra.mrb[0].mxu0 %v277
        %v491 = vpop.f32.mrb[0].mxu0
        %v492 = vadd.f32 %v303, %v491
        %v493 = vpop.f32.mrb[0].mxu0
        %v494 = vpop.f32.mrb[0].mxu0
        %v495 = vadd.f32 %v303, %v494
        %v496 = vpop.f32.mrb[0].mxu0
        %497 = vmatprep.mubr.bf16.mxu0 0
        %498 = vmatmul.mubr.bf16.gmra.mrb[0].mxu0 %v278
        %v499 = vpop.f32.mrb[0].mxu0
        %v500 = vadd.f32 %v303, %v499
        %v501 = vpop.f32.mrb[0].mxu0
        %v502 = vpop.f32.mrb[0].mxu0
        %v503 = vadd.f32 %v303, %v502
        %v504 = vpop.f32.mrb[0].mxu0
        %505 = vmatprep.mubr.bf16.mxu0 0
        %506 = vmatmul.mubr.bf16.gmra.mrb[0].mxu0 %v279
        %v507 = vpop.f32.mrb[0].mxu0
        %v508 = vadd.f32 %v303, %v507
        %v509 = vpop.f32.mrb[0].mxu0
        %v510 = vpop.f32.mrb[0].mxu0
        %v511 = vadd.f32 %v303, %v510
        %v512 = vpop.f32.mrb[0].mxu0
        %513 = vmatprep.mubr.bf16.mxu0 0
        %514 = vmatmul.mubr.bf16.gmra.mrb[0].mxu0 %v280
        %v515 = vpop.f32.mrb[0].mxu0
        %v516 = vadd.f32 %v303, %v515
        %v517 = vpop.f32.mrb[0].mxu0
        %v518 = vpop.f32.mrb[0].mxu0
        %v519 = vadd.f32 %v303, %v518
        %v520 = vpop.f32.mrb[0].mxu0
        %521 = vmatprep.mubr.bf16.mxu0 0
        %522 = vmatmul.mubr.bf16.gmra.mrb[0].mxu0 %v281
        %v523 = vpop.f32.mrb[0].mxu0
        %v524 = vadd.f32 %v303, %v523
        %v525 = vpop.f32.mrb[0].mxu0
        %v526 = vpop.f32.mrb[0].mxu0
        %v527 = vadd.f32 %v303, %v526
        %v528 = vpop.f32.mrb[0].mxu0
        %529 = vdwg.mxu0
        %530 = vst [vmem:[#allocation5] sm:$0xff] %v388
        %531 = vst [vmem:[#allocation5 + $0x8] sm:$0xff] %v391
        %532 = vst [vmem:[#allocation5 + $0x10] sm:$0xff] %v396
        %533 = vst [vmem:[#allocation5 + $0x18] sm:$0xff] %v399
        %534 = vst [vmem:[#allocation5 + $0x20] sm:$0xff] %v404
        %535 = vst [vmem:[#allocation5 + $0x28] sm:$0xff] %v407
        %536 = vst [vmem:[#allocation5 + $0x30] sm:$0xff] %v412
        %537 = vst [vmem:[#allocation5 + $0x38] sm:$0xff] %v415
        %538 = vst [vmem:[#allocation5 + $0x40] sm:$0xff] %v420
        %539 = vst [vmem:[#allocation5 + $0x48] sm:$0xff] %v423
        %540 = vst [vmem:[#allocation5 + $0x50] sm:$0xff] %v428
        %541 = vst [vmem:[#allocation5 + $0x58] sm:$0xff] %v431
        %542 = vst [vmem:[#allocation5 + $0x60] sm:$0xff] %v436
        %543 = vst [vmem:[#allocation5 + $0x68] sm:$0xff] %v439
        %544 = vst [vmem:[#allocation5 + $0x70] sm:$0xff] %v444
        %545 = vst [vmem:[#allocation5 + $0x78] sm:$0xff] %v447
        %546 = vst [vmem:[#allocation5 + $0x80] sm:$0xff] %v452
        %547 = vst [vmem:[#allocation5 + $0x88] sm:$0xff] %v455
        %548 = vst [vmem:[#allocation5 + $0x90] sm:$0xff] %v460
        %549 = vst [vmem:[#allocation5 + $0x98] sm:$0xff] %v463
        %550 = vst [vmem:[#allocation5 + $0xa0] sm:$0xff] %v468
        %551 = vst [vmem:[#allocation5 + $0xa8] sm:$0xff] %v471
        %552 = vst [vmem:[#allocation5 + $0xb0] sm:$0xff] %v476
        %553 = vst [vmem:[#allocation5 + $0xb8] sm:$0xff] %v479
        %554 = vst [vmem:[#allocation5 + $0xc0] sm:$0xff] %v484
        %555 = vst [vmem:[#allocation5 + $0xc8] sm:$0xff] %v487
        %556 = vst [vmem:[#allocation5 + $0xd0] sm:$0xff] %v492
        %557 = vst [vmem:[#allocation5 + $0xd8] sm:$0xff] %v495
        %558 = vst [vmem:[#allocation5 + $0xe0] sm:$0xff] %v500
        %559 = vst [vmem:[#allocation5 + $0xe8] sm:$0xff] %v503
        %560 = vst [vmem:[#allocation5 + $0xf0] sm:$0xff] %v508
        %561 = vst [vmem:[#allocation5 + $0xf8] sm:$0xff] %v511
        %562 = vst [vmem:[#allocation5 + $0x100] sm:$0xff] %v516
        %563 = vst [vmem:[#allocation5 + $0x108] sm:$0xff] %v519
        %564 = vst [vmem:[#allocation5 + $0x110] sm:$0xff] %v524
        %565 = vst [vmem:[#allocation5 + $0x118] sm:$0xff] %v527
        %v566 = vld [vmem:[#allocation5] sm:$0xff]
        %v567 = vld [vmem:[#allocation5 + $0x8] sm:$0xff]
        %v568 = vld [vmem:[#allocation5 + $0x10] sm:$0xff]
        %v569 = vld [vmem:[#allocation5 + $0x18] sm:$0xff]
        %v570 = vld [vmem:[#allocation5 + $0x20] sm:$0xff]
        %v571 = vld [vmem:[#allocation5 + $0x28] sm:$0xff]
        %v572 = vld [vmem:[#allocation5 + $0x30] sm:$0xff]
        %v573 = vld [vmem:[#allocation5 + $0x38] sm:$0xff]
        %v574 = vld [vmem:[#allocation5 + $0x40] sm:$0xff]
        %v575 = vld [vmem:[#allocation5 + $0x48] sm:$0xff]
        %v576 = vld [vmem:[#allocation5 + $0x50] sm:$0xff]
        %v577 = vld [vmem:[#allocation5 + $0x58] sm:$0xff]
        %v578 = vld [vmem:[#allocation5 + $0x60] sm:$0xff]
        %v579 = vld [vmem:[#allocation5 + $0x68] sm:$0xff]
        %v580 = vld [vmem:[#allocation5 + $0x70] sm:$0xff]
        %v581 = vld [vmem:[#allocation5 + $0x78] sm:$0xff]
        %v582 = vld [vmem:[#allocation5 + $0x80] sm:$0xff]
        %v583 = vld [vmem:[#allocation5 + $0x88] sm:$0xff]
        %v584 = vld [vmem:[#allocation5 + $0x90] sm:$0xff]
        %v585 = vld [vmem:[#allocation5 + $0x98] sm:$0xff]
        %v586 = vld [vmem:[#allocation5 + $0xa0] sm:$0xff]
        %v587 = vld [vmem:[#allocation5 + $0xa8] sm:$0xff]
        %v588 = vld [vmem:[#allocation5 + $0xb0] sm:$0xff]
        %v589 = vld [vmem:[#allocation5 + $0xb8] sm:$0xff]
        %v590 = vld [vmem:[#allocation5 + $0xc0] sm:$0xff]
        %v591 = vld [vmem:[#allocation5 + $0xc8] sm:$0xff]
        %v592 = vld [vmem:[#allocation5 + $0xd0] sm:$0xff]
        %v593 = vld [vmem:[#allocation5 + $0xd8] sm:$0xff]
        %v594 = vld [vmem:[#allocation5 + $0xe0] sm:$0xff]
        %v595 = vld [vmem:[#allocation5 + $0xe8] sm:$0xff]
        %v596 = vld [vmem:[#allocation5 + $0xf0] sm:$0xff]
        %v597 = vld [vmem:[#allocation5 + $0xf8] sm:$0xff]
        %v598 = vld [vmem:[#allocation5 + $0x100] sm:$0xff]
        %v599 = vld [vmem:[#allocation5 + $0x108] sm:$0xff]
        %v600 = vld [vmem:[#allocation5 + $0x110] sm:$0xff]
        %v601 = vld [vmem:[#allocation5 + $0x118] sm:$0xff]
        %v602 = vmax.f32 %v566, 0.0
        %v603 = vmax.f32 %v567, 0.0
        %v604 = vmax.f32 %v568, 0.0
        %v605 = vmax.f32 %v569, 0.0
        %v606 = vmax.f32 %v570, 0.0
        %v607 = vmax.f32 %v571, 0.0
        %v608 = vmax.f32 %v572, 0.0
        %v609 = vmax.f32 %v573, 0.0
        %v610 = vmax.f32 %v574, 0.0
        %v611 = vmax.f32 %v575, 0.0
        %v612 = vmax.f32 %v576, 0.0
        %v613 = vmax.f32 %v577, 0.0
        %v614 = vmax.f32 %v578, 0.0
        %v615 = vmax.f32 %v579, 0.0
        %v616 = vmax.f32 %v580, 0.0
        %v617 = vmax.f32 %v581, 0.0
        %v618 = vmax.f32 %v582, 0.0
        %v619 = vmax.f32 %v583, 0.0
        %v620 = vmax.f32 %v584, 0.0
        %v621 = vmax.f32 %v585, 0.0
        %v622 = vmax.f32 %v586, 0.0
        %v623 = vmax.f32 %v587, 0.0
        %v624 = vmax.f32 %v588, 0.0
        %v625 = vmax.f32 %v589, 0.0
        %v626 = vmax.f32 %v590, 0.0
        %v627 = vmax.f32 %v591, 0.0
        %v628 = vmax.f32 %v592, 0.0
        %v629 = vmax.f32 %v593, 0.0
        %v630 = vmax.f32 %v594, 0.0
        %v631 = vmax.f32 %v595, 0.0
        %v632 = vmax.f32 %v596, 0.0
        %v633 = vmax.f32 %v597, 0.0
        %v634 = vmax.f32 %v598, 0.0
        %v635 = vmax.f32 %v599, 0.0
        %v636 = vmax.f32 %v600, 0.0
        %v637 = vmax.f32 %v601, 0.0
        %v638 = vpack.c.bf16 %v603, %v602
        %v639 = vpack.c.bf16 %v605, %v604
        %v640 = vpack.c.bf16 %v607, %v606
        %v641 = vpack.c.bf16 %v609, %v608
        %v642 = vpack.c.bf16 %v611, %v610
        %v643 = vpack.c.bf16 %v613, %v612
        %v644 = vpack.c.bf16 %v615, %v614
        %v645 = vpack.c.bf16 %v617, %v616
        %v646 = vpack.c.bf16 %v619, %v618
        %v647 = vpack.c.bf16 %v621, %v620
        %v648 = vpack.c.bf16 %v623, %v622
        %v649 = vpack.c.bf16 %v625, %v624
        %v650 = vpack.c.bf16 %v627, %v626
        %v651 = vpack.c.bf16 %v629, %v628
        %v652 = vpack.c.bf16 %v631, %v630
        %v653 = vpack.c.bf16 %v633, %v632
        %v654 = vpack.c.bf16 %v635, %v634
        %v655 = vpack.c.bf16 %v637, %v636
        %v674 = vrot.slane %v638, 4
        %v675 = vrot.slane %v639, 4
        %v676 = vrot.slane %v640, 4
        %v677 = vrot.slane %v641, 4
        %v678 = vrot.slane %v642, 4
        %v679 = vrot.slane %v643, 4
        %v680 = vrot.slane %v644, 4
        %v681 = vrot.slane %v645, 4
        %v682 = vrot.slane %v646, 4
        %v683 = vrot.slane %v647, 4
        %v684 = vrot.slane %v648, 4
        %v685 = vrot.slane %v649, 4
        %v686 = vrot.slane %v650, 4
        %v687 = vrot.slane %v651, 4
        %v688 = vrot.slane %v652, 4
        %v689 = vrot.slane %v653, 4
        %v690 = vrot.slane %v654, 4
        %v691 = vrot.slane %v655, 4
        %710 = vst [vmem:[#allocation4] sm:$0xf0] %v674
        %711 = vst [vmem:[#allocation4 + $0x8] sm:$0xf] %v674
        %712 = vst [vmem:[#allocation4 + $0x10] sm:$0xf0] %v675
        %713 = vst [vmem:[#allocation4 + $0x18] sm:$0xf] %v675
        %714 = vst [vmem:[#allocation4 + $0x20] sm:$0xf0] %v676
        %715 = vst [vmem:[#allocation4 + $0x28] sm:$0xf] %v676
        %716 = vst [vmem:[#allocation4 + $0x30] sm:$0xf0] %v677
        %717 = vst [vmem:[#allocation4 + $0x38] sm:$0xf] %v677
        %718 = vst [vmem:[#allocation4 + $0x40] sm:$0xf0] %v678
        %719 = vst [vmem:[#allocation4 + $0x48] sm:$0xf] %v678
        %720 = vst [vmem:[#allocation4 + $0x50] sm:$0xf0] %v679
        %721 = vst [vmem:[#allocation4 + $0x58] sm:$0xf] %v679
        %722 = vst [vmem:[#allocation4 + $0x60] sm:$0xf0] %v680
        %723 = vst [vmem:[#allocation4 + $0x68] sm:$0xf] %v680
        %724 = vst [vmem:[#allocation4 + $0x70] sm:$0xf0] %v681
        %725 = vst [vmem:[#allocation4 + $0x78] sm:$0xf] %v681
        %726 = vst [vmem:[#allocation4 + $0x80] sm:$0xf0] %v682
        %727 = vst [vmem:[#allocation4 + $0x88] sm:$0xf] %v682
        %728 = vst [vmem:[#allocation4 + $0x90] sm:$0xf0] %v683
        %729 = vst [vmem:[#allocation4 + $0x98] sm:$0xf] %v683
        %730 = vst [vmem:[#allocation4 + $0xa0] sm:$0xf0] %v684
        %731 = vst [vmem:[#allocation4 + $0xa8] sm:$0xf] %v684
        %732 = vst [vmem:[#allocation4 + $0xb0] sm:$0xf0] %v685
        %733 = vst [vmem:[#allocation4 + $0xb8] sm:$0xf] %v685
        %734 = vst [vmem:[#allocation4 + $0xc0] sm:$0xf0] %v686
        %735 = vst [vmem:[#allocation4 + $0xc8] sm:$0xf] %v686
        %736 = vst [vmem:[#allocation4 + $0xd0] sm:$0xf0] %v687
        %737 = vst [vmem:[#allocation4 + $0xd8] sm:$0xf] %v687
        %738 = vst [vmem:[#allocation4 + $0xe0] sm:$0xf0] %v688
        %739 = vst [vmem:[#allocation4 + $0xe8] sm:$0xf] %v688
        %740 = vst [vmem:[#allocation4 + $0xf0] sm:$0xf0] %v689
        %741 = vst [vmem:[#allocation4 + $0xf8] sm:$0xf] %v689
        %742 = vst [vmem:[#allocation4 + $0x100] sm:$0xf0] %v690
        %743 = vst [vmem:[#allocation4 + $0x108] sm:$0xf] %v690
        %744 = vst [vmem:[#allocation4 + $0x110] sm:$0xf0] %v691
        %745 = vst [vmem:[#allocation4 + $0x118] sm:$0xf] %v691
        // Predicated region
        $region53: #{tpu_custom_call.1} parent=35 // pred_check
          %p746 = pneg %p229
        $region54: #{tpu_custom_call.1} parent=35 // pred_check_branch
          %748 = sbr.rel (%p746) target = $region56
        $region55: #{tpu_custom_call.1} parent=35 // pred_region
          %vm749 = vcmask 1043459
          %vm750 = vsmask.f32 7950
          %vm751 = vmand %vm749, %vm750
          %v752 = vld [vmem:[#allocation4] sm:$0x8]
          %v753 = vsel %vm751, 0, %v752
          %754 = vst [vmem:[#allocation4] sm:$0x8] %v753
          %v755 = vld [vmem:[#allocation4 + $0x10] sm:$0x8]
          %v756 = vsel %vm751, 0, %v755
          %757 = vst [vmem:[#allocation4 + $0x10] sm:$0x8] %v756
          %v758 = vld [vmem:[#allocation4 + $0x20] sm:$0x8]
          %v759 = vsel %vm751, 0, %v758
          %760 = vst [vmem:[#allocation4 + $0x20] sm:$0x8] %v759
          %v761 = vld [vmem:[#allocation4 + $0x30] sm:$0x8]
          %v762 = vsel %vm751, 0, %v761
          %763 = vst [vmem:[#allocation4 + $0x30] sm:$0x8] %v762
          %v764 = vld [vmem:[#allocation4 + $0x40] sm:$0x8]
          %v765 = vsel %vm751, 0, %v764
          %766 = vst [vmem:[#allocation4 + $0x40] sm:$0x8] %v765
          %v767 = vld [vmem:[#allocation4 + $0x50] sm:$0x8]
          %v768 = vsel %vm751, 0, %v767
          %769 = vst [vmem:[#allocation4 + $0x50] sm:$0x8] %v768
          %v770 = vld [vmem:[#allocation4 + $0x60] sm:$0x8]
          %v771 = vsel %vm751, 0, %v770
          %772 = vst [vmem:[#allocation4 + $0x60] sm:$0x8] %v771
          %v773 = vld [vmem:[#allocation4 + $0x70] sm:$0x8]
          %v774 = vsel %vm751, 0, %v773
          %775 = vst [vmem:[#allocation4 + $0x70] sm:$0x8] %v774
          %v776 = vld [vmem:[#allocation4 + $0x80] sm:$0x8]
          %v777 = vsel %vm751, 0, %v776
          %778 = vst [vmem:[#allocation4 + $0x80] sm:$0x8] %v777
          %v779 = vld [vmem:[#allocation4 + $0x90] sm:$0x8]
          %v780 = vsel %vm751, 0, %v779
          %781 = vst [vmem:[#allocation4 + $0x90] sm:$0x8] %v780
          %v782 = vld [vmem:[#allocation4 + $0xa0] sm:$0x8]
          %v783 = vsel %vm751, 0, %v782
          %784 = vst [vmem:[#allocation4 + $0xa0] sm:$0x8] %v783
          %v785 = vld [vmem:[#allocation4 + $0xb0] sm:$0x8]
          %v786 = vsel %vm751, 0, %v785
          %787 = vst [vmem:[#allocation4 + $0xb0] sm:$0x8] %v786
          %v788 = vld [vmem:[#allocation4 + $0xc0] sm:$0x8]
          %v789 = vsel %vm751, 0, %v788
          %790 = vst [vmem:[#allocation4 + $0xc0] sm:$0x8] %v789
          %v791 = vld [vmem:[#allocation4 + $0xd0] sm:$0x8]
          %v792 = vsel %vm751, 0, %v791
          %793 = vst [vmem:[#allocation4 + $0xd0] sm:$0x8] %v792
          %v794 = vld [vmem:[#allocation4 + $0xe0] sm:$0x8]
          %v795 = vsel %vm751, 0, %v794
          %796 = vst [vmem:[#allocation4 + $0xe0] sm:$0x8] %v795
          %v797 = vld [vmem:[#allocation4 + $0xf0] sm:$0x8]
          %v798 = vsel %vm751, 0, %v797
          %799 = vst [vmem:[#allocation4 + $0xf0] sm:$0x8] %v798
          %v800 = vld [vmem:[#allocation4 + $0x100] sm:$0x8]
          %v801 = vsel %vm751, 0, %v800
          %802 = vst [vmem:[#allocation4 + $0x100] sm:$0x8] %v801
          %v803 = vld [vmem:[#allocation4 + $0x110] sm:$0x8]
          %v804 = vsel %vm751, 0, %v803
          %805 = vst [vmem:[#allocation4 + $0x110] sm:$0x8] %v804
          %vm806 = vcmask 1044484
          %vm807 = vsmask.f32 4352
          %vm808 = vmand %vm806, %vm807
          %v809 = vld [vmem:[#allocation4 + $0x8] sm:$0x10]
          %v810 = vsel %vm808, 0, %v809
          %811 = vst [vmem:[#allocation4 + $0x8] sm:$0x10] %v810
          %v812 = vld [vmem:[#allocation4 + $0x18] sm:$0x10]
          %v813 = vsel %vm808, 0, %v812
          %814 = vst [vmem:[#allocation4 + $0x18] sm:$0x10] %v813
          %v815 = vld [vmem:[#allocation4 + $0x28] sm:$0x10]
          %v816 = vsel %vm808, 0, %v815
          %817 = vst [vmem:[#allocation4 + $0x28] sm:$0x10] %v816
          %v818 = vld [vmem:[#allocation4 + $0x38] sm:$0x10]
          %v819 = vsel %vm808, 0, %v818
          %820 = vst [vmem:[#allocation4 + $0x38] sm:$0x10] %v819
          %v821 = vld [vmem:[#allocation4 + $0x48] sm:$0x10]
          %v822 = vsel %vm808, 0, %v821
          %823 = vst [vmem:[#allocation4 + $0x48] sm:$0x10] %v822
          %v824 = vld [vmem:[#allocation4 + $0x58] sm:$0x10]
          %v825 = vsel %vm808, 0, %v824
          %826 = vst [vmem:[#allocation4 + $0x58] sm:$0x10] %v825
          %v827 = vld [vmem:[#allocation4 + $0x68] sm:$0x10]
          %v828 = vsel %vm808, 0, %v827
          %829 = vst [vmem:[#allocation4 + $0x68] sm:$0x10] %v828
          %v830 = vld [vmem:[#allocation4 + $0x78] sm:$0x10]
          %v831 = vsel %vm808, 0, %v830
          %832 = vst [vmem:[#allocation4 + $0x78] sm:$0x10] %v831
          %v833 = vld [vmem:[#allocation4 + $0x88] sm:$0x10]
          %v834 = vsel %vm808, 0, %v833
          %835 = vst [vmem:[#allocation4 + $0x88] sm:$0x10] %v834
          %v836 = vld [vmem:[#allocation4 + $0x98] sm:$0x10]
          %v837 = vsel %vm808, 0, %v836
          %838 = vst [vmem:[#allocation4 + $0x98] sm:$0x10] %v837
          %v839 = vld [vmem:[#allocation4 + $0xa8] sm:$0x10]
          %v840 = vsel %vm808, 0, %v839
          %841 = vst [vmem:[#allocation4 + $0xa8] sm:$0x10] %v840
          %v842 = vld [vmem:[#allocation4 + $0xb8] sm:$0x10]
          %v843 = vsel %vm808, 0, %v842
          %844 = vst [vmem:[#allocation4 + $0xb8] sm:$0x10] %v843
          %v845 = vld [vmem:[#allocation4 + $0xc8] sm:$0x10]
          %v846 = vsel %vm808, 0, %v845
          %847 = vst [vmem:[#allocation4 + $0xc8] sm:$0x10] %v846
          %v848 = vld [vmem:[#allocation4 + $0xd8] sm:$0x10]
          %v849 = vsel %vm808, 0, %v848
          %850 = vst [vmem:[#allocation4 + $0xd8] sm:$0x10] %v849
          %v851 = vld [vmem:[#allocation4 + $0xe8] sm:$0x10]
          %v852 = vsel %vm808, 0, %v851
          %853 = vst [vmem:[#allocation4 + $0xe8] sm:$0x10] %v852
          %v854 = vld [vmem:[#allocation4 + $0xf8] sm:$0x10]
          %v855 = vsel %vm808, 0, %v854
          %856 = vst [vmem:[#allocation4 + $0xf8] sm:$0x10] %v855
          %v857 = vld [vmem:[#allocation4 + $0x108] sm:$0x10]
          %v858 = vsel %vm808, 0, %v857
          %859 = vst [vmem:[#allocation4 + $0x108] sm:$0x10] %v858
          %v860 = vld [vmem:[#allocation4 + $0x118] sm:$0x10]
          %v861 = vsel %vm808, 0, %v860
          %862 = vst [vmem:[#allocation4 + $0x118] sm:$0x10] %v861
          %863 = vst [vmem:[#allocation4] sm:$0xff] 0
          %864 = vst [vmem:[#allocation4 + $0x8] sm:$0xff] 0
          %s865 = scalar_lea.vmem [#allocation4], 272
          %866 = vst [vmem:[%s865] sm:$0xff] 0
          %867 = vst [vmem:[%s865 + $0x8] sm:$0xff] 0
        $region56: #{tpu_custom_call.1} parent=35 // pred_fallthru
          _
        %v868 = vld [vmem:[#allocation4] sm:$0xff]
        %v869 = vld [vmem:[#allocation4 + $0x8] sm:$0xff]
        %v870 = vld [vmem:[#allocation4 + $0x10] sm:$0xff]
        %v871 = vld [vmem:[#allocation4 + $0x18] sm:$0xff]
        %v872 = vld [vmem:[#allocation4 + $0x20] sm:$0xff]
        %v873 = vld [vmem:[#allocation4 + $0x28] sm:$0xff]
        %v874 = vld [vmem:[#allocation4 + $0x30] sm:$0xff]
        %v875 = vld [vmem:[#allocation4 + $0x38] sm:$0xff]
        %v876 = vld [vmem:[#allocation4 + $0x40] sm:$0xff]
        %v877 = vld [vmem:[#allocation4 + $0x48] sm:$0xff]
        %v878 = vld [vmem:[#allocation4 + $0x50] sm:$0xff]
        %v879 = vld [vmem:[#allocation4 + $0x58] sm:$0xff]
        %v880 = vld [vmem:[#allocation4 + $0x60] sm:$0xff]
        %v881 = vld [vmem:[#allocation4 + $0x68] sm:$0xff]
        %v882 = vld [vmem:[#allocation4 + $0x70] sm:$0xff]
        %v883 = vld [vmem:[#allocation4 + $0x78] sm:$0xff]
        %v884 = vld [vmem:[#allocation4 + $0x80] sm:$0xff]
        %v885 = vld [vmem:[#allocation4 + $0x88] sm:$0xff]
        %v886 = vld [vmem:[#allocation4 + $0x90] sm:$0xff]
        %v887 = vld [vmem:[#allocation4 + $0x98] sm:$0xff]
        %v888 = vld [vmem:[#allocation4 + $0xa0] sm:$0xff]
        %v889 = vld [vmem:[#allocation4 + $0xa8] sm:$0xff]
        %v890 = vld [vmem:[#allocation4 + $0xb0] sm:$0xff]
        %v891 = vld [vmem:[#allocation4 + $0xb8] sm:$0xff]
        %v892 = vld [vmem:[#allocation4 + $0xc0] sm:$0xff]
        %v893 = vld [vmem:[#allocation4 + $0xc8] sm:$0xff]
        %v894 = vld [vmem:[#allocation4 + $0xd0] sm:$0xff]
        %v895 = vld [vmem:[#allocation4 + $0xd8] sm:$0xff]
        %v896 = vld [vmem:[#allocation4 + $0xe0] sm:$0xff]
        %v897 = vld [vmem:[#allocation4 + $0xe8] sm:$0xff]
        %v898 = vld [vmem:[#allocation4 + $0xf0] sm:$0xff]
        %v899 = vld [vmem:[#allocation4 + $0xf8] sm:$0xff]
        %v900 = vld [vmem:[#allocation4 + $0x100] sm:$0xff]
        %v901 = vld [vmem:[#allocation4 + $0x108] sm:$0xff]
        %v902 = vld [vmem:[#allocation4 + $0x110] sm:$0xff]
        %v903 = vld [vmem:[#allocation4 + $0x118] sm:$0xff]
        %vm904 = vsmask.f32 7424
        %v906 = vshrl.u32 %v868, 16
        %v908 = vshll.u32 %v868, 16
        %v910 = vrot.slane %v908, 1
        %v911 = vor.u32 %v906, %v910
        %v913 = vshll.u32 %v869, 16
        %v915 = vrot.slane %v913, 1
        %v916 = vsel %vm904, %v911, %v915
        %v917 = vshrl.u32 %v869, 16
        %v919 = vor.u32 %v917, %v915
        %v921 = vshrl.u32 %v870, 16
        %v923 = vshll.u32 %v870, 16
        %v925 = vrot.slane %v923, 1
        %v926 = vor.u32 %v921, %v925
        %v928 = vshll.u32 %v871, 16
        %v930 = vrot.slane %v928, 1
        %v931 = vsel %vm904, %v926, %v930
        %v932 = vshrl.u32 %v871, 16
        %v934 = vor.u32 %v932, %v930
        %v936 = vshrl.u32 %v872, 16
        %v938 = vshll.u32 %v872, 16
        %v940 = vrot.slane %v938, 1
        %v941 = vor.u32 %v936, %v940
        %v943 = vshll.u32 %v873, 16
        %v945 = vrot.slane %v943, 1
        %v946 = vsel %vm904, %v941, %v945
        %v947 = vshrl.u32 %v873, 16
        %v949 = vor.u32 %v947, %v945
        %v951 = vshrl.u32 %v874, 16
        %v953 = vshll.u32 %v874, 16
        %v955 = vrot.slane %v953, 1
        %v956 = vor.u32 %v951, %v955
        %v958 = vshll.u32 %v875, 16
        %v960 = vrot.slane %v958, 1
        %v961 = vsel %vm904, %v956, %v960
        %v962 = vshrl.u32 %v875, 16
        %v964 = vor.u32 %v962, %v960
        %v966 = vshrl.u32 %v876, 16
        %v968 = vshll.u32 %v876, 16
        %v970 = vrot.slane %v968, 1
        %v971 = vor.u32 %v966, %v970
        %v973 = vshll.u32 %v877, 16
        %v975 = vrot.slane %v973, 1
        %v976 = vsel %vm904, %v971, %v975
        %v977 = vshrl.u32 %v877, 16
        %v979 = vor.u32 %v977, %v975
        %v981 = vshrl.u32 %v878, 16
        %v983 = vshll.u32 %v878, 16
        %v985 = vrot.slane %v983, 1
        %v986 = vor.u32 %v981, %v985
        %v988 = vshll.u32 %v879, 16
        %v990 = vrot.slane %v988, 1
        %v991 = vsel %vm904, %v986, %v990
        %v992 = vshrl.u32 %v879, 16
        %v994 = vor.u32 %v992, %v990
        %v996 = vshrl.u32 %v880, 16
        %v998 = vshll.u32 %v880, 16
        %v1000 = vrot.slane %v998, 1
        %v1001 = vor.u32 %v996, %v1000
        %v1003 = vshll.u32 %v881, 16
        %v1005 = vrot.slane %v1003, 1
        %v1006 = vsel %vm904, %v1001, %v1005
        %v1007 = vshrl.u32 %v881, 16
        %v1009 = vor.u32 %v1007, %v1005
        %v1011 = vshrl.u32 %v882, 16
        %v1013 = vshll.u32 %v882, 16
        %v1015 = vrot.slane %v1013, 1
        %v1016 = vor.u32 %v1011, %v1015
        %v1018 = vshll.u32 %v883, 16
        %v1020 = vrot.slane %v1018, 1
        %v1021 = vsel %vm904, %v1016, %v1020
        %v1022 = vshrl.u32 %v883, 16
        %v1024 = vor.u32 %v1022, %v1020
        %v1026 = vshrl.u32 %v884, 16
        %v1028 = vshll.u32 %v884, 16
        %v1030 = vrot.slane %v1028, 1
        %v1031 = vor.u32 %v1026, %v1030
        %v1033 = vshll.u32 %v885, 16
        %v1035 = vrot.slane %v1033, 1
        %v1036 = vsel %vm904, %v1031, %v1035
        %v1037 = vshrl.u32 %v885, 16
        %v1039 = vor.u32 %v1037, %v1035
        %v1041 = vshrl.u32 %v886, 16
        %v1043 = vshll.u32 %v886, 16
        %v1045 = vrot.slane %v1043, 1
        %v1046 = vor.u32 %v1041, %v1045
        %v1048 = vshll.u32 %v887, 16
        %v1050 = vrot.slane %v1048, 1
        %v1051 = vsel %vm904, %v1046, %v1050
        %v1052 = vshrl.u32 %v887, 16
        %v1054 = vor.u32 %v1052, %v1050
        %v1056 = vshrl.u32 %v888, 16
        %v1058 = vshll.u32 %v888, 16
        %v1060 = vrot.slane %v1058, 1
        %v1061 = vor.u32 %v1056, %v1060
        %v1063 = vshll.u32 %v889, 16
        %v1065 = vrot.slane %v1063, 1
        %v1066 = vsel %vm904, %v1061, %v1065
        %v1067 = vshrl.u32 %v889, 16
        %v1069 = vor.u32 %v1067, %v1065
        %v1071 = vshrl.u32 %v890, 16
        %v1073 = vshll.u32 %v890, 16
        %v1075 = vrot.slane %v1073, 1
        %v1076 = vor.u32 %v1071, %v1075
        %v1078 = vshll.u32 %v891, 16
        %v1080 = vrot.slane %v1078, 1
        %v1081 = vsel %vm904, %v1076, %v1080
        %v1082 = vshrl.u32 %v891, 16
        %v1084 = vor.u32 %v1082, %v1080
        %v1086 = vshrl.u32 %v892, 16
        %v1088 = vshll.u32 %v892, 16
        %v1090 = vrot.slane %v1088, 1
        %v1091 = vor.u32 %v1086, %v1090
        %v1093 = vshll.u32 %v893, 16
        %v1095 = vrot.slane %v1093, 1
        %v1096 = vsel %vm904, %v1091, %v1095
        %v1097 = vshrl.u32 %v893, 16
        %v1099 = vor.u32 %v1097, %v1095
        %v1101 = vshrl.u32 %v894, 16
        %v1103 = vshll.u32 %v894, 16
        %v1105 = vrot.slane %v1103, 1
        %v1106 = vor.u32 %v1101, %v1105
        %v1108 = vshll.u32 %v895, 16
        %v1110 = vrot.slane %v1108, 1
        %v1111 = vsel %vm904, %v1106, %v1110
        %v1112 = vshrl.u32 %v895, 16
        %v1114 = vor.u32 %v1112, %v1110
        %v1116 = vshrl.u32 %v896, 16
        %v1118 = vshll.u32 %v896, 16
        %v1120 = vrot.slane %v1118, 1
        %v1121 = vor.u32 %v1116, %v1120
        %v1123 = vshll.u32 %v897, 16
        %v1125 = vrot.slane %v1123, 1
        %v1126 = vsel %vm904, %v1121, %v1125
        %v1127 = vshrl.u32 %v897, 16
        %v1129 = vor.u32 %v1127, %v1125
        %v1131 = vshrl.u32 %v898, 16
        %v1133 = vshll.u32 %v898, 16
        %v1135 = vrot.slane %v1133, 1
        %v1136 = vor.u32 %v1131, %v1135
        %v1138 = vshll.u32 %v899, 16
        %v1140 = vrot.slane %v1138, 1
        %v1141 = vsel %vm904, %v1136, %v1140
        %v1142 = vshrl.u32 %v899, 16
        %v1144 = vor.u32 %v1142, %v1140
        %v1146 = vshrl.u32 %v900, 16
        %v1148 = vshll.u32 %v900, 16
        %v1150 = vrot.slane %v1148, 1
        %v1151 = vor.u32 %v1146, %v1150
        %v1153 = vshll.u32 %v901, 16
        %v1155 = vrot.slane %v1153, 1
        %v1156 = vsel %vm904, %v1151, %v1155
        %v1157 = vshrl.u32 %v901, 16
        %v1159 = vor.u32 %v1157, %v1155
        %v1161 = vshrl.u32 %v902, 16
        %v1163 = vshll.u32 %v902, 16
        %v1165 = vrot.slane %v1163, 1
        %v1166 = vor.u32 %v1161, %v1165
        %v1168 = vshll.u32 %v903, 16
        %v1170 = vrot.slane %v1168, 1
        %v1171 = vsel %vm904, %v1166, %v1170
        %v1172 = vshrl.u32 %v903, 16
        %v1174 = vor.u32 %v1172, %v1170
        %vm1211 = vcmask 1046528
        %v1212 = vrot.slane %v868, 1
        %v1213 = vrot.slane %v869, 1
        %v1214 = vsel %vm1211, %v1212, %v1213
        %v1215 = vrot.slane %v870, 1
        %v1216 = vrot.slane %v871, 1
        %v1217 = vsel %vm1211, %v1215, %v1216
        %v1218 = vrot.slane %v872, 1
        %v1219 = vrot.slane %v873, 1
        %v1220 = vsel %vm1211, %v1218, %v1219
        %v1221 = vrot.slane %v874, 1
        %v1222 = vrot.slane %v875, 1
        %v1223 = vsel %vm1211, %v1221, %v1222
        %v1224 = vrot.slane %v876, 1
        %v1225 = vrot.slane %v877, 1
        %v1226 = vsel %vm1211, %v1224, %v1225
        %v1227 = vrot.slane %v878, 1
        %v1228 = vrot.slane %v879, 1
        %v1229 = vsel %vm1211, %v1227, %v1228
        %v1230 = vrot.slane %v880, 1
        %v1231 = vrot.slane %v881, 1
        %v1232 = vsel %vm1211, %v1230, %v1231
        %v1233 = vrot.slane %v882, 1
        %v1234 = vrot.slane %v883, 1
        %v1235 = vsel %vm1211, %v1233, %v1234
        %v1236 = vrot.slane %v884, 1
        %v1237 = vrot.slane %v885, 1
        %v1238 = vsel %vm1211, %v1236, %v1237
        %v1239 = vrot.slane %v886, 1
        %v1240 = vrot.slane %v887, 1
        %v1241 = vsel %vm1211, %v1239, %v1240
        %v1242 = vrot.slane %v888, 1
        %v1243 = vrot.slane %v889, 1
        %v1244 = vsel %vm1211, %v1242, %v1243
        %v1245 = vrot.slane %v890, 1
        %v1246 = vrot.slane %v891, 1
        %v1247 = vsel %vm1211, %v1245, %v1246
        %v1248 = vrot.slane %v892, 1
        %v1249 = vrot.slane %v893, 1
        %v1250 = vsel %vm1211, %v1248, %v1249
        %v1251 = vrot.slane %v894, 1
        %v1252 = vrot.slane %v895, 1
        %v1253 = vsel %vm1211, %v1251, %v1252
        %v1254 = vrot.slane %v896, 1
        %v1255 = vrot.slane %v897, 1
        %v1256 = vsel %vm1211, %v1254, %v1255
        %v1257 = vrot.slane %v898, 1
        %v1258 = vrot.slane %v899, 1
        %v1259 = vsel %vm1211, %v1257, %v1258
        %v1260 = vrot.slane %v900, 1
        %v1261 = vrot.slane %v901, 1
        %v1262 = vsel %vm1211, %v1260, %v1261
        %v1263 = vrot.slane %v902, 1
        %v1264 = vrot.slane %v903, 1
        %v1265 = vsel %vm1211, %v1263, %v1264
        %vm1266 = vsmask.f32 4352
        %v1267 = vrot.slane %v906, 3
        %v1268 = vrot.slane %v908, 4
        %v1269 = vor.u32 %v1267, %v1268
        %v1270 = vrot.slane %v917, 3
        %v1271 = vrot.slane %v913, 4
        %v1272 = vor.u32 %v1270, %v1271
        %v1273 = vsel %vm1266, %v1269, %v1272
        %v1275 = vshrl.u32 %v916, 16
        %v1277 = vrot.slane %v1275, 3
        %v1278 = vshll.u32 %v916, 16
        %v1280 = vrot.slane %v1278, 4
        %v1281 = vor.u32 %v1277, %v1280
        %v1283 = vshrl.u32 %v919, 16
        %v1285 = vrot.slane %v1283, 3
        %v1286 = vshll.u32 %v919, 16
        %v1288 = vrot.slane %v1286, 4
        %v1289 = vor.u32 %v1285, %v1288
        %v1290 = vsel %vm1266, %v1281, %v1289
        %v1292 = vshrl.u32 %v1214, 16
        %v1294 = vrot.slane %v1292, 3
        %v1295 = vshll.u32 %v1214, 16
        %v1297 = vrot.slane %v1295, 4
        %v1298 = vor.u32 %v1294, %v1297
        %v1300 = vshrl.u32 %v1213, 16
        %v1302 = vrot.slane %v1300, 3
        %v1303 = vshll.u32 %v1213, 16
        %v1305 = vrot.slane %v1303, 4
        %v1306 = vor.u32 %v1302, %v1305
        %v1307 = vsel %vm1266, %v1298, %v1306
        %v1308 = vrot.slane %v921, 3
        %v1309 = vrot.slane %v923, 4
        %v1310 = vor.u32 %v1308, %v1309
        %v1311 = vrot.slane %v932, 3
        %v1312 = vrot.slane %v928, 4
        %v1313 = vor.u32 %v1311, %v1312
        %v1314 = vsel %vm1266, %v1310, %v1313
        %v1316 = vshrl.u32 %v931, 16
        %v1318 = vrot.slane %v1316, 3
        %v1319 = vshll.u32 %v931, 16
        %v1321 = vrot.slane %v1319, 4
        %v1322 = vor.u32 %v1318, %v1321
        %v1324 = vshrl.u32 %v934, 16
        %v1326 = vrot.slane %v1324, 3
        %v1327 = vshll.u32 %v934, 16
        %v1329 = vrot.slane %v1327, 4
        %v1330 = vor.u32 %v1326, %v1329
        %v1331 = vsel %vm1266, %v1322, %v1330
        %v1333 = vshrl.u32 %v1217, 16
        %v1335 = vrot.slane %v1333, 3
        %v1336 = vshll.u32 %v1217, 16
        %v1338 = vrot.slane %v1336, 4
        %v1339 = vor.u32 %v1335, %v1338
        %v1341 = vshrl.u32 %v1216, 16
        %v1343 = vrot.slane %v1341, 3
        %v1344 = vshll.u32 %v1216, 16
        %v1346 = vrot.slane %v1344, 4
        %v1347 = vor.u32 %v1343, %v1346
        %v1348 = vsel %vm1266, %v1339, %v1347
        %v1349 = vrot.slane %v936, 3
        %v1350 = vrot.slane %v938, 4
        %v1351 = vor.u32 %v1349, %v1350
        %v1352 = vrot.slane %v947, 3
        %v1353 = vrot.slane %v943, 4
        %v1354 = vor.u32 %v1352, %v1353
        %v1355 = vsel %vm1266, %v1351, %v1354
        %v1357 = vshrl.u32 %v946, 16
        %v1359 = vrot.slane %v1357, 3
        %v1360 = vshll.u32 %v946, 16
        %v1362 = vrot.slane %v1360, 4
        %v1363 = vor.u32 %v1359, %v1362
        %v1365 = vshrl.u32 %v949, 16
        %v1367 = vrot.slane %v1365, 3
        %v1368 = vshll.u32 %v949, 16
        %v1370 = vrot.slane %v1368, 4
        %v1371 = vor.u32 %v1367, %v1370
        %v1372 = vsel %vm1266, %v1363, %v1371
        %v1374 = vshrl.u32 %v1220, 16
        %v1376 = vrot.slane %v1374, 3
        %v1377 = vshll.u32 %v1220, 16
        %v1379 = vrot.slane %v1377, 4
        %v1380 = vor.u32 %v1376, %v1379
        %v1382 = vshrl.u32 %v1219, 16
        %v1384 = vrot.slane %v1382, 3
        %v1385 = vshll.u32 %v1219, 16
        %v1387 = vrot.slane %v1385, 4
        %v1388 = vor.u32 %v1384, %v1387
        %v1389 = vsel %vm1266, %v1380, %v1388
        %v1390 = vrot.slane %v951, 3
        %v1391 = vrot.slane %v953, 4
        %v1392 = vor.u32 %v1390, %v1391
        %v1393 = vrot.slane %v962, 3
        %v1394 = vrot.slane %v958, 4
        %v1395 = vor.u32 %v1393, %v1394
        %v1396 = vsel %vm1266, %v1392, %v1395
        %v1398 = vshrl.u32 %v961, 16
        %v1400 = vrot.slane %v1398, 3
        %v1401 = vshll.u32 %v961, 16
        %v1403 = vrot.slane %v1401, 4
        %v1404 = vor.u32 %v1400, %v1403
        %v1406 = vshrl.u32 %v964, 16
        %v1408 = vrot.slane %v1406, 3
        %v1409 = vshll.u32 %v964, 16
        %v1411 = vrot.slane %v1409, 4
        %v1412 = vor.u32 %v1408, %v1411
        %v1413 = vsel %vm1266, %v1404, %v1412
        %v1415 = vshrl.u32 %v1223, 16
        %v1417 = vrot.slane %v1415, 3
        %v1418 = vshll.u32 %v1223, 16
        %v1420 = vrot.slane %v1418, 4
        %v1421 = vor.u32 %v1417, %v1420
        %v1423 = vshrl.u32 %v1222, 16
        %v1425 = vrot.slane %v1423, 3
        %v1426 = vshll.u32 %v1222, 16
        %v1428 = vrot.slane %v1426, 4
        %v1429 = vor.u32 %v1425, %v1428
        %v1430 = vsel %vm1266, %v1421, %v1429
        %v1431 = vrot.slane %v966, 3
        %v1432 = vrot.slane %v968, 4
        %v1433 = vor.u32 %v1431, %v1432
        %v1434 = vrot.slane %v977, 3
        %v1435 = vrot.slane %v973, 4
        %v1436 = vor.u32 %v1434, %v1435
        %v1437 = vsel %vm1266, %v1433, %v1436
        %v1439 = vshrl.u32 %v976, 16
        %v1441 = vrot.slane %v1439, 3
        %v1442 = vshll.u32 %v976, 16
        %v1444 = vrot.slane %v1442, 4
        %v1445 = vor.u32 %v1441, %v1444
        %v1447 = vshrl.u32 %v979, 16
        %v1449 = vrot.slane %v1447, 3
        %v1450 = vshll.u32 %v979, 16
        %v1452 = vrot.slane %v1450, 4
        %v1453 = vor.u32 %v1449, %v1452
        %v1454 = vsel %vm1266, %v1445, %v1453
        %v1456 = vshrl.u32 %v1226, 16
        %v1458 = vrot.slane %v1456, 3
        %v1459 = vshll.u32 %v1226, 16
        %v1461 = vrot.slane %v1459, 4
        %v1462 = vor.u32 %v1458, %v1461
        %v1464 = vshrl.u32 %v1225, 16
        %v1466 = vrot.slane %v1464, 3
        %v1467 = vshll.u32 %v1225, 16
        %v1469 = vrot.slane %v1467, 4
        %v1470 = vor.u32 %v1466, %v1469
        %v1471 = vsel %vm1266, %v1462, %v1470
        %v1472 = vrot.slane %v981, 3
        %v1473 = vrot.slane %v983, 4
        %v1474 = vor.u32 %v1472, %v1473
        %v1475 = vrot.slane %v992, 3
        %v1476 = vrot.slane %v988, 4
        %v1477 = vor.u32 %v1475, %v1476
        %v1478 = vsel %vm1266, %v1474, %v1477
        %v1480 = vshrl.u32 %v991, 16
        %v1482 = vrot.slane %v1480, 3
        %v1483 = vshll.u32 %v991, 16
        %v1485 = vrot.slane %v1483, 4
        %v1486 = vor.u32 %v1482, %v1485
        %v1488 = vshrl.u32 %v994, 16
        %v1490 = vrot.slane %v1488, 3
        %v1491 = vshll.u32 %v994, 16
        %v1493 = vrot.slane %v1491, 4
        %v1494 = vor.u32 %v1490, %v1493
        %v1495 = vsel %vm1266, %v1486, %v1494
        %v1497 = vshrl.u32 %v1229, 16
        %v1499 = vrot.slane %v1497, 3
        %v1500 = vshll.u32 %v1229, 16
        %v1502 = vrot.slane %v1500, 4
        %v1503 = vor.u32 %v1499, %v1502
        %v1505 = vshrl.u32 %v1228, 16
        %v1507 = vrot.slane %v1505, 3
        %v1508 = vshll.u32 %v1228, 16
        %v1510 = vrot.slane %v1508, 4
        %v1511 = vor.u32 %v1507, %v1510
        %v1512 = vsel %vm1266, %v1503, %v1511
        %v1513 = vrot.slane %v996, 3
        %v1514 = vrot.slane %v998, 4
        %v1515 = vor.u32 %v1513, %v1514
        %v1516 = vrot.slane %v1007, 3
        %v1517 = vrot.slane %v1003, 4
        %v1518 = vor.u32 %v1516, %v1517
        %v1519 = vsel %vm1266, %v1515, %v1518
        %v1521 = vshrl.u32 %v1006, 16
        %v1523 = vrot.slane %v1521, 3
        %v1524 = vshll.u32 %v1006, 16
        %v1526 = vrot.slane %v1524, 4
        %v1527 = vor.u32 %v1523, %v1526
        %v1529 = vshrl.u32 %v1009, 16
        %v1531 = vrot.slane %v1529, 3
        %v1532 = vshll.u32 %v1009, 16
        %v1534 = vrot.slane %v1532, 4
        %v1535 = vor.u32 %v1531, %v1534
        %v1536 = vsel %vm1266, %v1527, %v1535
        %v1538 = vshrl.u32 %v1232, 16
        %v1540 = vrot.slane %v1538, 3
        %v1541 = vshll.u32 %v1232, 16
        %v1543 = vrot.slane %v1541, 4
        %v1544 = vor.u32 %v1540, %v1543
        %v1546 = vshrl.u32 %v1231, 16
        %v1548 = vrot.slane %v1546, 3
        %v1549 = vshll.u32 %v1231, 16
        %v1551 = vrot.slane %v1549, 4
        %v1552 = vor.u32 %v1548, %v1551
        %v1553 = vsel %vm1266, %v1544, %v1552
        %v1554 = vrot.slane %v1011, 3
        %v1555 = vrot.slane %v1013, 4
        %v1556 = vor.u32 %v1554, %v1555
        %v1557 = vrot.slane %v1022, 3
        %v1558 = vrot.slane %v1018, 4
        %v1559 = vor.u32 %v1557, %v1558
        %v1560 = vsel %vm1266, %v1556, %v1559
        %v1562 = vshrl.u32 %v1021, 16
        %v1564 = vrot.slane %v1562, 3
        %v1565 = vshll.u32 %v1021, 16
        %v1567 = vrot.slane %v1565, 4
        %v1568 = vor.u32 %v1564, %v1567
        %v1570 = vshrl.u32 %v1024, 16
        %v1572 = vrot.slane %v1570, 3
        %v1573 = vshll.u32 %v1024, 16
        %v1575 = vrot.slane %v1573, 4
        %v1576 = vor.u32 %v1572, %v1575
        %v1577 = vsel %vm1266, %v1568, %v1576
        %v1579 = vshrl.u32 %v1235, 16
        %v1581 = vrot.slane %v1579, 3
        %v1582 = vshll.u32 %v1235, 16
        %v1584 = vrot.slane %v1582, 4
        %v1585 = vor.u32 %v1581, %v1584
        %v1587 = vshrl.u32 %v1234, 16
        %v1589 = vrot.slane %v1587, 3
        %v1590 = vshll.u32 %v1234, 16
        %v1592 = vrot.slane %v1590, 4
        %v1593 = vor.u32 %v1589, %v1592
        %v1594 = vsel %vm1266, %v1585, %v1593
        %v1595 = vrot.slane %v1026, 3
        %v1596 = vrot.slane %v1028, 4
        %v1597 = vor.u32 %v1595, %v1596
        %v1598 = vrot.slane %v1037, 3
        %v1599 = vrot.slane %v1033, 4
        %v1600 = vor.u32 %v1598, %v1599
        %v1601 = vsel %vm1266, %v1597, %v1600
        %v1603 = vshrl.u32 %v1036, 16
        %v1605 = vrot.slane %v1603, 3
        %v1606 = vshll.u32 %v1036, 16
        %v1608 = vrot.slane %v1606, 4
        %v1609 = vor.u32 %v1605, %v1608
        %v1611 = vshrl.u32 %v1039, 16
        %v1613 = vrot.slane %v1611, 3
        %v1614 = vshll.u32 %v1039, 16
        %v1616 = vrot.slane %v1614, 4
        %v1617 = vor.u32 %v1613, %v1616
        %v1618 = vsel %vm1266, %v1609, %v1617
        %v1620 = vshrl.u32 %v1238, 16
        %v1622 = vrot.slane %v1620, 3
        %v1623 = vshll.u32 %v1238, 16
        %v1625 = vrot.slane %v1623, 4
        %v1626 = vor.u32 %v1622, %v1625
        %v1628 = vshrl.u32 %v1237, 16
        %v1630 = vrot.slane %v1628, 3
        %v1631 = vshll.u32 %v1237, 16
        %v1633 = vrot.slane %v1631, 4
        %v1634 = vor.u32 %v1630, %v1633
        %v1635 = vsel %vm1266, %v1626, %v1634
        %v1636 = vrot.slane %v1041, 3
        %v1637 = vrot.slane %v1043, 4
        %v1638 = vor.u32 %v1636, %v1637
        %v1639 = vrot.slane %v1052, 3
        %v1640 = vrot.slane %v1048, 4
        %v1641 = vor.u32 %v1639, %v1640
        %v1642 = vsel %vm1266, %v1638, %v1641
        %v1644 = vshrl.u32 %v1051, 16
        %v1646 = vrot.slane %v1644, 3
        %v1647 = vshll.u32 %v1051, 16
        %v1649 = vrot.slane %v1647, 4
        %v1650 = vor.u32 %v1646, %v1649
        %v1652 = vshrl.u32 %v1054, 16
        %v1654 = vrot.slane %v1652, 3
        %v1655 = vshll.u32 %v1054, 16
        %v1657 = vrot.slane %v1655, 4
        %v1658 = vor.u32 %v1654, %v1657
        %v1659 = vsel %vm1266, %v1650, %v1658
        %v1661 = vshrl.u32 %v1241, 16
        %v1663 = vrot.slane %v1661, 3
        %v1664 = vshll.u32 %v1241, 16
        %v1666 = vrot.slane %v1664, 4
        %v1667 = vor.u32 %v1663, %v1666
        %v1669 = vshrl.u32 %v1240, 16
        %v1671 = vrot.slane %v1669, 3
        %v1672 = vshll.u32 %v1240, 16
        %v1674 = vrot.slane %v1672, 4
        %v1675 = vor.u32 %v1671, %v1674
        %v1676 = vsel %vm1266, %v1667, %v1675
        %v1677 = vrot.slane %v1056, 3
        %v1678 = vrot.slane %v1058, 4
        %v1679 = vor.u32 %v1677, %v1678
        %v1680 = vrot.slane %v1067, 3
        %v1681 = vrot.slane %v1063, 4
        %v1682 = vor.u32 %v1680, %v1681
        %v1683 = vsel %vm1266, %v1679, %v1682
        %v1685 = vshrl.u32 %v1066, 16
        %v1687 = vrot.slane %v1685, 3
        %v1688 = vshll.u32 %v1066, 16
        %v1690 = vrot.slane %v1688, 4
        %v1691 = vor.u32 %v1687, %v1690
        %v1693 = vshrl.u32 %v1069, 16
        %v1695 = vrot.slane %v1693, 3
        %v1696 = vshll.u32 %v1069, 16
        %v1698 = vrot.slane %v1696, 4
        %v1699 = vor.u32 %v1695, %v1698
        %v1700 = vsel %vm1266, %v1691, %v1699
        %v1702 = vshrl.u32 %v1244, 16
        %v1704 = vrot.slane %v1702, 3
        %v1705 = vshll.u32 %v1244, 16
        %v1707 = vrot.slane %v1705, 4
        %v1708 = vor.u32 %v1704, %v1707
        %v1710 = vshrl.u32 %v1243, 16
        %v1712 = vrot.slane %v1710, 3
        %v1713 = vshll.u32 %v1243, 16
        %v1715 = vrot.slane %v1713, 4
        %v1716 = vor.u32 %v1712, %v1715
        %v1717 = vsel %vm1266, %v1708, %v1716
        %v1718 = vrot.slane %v1071, 3
        %v1719 = vrot.slane %v1073, 4
        %v1720 = vor.u32 %v1718, %v1719
        %v1721 = vrot.slane %v1082, 3
        %v1722 = vrot.slane %v1078, 4
        %v1723 = vor.u32 %v1721, %v1722
        %v1724 = vsel %vm1266, %v1720, %v1723
        %v1726 = vshrl.u32 %v1081, 16
        %v1728 = vrot.slane %v1726, 3
        %v1729 = vshll.u32 %v1081, 16
        %v1731 = vrot.slane %v1729, 4
        %v1732 = vor.u32 %v1728, %v1731
        %v1734 = vshrl.u32 %v1084, 16
        %v1736 = vrot.slane %v1734, 3
        %v1737 = vshll.u32 %v1084, 16
        %v1739 = vrot.slane %v1737, 4
        %v1740 = vor.u32 %v1736, %v1739
        %v1741 = vsel %vm1266, %v1732, %v1740
        %v1743 = vshrl.u32 %v1247, 16
        %v1745 = vrot.slane %v1743, 3
        %v1746 = vshll.u32 %v1247, 16
        %v1748 = vrot.slane %v1746, 4
        %v1749 = vor.u32 %v1745, %v1748
        %v1751 = vshrl.u32 %v1246, 16
        %v1753 = vrot.slane %v1751, 3
        %v1754 = vshll.u32 %v1246, 16
        %v1756 = vrot.slane %v1754, 4
        %v1757 = vor.u32 %v1753, %v1756
        %v1758 = vsel %vm1266, %v1749, %v1757
        %v1759 = vrot.slane %v1086, 3
        %v1760 = vrot.slane %v1088, 4
        %v1761 = vor.u32 %v1759, %v1760
        %v1762 = vrot.slane %v1097, 3
        %v1763 = vrot.slane %v1093, 4
        %v1764 = vor.u32 %v1762, %v1763
        %v1765 = vsel %vm1266, %v1761, %v1764
        %v1767 = vshrl.u32 %v1096, 16
        %v1769 = vrot.slane %v1767, 3
        %v1770 = vshll.u32 %v1096, 16
        %v1772 = vrot.slane %v1770, 4
        %v1773 = vor.u32 %v1769, %v1772
        %v1775 = vshrl.u32 %v1099, 16
        %v1777 = vrot.slane %v1775, 3
        %v1778 = vshll.u32 %v1099, 16
        %v1780 = vrot.slane %v1778, 4
        %v1781 = vor.u32 %v1777, %v1780
        %v1782 = vsel %vm1266, %v1773, %v1781
        %v1784 = vshrl.u32 %v1250, 16
        %v1786 = vrot.slane %v1784, 3
        %v1787 = vshll.u32 %v1250, 16
        %v1789 = vrot.slane %v1787, 4
        %v1790 = vor.u32 %v1786, %v1789
        %v1792 = vshrl.u32 %v1249, 16
        %v1794 = vrot.slane %v1792, 3
        %v1795 = vshll.u32 %v1249, 16
        %v1797 = vrot.slane %v1795, 4
        %v1798 = vor.u32 %v1794, %v1797
        %v1799 = vsel %vm1266, %v1790, %v1798
        %v1800 = vrot.slane %v1101, 3
        %v1801 = vrot.slane %v1103, 4
        %v1802 = vor.u32 %v1800, %v1801
        %v1803 = vrot.slane %v1112, 3
        %v1804 = vrot.slane %v1108, 4
        %v1805 = vor.u32 %v1803, %v1804
        %v1806 = vsel %vm1266, %v1802, %v1805
        %v1808 = vshrl.u32 %v1111, 16
        %v1810 = vrot.slane %v1808, 3
        %v1811 = vshll.u32 %v1111, 16
        %v1813 = vrot.slane %v1811, 4
        %v1814 = vor.u32 %v1810, %v1813
        %v1816 = vshrl.u32 %v1114, 16
        %v1818 = vrot.slane %v1816, 3
        %v1819 = vshll.u32 %v1114, 16
        %v1821 = vrot.slane %v1819, 4
        %v1822 = vor.u32 %v1818, %v1821
        %v1823 = vsel %vm1266, %v1814, %v1822
        %v1825 = vshrl.u32 %v1253, 16
        %v1827 = vrot.slane %v1825, 3
        %v1828 = vshll.u32 %v1253, 16
        %v1830 = vrot.slane %v1828, 4
        %v1831 = vor.u32 %v1827, %v1830
        %v1833 = vshrl.u32 %v1252, 16
        %v1835 = vrot.slane %v1833, 3
        %v1836 = vshll.u32 %v1252, 16
        %v1838 = vrot.slane %v1836, 4
        %v1839 = vor.u32 %v1835, %v1838
        %v1840 = vsel %vm1266, %v1831, %v1839
        %v1841 = vrot.slane %v1116, 3
        %v1842 = vrot.slane %v1118, 4
        %v1843 = vor.u32 %v1841, %v1842
        %v1844 = vrot.slane %v1127, 3
        %v1845 = vrot.slane %v1123, 4
        %v1846 = vor.u32 %v1844, %v1845
        %v1847 = vsel %vm1266, %v1843, %v1846
        %v1849 = vshrl.u32 %v1126, 16
        %v1851 = vrot.slane %v1849, 3
        %v1852 = vshll.u32 %v1126, 16
        %v1854 = vrot.slane %v1852, 4
        %v1855 = vor.u32 %v1851, %v1854
        %v1857 = vshrl.u32 %v1129, 16
        %v1859 = vrot.slane %v1857, 3
        %v1860 = vshll.u32 %v1129, 16
        %v1862 = vrot.slane %v1860, 4
        %v1863 = vor.u32 %v1859, %v1862
        %v1864 = vsel %vm1266, %v1855, %v1863
        %v1866 = vshrl.u32 %v1256, 16
        %v1868 = vrot.slane %v1866, 3
        %v1869 = vshll.u32 %v1256, 16
        %v1871 = vrot.slane %v1869, 4
        %v1872 = vor.u32 %v1868, %v1871
        %v1874 = vshrl.u32 %v1255, 16
        %v1876 = vrot.slane %v1874, 3
        %v1877 = vshll.u32 %v1255, 16
        %v1879 = vrot.slane %v1877, 4
        %v1880 = vor.u32 %v1876, %v1879
        %v1881 = vsel %vm1266, %v1872, %v1880
        %v1882 = vrot.slane %v1131, 3
        %v1883 = vrot.slane %v1133, 4
        %v1884 = vor.u32 %v1882, %v1883
        %v1885 = vrot.slane %v1142, 3
        %v1886 = vrot.slane %v1138, 4
        %v1887 = vor.u32 %v1885, %v1886
        %v1888 = vsel %vm1266, %v1884, %v1887
        %v1890 = vshrl.u32 %v1141, 16
        %v1892 = vrot.slane %v1890, 3
        %v1893 = vshll.u32 %v1141, 16
        %v1895 = vrot.slane %v1893, 4
        %v1896 = vor.u32 %v1892, %v1895
        %v1898 = vshrl.u32 %v1144, 16
        %v1900 = vrot.slane %v1898, 3
        %v1901 = vshll.u32 %v1144, 16
        %v1903 = vrot.slane %v1901, 4
        %v1904 = vor.u32 %v1900, %v1903
        %v1905 = vsel %vm1266, %v1896, %v1904
        %v1907 = vshrl.u32 %v1259, 16
        %v1909 = vrot.slane %v1907, 3
        %v1910 = vshll.u32 %v1259, 16
        %v1912 = vrot.slane %v1910, 4
        %v1913 = vor.u32 %v1909, %v1912
        %v1915 = vshrl.u32 %v1258, 16
        %v1917 = vrot.slane %v1915, 3
        %v1918 = vshll.u32 %v1258, 16
        %v1920 = vrot.slane %v1918, 4
        %v1921 = vor.u32 %v1917, %v1920
        %v1922 = vsel %vm1266, %v1913, %v1921
        %v1971 = vld [vmem:[#allocation9] sm:$0xf]
        %v1972 = vld [vmem:[#allocation9 + $0x4] sm:$0xf]
        %v1973 = vld [vmem:[#allocation9 + $0x8] sm:$0xf]
        %v1974 = vld [vmem:[#allocation9 + $0xc] sm:$0xf]
        %v1975 = vld [vmem:[#allocation9 + $0x10] sm:$0xf]
        %v1976 = vld [vmem:[#allocation9 + $0x14] sm:$0xf]
        %v1977 = vld [vmem:[#allocation9 + $0x18] sm:$0xf]
        %v1978 = vld [vmem:[#allocation9 + $0x1c] sm:$0xf]
        %v1979 = vld [vmem:[#allocation9 + $0x20] sm:$0xf]
        %v1980 = vld [vmem:[#allocation9 + $0x24] sm:$0xf]
        %v1981 = vld [vmem:[#allocation9 + $0x28] sm:$0xf]
        %v1982 = vld [vmem:[#allocation9 + $0x2c] sm:$0xf]
        %v1983 = vld [vmem:[#allocation9 + $0x30] sm:$0xf]
        %v1984 = vld [vmem:[#allocation9 + $0x34] sm:$0xf]
        %v1985 = vld [vmem:[#allocation9 + $0x38] sm:$0xf]
        %v1986 = vld [vmem:[#allocation9 + $0x3c] sm:$0xf]
        %v1987 = vld [vmem:[#allocation9 + $0x40] sm:$0xf]
        %v1988 = vld [vmem:[#allocation9 + $0x44] sm:$0xf]
        %v1989 = vld [vmem:[#allocation9 + $0x48] sm:$0xf]
        %v1990 = vld [vmem:[#allocation9 + $0x4c] sm:$0xf]
        %v1991 = vld [vmem:[#allocation9 + $0x50] sm:$0xf]
        %v1992 = vld [vmem:[#allocation9 + $0x54] sm:$0xf]
        %v1993 = vld [vmem:[#allocation9 + $0x58] sm:$0xf]
        %v1994 = vld [vmem:[#allocation9 + $0x5c] sm:$0xf]
        %v1995 = vld [vmem:[#allocation9 + $0x60] sm:$0xf]
        %v1996 = vld [vmem:[#allocation9 + $0x64] sm:$0xf]
        %v1997 = vld [vmem:[#allocation9 + $0x68] sm:$0xf]
        %v1998 = vld [vmem:[#allocation9 + $0x6c] sm:$0xf]
        %v1999 = vld [vmem:[#allocation9 + $0x70] sm:$0xf]
        %v2000 = vld [vmem:[#allocation9 + $0x74] sm:$0xf]
        %v2001 = vld [vmem:[#allocation9 + $0x78] sm:$0xf]
        %v2002 = vld [vmem:[#allocation9 + $0x7c] sm:$0xf]
        %v2003 = vld [vmem:[#allocation9 + $0x80] sm:$0xf]
        %v2004 = vld [vmem:[#allocation9 + $0x84] sm:$0xf]
        %v2005 = vld [vmem:[#allocation9 + $0x88] sm:$0xf]
        %v2006 = vld [vmem:[#allocation9 + $0x8c] sm:$0xf]
        %v2007 = vld [vmem:[#allocation9 + $0x90] sm:$0xf]
        %v2008 = vld [vmem:[#allocation9 + $0x94] sm:$0xf]
        %v2009 = vld [vmem:[#allocation9 + $0x98] sm:$0xf]
        %v2010 = vld [vmem:[#allocation9 + $0x9c] sm:$0xf]
        %v2011 = vld [vmem:[#allocation9 + $0xa0] sm:$0xf]
        %v2012 = vld [vmem:[#allocation9 + $0xa4] sm:$0xf]
        %v2013 = vld [vmem:[#allocation9 + $0xa8] sm:$0xf]
        %v2014 = vld [vmem:[#allocation9 + $0xac] sm:$0xf]
        %v2015 = vld [vmem:[#allocation9 + $0xb0] sm:$0xf]
        %v2016 = vld [vmem:[#allocation9 + $0xb4] sm:$0xf]
        %v2017 = vld [vmem:[#allocation9 + $0xb8] sm:$0xf]
        %v2018 = vld [vmem:[#allocation9 + $0xbc] sm:$0xf]
        %v2019 = vld [vmem:[%s4] sm:$0x1]
        %v2021 = vlaneseq
        %v2022 = vshrl.u32 %v2021, 7
        %v2023 = vsub.s32 0, %v2022
        %v2024 = vrot.slane %v2019, %v2023
        %v2074 = vunpack.c.l.b16 %v1971
        %v2075 = vunpack.c.l.b16 %v1972
        %v2076 = vunpack.c.l.b16 %v1973
        %v2077 = vunpack.c.l.b16 %v1974
        %v2078 = vunpack.c.l.b16 %v1975
        %v2079 = vunpack.c.l.b16 %v1976
        %v2080 = vunpack.c.l.b16 %v1977
        %v2081 = vunpack.c.l.b16 %v1978
        %v2082 = vunpack.c.l.b16 %v1979
        %v2083 = vunpack.c.l.b16 %v1980
        %v2084 = vunpack.c.l.b16 %v1981
        %v2085 = vunpack.c.l.b16 %v1982
        %v2086 = vunpack.c.l.b16 %v1983
        %v2087 = vunpack.c.l.b16 %v1984
        %v2088 = vunpack.c.l.b16 %v1985
        %v2089 = vunpack.c.l.b16 %v1986
        %v2090 = vunpack.c.l.b16 %v1987
        %v2091 = vunpack.c.l.b16 %v1988
        %v2092 = vunpack.c.l.b16 %v1989
        %v2093 = vunpack.c.l.b16 %v1990
        %v2094 = vunpack.c.l.b16 %v1991
        %v2095 = vunpack.c.l.b16 %v1992
        %v2096 = vunpack.c.l.b16 %v1993
        %v2097 = vunpack.c.l.b16 %v1994
        %v2098 = vunpack.c.l.b16 %v1995
        %v2099 = vunpack.c.l.b16 %v1996
        %v2100 = vunpack.c.l.b16 %v1997
        %v2101 = vunpack.c.l.b16 %v1998
        %v2102 = vunpack.c.l.b16 %v1999
        %v2103 = vunpack.c.l.b16 %v2000
        %v2104 = vunpack.c.l.b16 %v2001
        %v2105 = vunpack.c.l.b16 %v2002
        %v2106 = vunpack.c.l.b16 %v2003
        %v2107 = vunpack.c.l.b16 %v2004
        %v2108 = vunpack.c.l.b16 %v2005
        %v2109 = vunpack.c.l.b16 %v2006
        %v2110 = vunpack.c.l.b16 %v2007
        %v2111 = vunpack.c.l.b16 %v2008
        %v2112 = vunpack.c.l.b16 %v2009
        %v2113 = vunpack.c.l.b16 %v2010
        %v2114 = vunpack.c.l.b16 %v2011
        %v2115 = vunpack.c.l.b16 %v2012
        %v2116 = vunpack.c.l.b16 %v2013
        %v2117 = vunpack.c.l.b16 %v2014
        %v2118 = vunpack.c.l.b16 %v2015
        %v2119 = vunpack.c.l.b16 %v2016
        %v2120 = vunpack.c.l.b16 %v2017
        %v2121 = vunpack.c.l.b16 %v2018
        %v2122 = vpack.c.b16 %v2075, %v2074
        %v2123 = vpack.c.b16 %v2077, %v2076
        %v2124 = vpack.c.b16 %v2079, %v2078
        %v2125 = vpack.c.b16 %v2081, %v2080
        %v2126 = vpack.c.b16 %v2083, %v2082
        %v2127 = vpack.c.b16 %v2085, %v2084
        %v2128 = vpack.c.b16 %v2087, %v2086
        %v2129 = vpack.c.b16 %v2089, %v2088
        %v2130 = vpack.c.b16 %v2091, %v2090
        %v2131 = vpack.c.b16 %v2093, %v2092
        %v2132 = vpack.c.b16 %v2095, %v2094
        %v2133 = vpack.c.b16 %v2097, %v2096
        %v2134 = vpack.c.b16 %v2099, %v2098
        %v2135 = vpack.c.b16 %v2101, %v2100
        %v2136 = vpack.c.b16 %v2103, %v2102
        %v2137 = vpack.c.b16 %v2105, %v2104
        %v2138 = vpack.c.b16 %v2107, %v2106
        %v2139 = vpack.c.b16 %v2109, %v2108
        %v2140 = vpack.c.b16 %v2111, %v2110
        %v2141 = vpack.c.b16 %v2113, %v2112
        %v2142 = vpack.c.b16 %v2115, %v2114
        %v2143 = vpack.c.b16 %v2117, %v2116
        %v2144 = vpack.c.b16 %v2119, %v2118
        %v2145 = vpack.c.b16 %v2121, %v2120
        %2170 = vmatprep.subr.bf16.mxu0 0
        %2171 = vmatpush1.bf16.msra.mxu0 %v2122
        %2172 = vmatprep.subr.bf16.mxu0 0
        %2173 = vmatpush1.bf16.msra.mxu0 %v2123
        %2174 = vmatprep.subr.bf16.mxu0 0
        %2175 = vmatpush1.bf16.msra.mxu0 %v2124
        %2176 = vmatprep.subr.bf16.mxu0 0
        %2177 = vmatpush1.bf16.msra.mxu0 %v2125
        %2178 = vmatprep.subr.bf16.mxu0 0
        %2179 = vmatpush1.bf16.msra.mxu0 %v2126
        %2180 = vmatprep.subr.bf16.mxu0 0
        %2181 = vmatpush1.bf16.msra.mxu0 %v2127
        %2182 = vmatprep.subr.bf16.mxu0 0
        %2183 = vmatpush1.bf16.msra.mxu0 %v2128
        %2184 = vmatprep.subr.bf16.mxu0 0
        %2185 = vmatpush1.bf16.msra.mxu0 %v2129
        %2186 = vmatprep.subr.bf16.mxu0 0
        %2187 = vmatpush1.bf16.msra.mxu0 %v2130
        %2188 = vmatprep.subr.bf16.mxu0 0
        %2189 = vmatpush1.bf16.msra.mxu0 %v2131
        %2190 = vmatprep.subr.bf16.mxu0 0
        %2191 = vmatpush1.bf16.msra.mxu0 %v2132
        %2192 = vmatprep.subr.bf16.mxu0 0
        %2193 = vmatpush1.bf16.msra.mxu0 %v2133
        %2194 = vmatprep.subr.bf16.mxu0 0
        %2195 = vmatpush1.bf16.msra.mxu0 %v2134
        %2196 = vmatprep.subr.bf16.mxu0 0
        %2197 = vmatpush1.bf16.msra.mxu0 %v2135
        %2198 = vmatprep.subr.bf16.mxu0 0
        %2199 = vmatpush1.bf16.msra.mxu0 %v2136
        %2200 = vmatprep.subr.bf16.mxu0 0
        %2201 = vmatpush1.bf16.msra.mxu0 %v2137
        %2202 = vmatprep.mubr.bf16.mxu0 %v1290
        %2203 = vmatmul.mubr.bf16.gmra.mrb[0].mxu0 %v1273
        %v2204 = vpop.f32.mrb[0].mxu0
        %v2205 = vadd.f32 %v2024, %v2204
        %v2206 = vpop.f32.mrb[0].mxu0
        %v2207 = vpop.f32.mrb[0].mxu0
        %v2208 = vadd.f32 %v2024, %v2207
        %v2209 = vpop.f32.mrb[0].mxu0
        %2210 = vmatprep.mubr.bf16.mxu0 %v1331
        %2211 = vmatmul.mubr.bf16.gmra.mrb[0].mxu0 %v1314
        %v2212 = vpop.f32.mrb[0].mxu0
        %v2213 = vadd.f32 %v2024, %v2212
        %v2214 = vpop.f32.mrb[0].mxu0
        %v2215 = vpop.f32.mrb[0].mxu0
        %v2216 = vadd.f32 %v2024, %v2215
        %v2217 = vpop.f32.mrb[0].mxu0
        %2218 = vmatprep.mubr.bf16.mxu0 %v1372
        %2219 = vmatmul.mubr.bf16.gmra.mrb[0].mxu0 %v1355
        %v2220 = vpop.f32.mrb[0].mxu0
        %v2221 = vadd.f32 %v2024, %v2220
        %v2222 = vpop.f32.mrb[0].mxu0
        %v2223 = vpop.f32.mrb[0].mxu0
        %v2224 = vadd.f32 %v2024, %v2223
        %v2225 = vpop.f32.mrb[0].mxu0
        %2226 = vmatprep.mubr.bf16.mxu0 %v1413
        %2227 = vmatmul.mubr.bf16.gmra.mrb[0].mxu0 %v1396
        %v2228 = vpop.f32.mrb[0].mxu0
        %v2229 = vadd.f32 %v2024, %v2228
        %v2230 = vpop.f32.mrb[0].mxu0
        %v2231 = vpop.f32.mrb[0].mxu0
        %v2232 = vadd.f32 %v2024, %v2231
        %v2233 = vpop.f32.mrb[0].mxu0
        %2234 = vmatprep.mubr.bf16.mxu0 %v1454
        %2235 = vmatmul.mubr.bf16.gmra.mrb[0].mxu0 %v1437
        %v2236 = vpop.f32.mrb[0].mxu0
        %v2237 = vadd.f32 %v2024, %v2236
        %v2238 = vpop.f32.mrb[0].mxu0
        %v2239 = vpop.f32.mrb[0].mxu0
        %v2240 = vadd.f32 %v2024, %v2239
        %v2241 = vpop.f32.mrb[0].mxu0
        %2242 = vmatprep.mubr.bf16.mxu0 %v1495
        %2243 = vmatmul.mubr.bf16.gmra.mrb[0].mxu0 %v1478
        %v2244 = vpop.f32.mrb[0].mxu0
        %v2245 = vadd.f32 %v2024, %v2244
        %v2246 = vpop.f32.mrb[0].mxu0
        %v2247 = vpop.f32.mrb[0].mxu0
        %v2248 = vadd.f32 %v2024, %v2247
        %v2249 = vpop.f32.mrb[0].mxu0
        %2250 = vmatprep.mubr.bf16.mxu0 %v1536
        %2251 = vmatmul.mubr.bf16.gmra.mrb[0].mxu0 %v1519
        %v2252 = vpop.f32.mrb[0].mxu0
        %v2253 = vadd.f32 %v2024, %v2252
        %v2254 = vpop.f32.mrb[0].mxu0
        %v2255 = vpop.f32.mrb[0].mxu0
        %v2256 = vadd.f32 %v2024, %v2255
        %v2257 = vpop.f32.mrb[0].mxu0
        %2258 = vmatprep.mubr.bf16.mxu0 %v1577
        %2259 = vmatmul.mubr.bf16.gmra.mrb[0].mxu0 %v1560
        %v2260 = vpop.f32.mrb[0].mxu0
        %v2261 = vadd.f32 %v2024, %v2260
        %v2262 = vpop.f32.mrb[0].mxu0
        %v2263 = vpop.f32.mrb[0].mxu0
        %v2264 = vadd.f32 %v2024, %v2263
        %v2265 = vpop.f32.mrb[0].mxu0
        %2266 = vmatprep.mubr.bf16.mxu0 %v1618
        %2267 = vmatmul.mubr.bf16.gmra.mrb[0].mxu0 %v1601
        %v2268 = vpop.f32.mrb[0].mxu0
        %v2269 = vadd.f32 %v2024, %v2268
        %v2270 = vpop.f32.mrb[0].mxu0
        %v2271 = vpop.f32.mrb[0].mxu0
        %v2272 = vadd.f32 %v2024, %v2271
        %v2273 = vpop.f32.mrb[0].mxu0
        %2274 = vmatprep.mubr.bf16.mxu0 %v1659
        %2275 = vmatmul.mubr.bf16.gmra.mrb[0].mxu0 %v1642
        %v2276 = vpop.f32.mrb[0].mxu0
        %v2277 = vadd.f32 %v2024, %v2276
        %v2278 = vpop.f32.mrb[0].mxu0
        %v2279 = vpop.f32.mrb[0].mxu0
        %v2280 = vadd.f32 %v2024, %v2279
        %v2281 = vpop.f32.mrb[0].mxu0
        %2282 = vmatprep.mubr.bf16.mxu0 %v1700
        %2283 = vmatmul.mubr.bf16.gmra.mrb[0].mxu0 %v1683
        %v2284 = vpop.f32.mrb[0].mxu0
        %v2285 = vadd.f32 %v2024, %v2284
        %v2286 = vpop.f32.mrb[0].mxu0
        %v2287 = vpop.f32.mrb[0].mxu0
        %v2288 = vadd.f32 %v2024, %v2287
        %v2289 = vpop.f32.mrb[0].mxu0
        %2290 = vmatprep.mubr.bf16.mxu0 %v1741
        %2291 = vmatmul.mubr.bf16.gmra.mrb[0].mxu0 %v1724
        %v2292 = vpop.f32.mrb[0].mxu0
        %v2293 = vadd.f32 %v2024, %v2292
        %v2294 = vpop.f32.mrb[0].mxu0
        %v2295 = vpop.f32.mrb[0].mxu0
        %v2296 = vadd.f32 %v2024, %v2295
        %v2297 = vpop.f32.mrb[0].mxu0
        %2298 = vmatprep.mubr.bf16.mxu0 %v1782
        %2299 = vmatmul.mubr.bf16.gmra.mrb[0].mxu0 %v1765
        %v2300 = vpop.f32.mrb[0].mxu0
        %v2301 = vadd.f32 %v2024, %v2300
        %v2302 = vpop.f32.mrb[0].mxu0
        %v2303 = vpop.f32.mrb[0].mxu0
        %v2304 = vadd.f32 %v2024, %v2303
        %v2305 = vpop.f32.mrb[0].mxu0
        %2306 = vmatprep.mubr.bf16.mxu0 %v1823
        %2307 = vmatmul.mubr.bf16.gmra.mrb[0].mxu0 %v1806
        %v2308 = vpop.f32.mrb[0].mxu0
        %v2309 = vadd.f32 %v2024, %v2308
        %v2310 = vpop.f32.mrb[0].mxu0
        %v2311 = vpop.f32.mrb[0].mxu0
        %v2312 = vadd.f32 %v2024, %v2311
        %v2313 = vpop.f32.mrb[0].mxu0
        %2314 = vmatprep.mubr.bf16.mxu0 %v1864
        %2315 = vmatmul.mubr.bf16.gmra.mrb[0].mxu0 %v1847
        %v2316 = vpop.f32.mrb[0].mxu0
        %v2317 = vadd.f32 %v2024, %v2316
        %v2318 = vpop.f32.mrb[0].mxu0
        %v2319 = vpop.f32.mrb[0].mxu0
        %v2320 = vadd.f32 %v2024, %v2319
        %v2321 = vpop.f32.mrb[0].mxu0
        %2322 = vmatprep.mubr.bf16.mxu0 %v1905
        %2323 = vmatmul.mubr.bf16.gmra.mrb[0].mxu0 %v1888
        %v2324 = vpop.f32.mrb[0].mxu0
        %v2325 = vadd.f32 %v2024, %v2324
        %v2326 = vpop.f32.mrb[0].mxu0
        %v2327 = vpop.f32.mrb[0].mxu0
        %v2328 = vadd.f32 %v2024, %v2327
        %v2329 = vpop.f32.mrb[0].mxu0
        %2330 = vdwg.mxu0
        %2331 = vmatprep.subr.bf16.mxu0 0
        %2332 = vmatpush1.bf16.msra.mxu0 %v2138
        %2333 = vmatprep.subr.bf16.mxu0 0
        %2334 = vmatpush1.bf16.msra.mxu0 %v2139
        %2335 = vmatprep.subr.bf16.mxu0 0
        %2336 = vmatpush1.bf16.msra.mxu0 %v2140
        %2337 = vmatprep.subr.bf16.mxu0 0
        %2338 = vmatpush1.bf16.msra.mxu0 %v2141
        %2339 = vmatprep.subr.bf16.mxu0 0
        %2340 = vmatpush1.bf16.msra.mxu0 %v2142
        %2341 = vmatprep.subr.bf16.mxu0 0
        %2342 = vmatpush1.bf16.msra.mxu0 %v2143
        %2343 = vmatprep.subr.bf16.mxu0 0
        %2344 = vmatpush1.bf16.msra.mxu0 %v2144
        %2345 = vmatprep.subr.bf16.mxu0 0
        %2346 = vmatpush1.bf16.msra.mxu0 %v2145
        %2347 = vmatprep.subr.bf16.mxu0 0
        %2348 = vmatpush1.bf16.msra.mxu0 0
        %2349 = vmatprep.subr.bf16.mxu0 0
        %2350 = vmatpush1.bf16.msra.mxu0 0
        %2351 = vmatprep.subr.bf16.mxu0 0
        %2352 = vmatpush1.bf16.msra.mxu0 0
        %2353 = vmatprep.subr.bf16.mxu0 0
        %2354 = vmatpush1.bf16.msra.mxu0 0
        %2355 = vmatprep.subr.bf16.mxu0 0
        %2356 = vmatpush1.bf16.msra.mxu0 0
        %2357 = vmatprep.subr.bf16.mxu0 0
        %2358 = vmatpush1.bf16.msra.mxu0 0
        %2359 = vmatprep.subr.bf16.mxu0 0
        %2360 = vmatpush1.bf16.msra.mxu0 0
        %2361 = vmatprep.subr.bf16.mxu0 0
        %2362 = vmatpush1.bf16.msra.mxu0 0
        %2363 = vmatprep.mubr.bf16.mxu0 0
        %2364 = vmatmul.mubr.bf16.gmra.mrb[0].mxu0 %v1307
        %v2365 = vpop.f32.mrb[0].mxu0
        %v2366 = vadd.f32 %v2205, %v2365
        %v2367 = vpop.f32.mrb[0].mxu0
        %v2368 = vpop.f32.mrb[0].mxu0
        %v2369 = vadd.f32 %v2208, %v2368
        %v2370 = vpop.f32.mrb[0].mxu0
        %2371 = vmatprep.mubr.bf16.mxu0 0
        %2372 = vmatmul.mubr.bf16.gmra.mrb[0].mxu0 %v1348
        %v2373 = vpop.f32.mrb[0].mxu0
        %v2374 = vadd.f32 %v2213, %v2373
        %v2375 = vpop.f32.mrb[0].mxu0
        %v2376 = vpop.f32.mrb[0].mxu0
        %v2377 = vadd.f32 %v2216, %v2376
        %v2378 = vpop.f32.mrb[0].mxu0
        %2379 = vmatprep.mubr.bf16.mxu0 0
        %2380 = vmatmul.mubr.bf16.gmra.mrb[0].mxu0 %v1389
        %v2381 = vpop.f32.mrb[0].mxu0
        %v2382 = vadd.f32 %v2221, %v2381
        %v2383 = vpop.f32.mrb[0].mxu0
        %v2384 = vpop.f32.mrb[0].mxu0
        %v2385 = vadd.f32 %v2224, %v2384
        %v2386 = vpop.f32.mrb[0].mxu0
        %2387 = vmatprep.mubr.bf16.mxu0 0
        %2388 = vmatmul.mubr.bf16.gmra.mrb[0].mxu0 %v1430
        %v2389 = vpop.f32.mrb[0].mxu0
        %v2390 = vadd.f32 %v2229, %v2389
        %v2391 = vpop.f32.mrb[0].mxu0
        %v2392 = vpop.f32.mrb[0].mxu0
        %v2393 = vadd.f32 %v2232, %v2392
        %v2394 = vpop.f32.mrb[0].mxu0
        %2395 = vmatprep.mubr.bf16.mxu0 0
        %2396 = vmatmul.mubr.bf16.gmra.mrb[0].mxu0 %v1471
        %v2397 = vpop.f32.mrb[0].mxu0
        %v2398 = vadd.f32 %v2237, %v2397
        %v2399 = vpop.f32.mrb[0].mxu0
        %v2400 = vpop.f32.mrb[0].mxu0
        %v2401 = vadd.f32 %v2240, %v2400
        %v2402 = vpop.f32.mrb[0].mxu0
        %2403 = vmatprep.mubr.bf16.mxu0 0
        %2404 = vmatmul.mubr.bf16.gmra.mrb[0].mxu0 %v1512
        %v2405 = vpop.f32.mrb[0].mxu0
        %v2406 = vadd.f32 %v2245, %v2405
        %v2407 = vpop.f32.mrb[0].mxu0
        %v2408 = vpop.f32.mrb[0].mxu0
        %v2409 = vadd.f32 %v2248, %v2408
        %v2410 = vpop.f32.mrb[0].mxu0
        %2411 = vmatprep.mubr.bf16.mxu0 0
        %2412 = vmatmul.mubr.bf16.gmra.mrb[0].mxu0 %v1553
        %v2413 = vpop.f32.mrb[0].mxu0
        %v2414 = vadd.f32 %v2253, %v2413
        %v2415 = vpop.f32.mrb[0].mxu0
        %v2416 = vpop.f32.mrb[0].mxu0
        %v2417 = vadd.f32 %v2256, %v2416
        %v2418 = vpop.f32.mrb[0].mxu0
        %2419 = vmatprep.mubr.bf16.mxu0 0
        %2420 = vmatmul.mubr.bf16.gmra.mrb[0].mxu0 %v1594
        %v2421 = vpop.f32.mrb[0].mxu0
        %v2422 = vadd.f32 %v2261, %v2421
        %v2423 = vpop.f32.mrb[0].mxu0
        %v2424 = vpop.f32.mrb[0].mxu0
        %v2425 = vadd.f32 %v2264, %v2424
        %v2426 = vpop.f32.mrb[0].mxu0
        %2427 = vmatprep.mubr.bf16.mxu0 0
        %2428 = vmatmul.mubr.bf16.gmra.mrb[0].mxu0 %v1635
        %v2429 = vpop.f32.mrb[0].mxu0
        %v2430 = vadd.f32 %v2269, %v2429
        %v2431 = vpop.f32.mrb[0].mxu0
        %v2432 = vpop.f32.mrb[0].mxu0
        %v2433 = vadd.f32 %v2272, %v2432
        %v2434 = vpop.f32.mrb[0].mxu0
        %2435 = vmatprep.mubr.bf16.mxu0 0
        %2436 = vmatmul.mubr.bf16.gmra.mrb[0].mxu0 %v1676
        %v2437 = vpop.f32.mrb[0].mxu0
        %v2438 = vadd.f32 %v2277, %v2437
        %v2439 = vpop.f32.mrb[0].mxu0
        %v2440 = vpop.f32.mrb[0].mxu0
        %v2441 = vadd.f32 %v2280, %v2440
        %v2442 = vpop.f32.mrb[0].mxu0
        %2443 = vmatprep.mubr.bf16.mxu0 0
        %2444 = vmatmul.mubr.bf16.gmra.mrb[0].mxu0 %v1717
        %v2445 = vpop.f32.mrb[0].mxu0
        %v2446 = vadd.f32 %v2285, %v2445
        %v2447 = vpop.f32.mrb[0].mxu0
        %v2448 = vpop.f32.mrb[0].mxu0
        %v2449 = vadd.f32 %v2288, %v2448
        %v2450 = vpop.f32.mrb[0].mxu0
        %2451 = vmatprep.mubr.bf16.mxu0 0
        %2452 = vmatmul.mubr.bf16.gmra.mrb[0].mxu0 %v1758
        %v2453 = vpop.f32.mrb[0].mxu0
        %v2454 = vadd.f32 %v2293, %v2453
        %v2455 = vpop.f32.mrb[0].mxu0
        %v2456 = vpop.f32.mrb[0].mxu0
        %v2457 = vadd.f32 %v2296, %v2456
        %v2458 = vpop.f32.mrb[0].mxu0
        %2459 = vmatprep.mubr.bf16.mxu0 0
        %2460 = vmatmul.mubr.bf16.gmra.mrb[0].mxu0 %v1799
        %v2461 = vpop.f32.mrb[0].mxu0
        %v2462 = vadd.f32 %v2301, %v2461
        %v2463 = vpop.f32.mrb[0].mxu0
        %v2464 = vpop.f32.mrb[0].mxu0
        %v2465 = vadd.f32 %v2304, %v2464
        %v2466 = vpop.f32.mrb[0].mxu0
        %2467 = vmatprep.mubr.bf16.mxu0 0
        %2468 = vmatmul.mubr.bf16.gmra.mrb[0].mxu0 %v1840
        %v2469 = vpop.f32.mrb[0].mxu0
        %v2470 = vadd.f32 %v2309, %v2469
        %v2471 = vpop.f32.mrb[0].mxu0
        %v2472 = vpop.f32.mrb[0].mxu0
        %v2473 = vadd.f32 %v2312, %v2472
        %v2474 = vpop.f32.mrb[0].mxu0
        %2475 = vmatprep.mubr.bf16.mxu0 0
        %2476 = vmatmul.mubr.bf16.gmra.mrb[0].mxu0 %v1881
        %v2477 = vpop.f32.mrb[0].mxu0
        %v2478 = vadd.f32 %v2317, %v2477
        %v2479 = vpop.f32.mrb[0].mxu0
        %v2480 = vpop.f32.mrb[0].mxu0
        %v2481 = vadd.f32 %v2320, %v2480
        %v2482 = vpop.f32.mrb[0].mxu0
        %2483 = vmatprep.mubr.bf16.mxu0 0
        %2484 = vmatmul.mubr.bf16.gmra.mrb[0].mxu0 %v1922
        %v2485 = vpop.f32.mrb[0].mxu0
        %v2486 = vadd.f32 %v2325, %v2485
        %v2487 = vpop.f32.mrb[0].mxu0
        %v2488 = vpop.f32.mrb[0].mxu0
        %v2489 = vadd.f32 %v2328, %v2488
        %v2490 = vpop.f32.mrb[0].mxu0
        %2491 = vdwg.mxu0
        %2492 = vst [vmem:[#allocation5] sm:$0xff] %v2366
        %2493 = vst [vmem:[#allocation5 + $0x8] sm:$0xff] %v2369
        %2494 = vst [vmem:[#allocation5 + $0x10] sm:$0xff] %v2374
        %2495 = vst [vmem:[#allocation5 + $0x18] sm:$0xff] %v2377
        %2496 = vst [vmem:[#allocation5 + $0x20] sm:$0xff] %v2382
        %2497 = vst [vmem:[#allocation5 + $0x28] sm:$0xff] %v2385
        %2498 = vst [vmem:[#allocation5 + $0x30] sm:$0xff] %v2390
        %2499 = vst [vmem:[#allocation5 + $0x38] sm:$0xff] %v2393
        %2500 = vst [vmem:[#allocation5 + $0x40] sm:$0xff] %v2398
        %2501 = vst [vmem:[#allocation5 + $0x48] sm:$0xff] %v2401
        %2502 = vst [vmem:[#allocation5 + $0x50] sm:$0xff] %v2406
        %2503 = vst [vmem:[#allocation5 + $0x58] sm:$0xff] %v2409
        %2504 = vst [vmem:[#allocation5 + $0x60] sm:$0xff] %v2414
        %2505 = vst [vmem:[#allocation5 + $0x68] sm:$0xff] %v2417
        %2506 = vst [vmem:[#allocation5 + $0x70] sm:$0xff] %v2422
        %2507 = vst [vmem:[#allocation5 + $0x78] sm:$0xff] %v2425
        %2508 = vst [vmem:[#allocation5 + $0x80] sm:$0xff] %v2430
        %2509 = vst [vmem:[#allocation5 + $0x88] sm:$0xff] %v2433
        %2510 = vst [vmem:[#allocation5 + $0x90] sm:$0xff] %v2438
        %2511 = vst [vmem:[#allocation5 + $0x98] sm:$0xff] %v2441
        %2512 = vst [vmem:[#allocation5 + $0xa0] sm:$0xff] %v2446
        %2513 = vst [vmem:[#allocation5 + $0xa8] sm:$0xff] %v2449
        %2514 = vst [vmem:[#allocation5 + $0xb0] sm:$0xff] %v2454
        %2515 = vst [vmem:[#allocation5 + $0xb8] sm:$0xff] %v2457
        %2516 = vst [vmem:[#allocation5 + $0xc0] sm:$0xff] %v2462
        %2517 = vst [vmem:[#allocation5 + $0xc8] sm:$0xff] %v2465
        %2518 = vst [vmem:[#allocation5 + $0xd0] sm:$0xff] %v2470
        %2519 = vst [vmem:[#allocation5 + $0xd8] sm:$0xff] %v2473
        %2520 = vst [vmem:[#allocation5 + $0xe0] sm:$0xff] %v2478
        %2521 = vst [vmem:[#allocation5 + $0xe8] sm:$0xff] %v2481
        %2522 = vst [vmem:[#allocation5 + $0xf0] sm:$0xff] %v2486
        %2523 = vst [vmem:[#allocation5 + $0xf8] sm:$0xff] %v2489
        %v2524 = vld [vmem:[#allocation5] sm:$0xff]
        %v2525 = vld [vmem:[#allocation5 + $0x8] sm:$0xff]
        %v2526 = vld [vmem:[#allocation5 + $0x10] sm:$0xff]
        %v2527 = vld [vmem:[#allocation5 + $0x18] sm:$0xff]
        %v2528 = vld [vmem:[#allocation5 + $0x20] sm:$0xff]
        %v2529 = vld [vmem:[#allocation5 + $0x28] sm:$0xff]
        %v2530 = vld [vmem:[#allocation5 + $0x30] sm:$0xff]
        %v2531 = vld [vmem:[#allocation5 + $0x38] sm:$0xff]
        %v2532 = vld [vmem:[#allocation5 + $0x40] sm:$0xff]
        %v2533 = vld [vmem:[#allocation5 + $0x48] sm:$0xff]
        %v2534 = vld [vmem:[#allocation5 + $0x50] sm:$0xff]
        %v2535 = vld [vmem:[#allocation5 + $0x58] sm:$0xff]
        %v2536 = vld [vmem:[#allocation5 + $0x60] sm:$0xff]
        %v2537 = vld [vmem:[#allocation5 + $0x68] sm:$0xff]
        %v2538 = vld [vmem:[#allocation5 + $0x70] sm:$0xff]
        %v2539 = vld [vmem:[#allocation5 + $0x78] sm:$0xff]
        %v2540 = vld [vmem:[#allocation5 + $0x80] sm:$0xff]
        %v2541 = vld [vmem:[#allocation5 + $0x88] sm:$0xff]
        %v2542 = vld [vmem:[#allocation5 + $0x90] sm:$0xff]
        %v2543 = vld [vmem:[#allocation5 + $0x98] sm:$0xff]
        %v2544 = vld [vmem:[#allocation5 + $0xa0] sm:$0xff]
        %v2545 = vld [vmem:[#allocation5 + $0xa8] sm:$0xff]
        %v2546 = vld [vmem:[#allocation5 + $0xb0] sm:$0xff]
        %v2547 = vld [vmem:[#allocation5 + $0xb8] sm:$0xff]
        %v2548 = vld [vmem:[#allocation5 + $0xc0] sm:$0xff]
        %v2549 = vld [vmem:[#allocation5 + $0xc8] sm:$0xff]
        %v2550 = vld [vmem:[#allocation5 + $0xd0] sm:$0xff]
        %v2551 = vld [vmem:[#allocation5 + $0xd8] sm:$0xff]
        %v2552 = vld [vmem:[#allocation5 + $0xe0] sm:$0xff]
        %v2553 = vld [vmem:[#allocation5 + $0xe8] sm:$0xff]
        %v2554 = vld [vmem:[#allocation5 + $0xf0] sm:$0xff]
        %v2555 = vld [vmem:[#allocation5 + $0xf8] sm:$0xff]
        %v2556 = vrot.slane %v1146, 3
        %v2557 = vrot.slane %v1148, 4
        %v2558 = vor.u32 %v2556, %v2557
        %v2559 = vrot.slane %v1157, 3
        %v2560 = vrot.slane %v1153, 4
        %v2561 = vor.u32 %v2559, %v2560
        %v2562 = vsel %vm1266, %v2558, %v2561
        %v2564 = vshrl.u32 %v1156, 16
        %v2566 = vrot.slane %v2564, 3
        %v2567 = vshll.u32 %v1156, 16
        %v2569 = vrot.slane %v2567, 4
        %v2570 = vor.u32 %v2566, %v2569
        %v2572 = vshrl.u32 %v1159, 16
        %v2574 = vrot.slane %v2572, 3
        %v2575 = vshll.u32 %v1159, 16
        %v2577 = vrot.slane %v2575, 4
        %v2578 = vor.u32 %v2574, %v2577
        %v2579 = vsel %vm1266, %v2570, %v2578
        %v2581 = vshrl.u32 %v1262, 16
        %v2583 = vrot.slane %v2581, 3
        %v2584 = vshll.u32 %v1262, 16
        %v2586 = vrot.slane %v2584, 4
        %v2587 = vor.u32 %v2583, %v2586
        %v2589 = vshrl.u32 %v1261, 16
        %v2591 = vrot.slane %v2589, 3
        %v2592 = vshll.u32 %v1261, 16
        %v2594 = vrot.slane %v2592, 4
        %v2595 = vor.u32 %v2591, %v2594
        %v2596 = vsel %vm1266, %v2587, %v2595
        %v2600 = vld [vmem:[#allocation9 + $0xc0] sm:$0xf]
        %v2601 = vld [vmem:[#allocation9 + $0xc4] sm:$0xf]
        %v2602 = vld [vmem:[#allocation9 + $0xc8] sm:$0xf]
        %v2603 = vld [vmem:[#allocation9 + $0xcc] sm:$0xf]
        %v2604 = vld [vmem:[#allocation9 + $0xd0] sm:$0xf]
        %v2605 = vld [vmem:[#allocation9 + $0xd4] sm:$0xf]
        %v2606 = vld [vmem:[#allocation9 + $0xd8] sm:$0xf]
        %v2607 = vld [vmem:[#allocation9 + $0xdc] sm:$0xf]
        %v2608 = vld [vmem:[#allocation9 + $0xe0] sm:$0xf]
        %v2609 = vld [vmem:[#allocation9 + $0xe4] sm:$0xf]
        %v2610 = vld [vmem:[#allocation9 + $0xe8] sm:$0xf]
        %v2611 = vld [vmem:[#allocation9 + $0xec] sm:$0xf]
        %v2612 = vld [vmem:[#allocation9 + $0xf0] sm:$0xf]
        %v2613 = vld [vmem:[#allocation9 + $0xf4] sm:$0xf]
        %v2614 = vld [vmem:[#allocation9 + $0xf8] sm:$0xf]
        %v2615 = vld [vmem:[#allocation9 + $0xfc] sm:$0xf]
        %v2616 = vld [vmem:[#allocation9 + $0x100] sm:$0xf]
        %v2617 = vld [vmem:[#allocation9 + $0x104] sm:$0xf]
        %v2618 = vld [vmem:[#allocation9 + $0x108] sm:$0xf]
        %v2619 = vld [vmem:[#allocation9 + $0x10c] sm:$0xf]
        %v2620 = vld [vmem:[#allocation9 + $0x110] sm:$0xf]
        %v2621 = vld [vmem:[#allocation9 + $0x114] sm:$0xf]
        %v2622 = vld [vmem:[#allocation9 + $0x118] sm:$0xf]
        %v2623 = vld [vmem:[#allocation9 + $0x11c] sm:$0xf]
        %v2624 = vld [vmem:[#allocation9 + $0x120] sm:$0xf]
        %v2625 = vld [vmem:[#allocation9 + $0x124] sm:$0xf]
        %v2626 = vld [vmem:[#allocation9 + $0x128] sm:$0xf]
        %v2627 = vld [vmem:[#allocation9 + $0x12c] sm:$0xf]
        %v2628 = vld [vmem:[#allocation9 + $0x130] sm:$0xf]
        %v2629 = vld [vmem:[#allocation9 + $0x134] sm:$0xf]
        %v2630 = vld [vmem:[#allocation9 + $0x138] sm:$0xf]
        %v2631 = vld [vmem:[#allocation9 + $0x13c] sm:$0xf]
        %v2632 = vld [vmem:[#allocation9 + $0x140] sm:$0xf]
        %v2633 = vld [vmem:[#allocation9 + $0x144] sm:$0xf]
        %v2634 = vld [vmem:[#allocation9 + $0x148] sm:$0xf]
        %v2635 = vld [vmem:[#allocation9 + $0x14c] sm:$0xf]
        %v2636 = vld [vmem:[#allocation9 + $0x150] sm:$0xf]
        %v2637 = vld [vmem:[#allocation9 + $0x154] sm:$0xf]
        %v2638 = vld [vmem:[#allocation9 + $0x158] sm:$0xf]
        %v2639 = vld [vmem:[#allocation9 + $0x15c] sm:$0xf]
        %v2640 = vld [vmem:[#allocation9 + $0x160] sm:$0xf]
        %v2641 = vld [vmem:[#allocation9 + $0x164] sm:$0xf]
        %v2642 = vld [vmem:[#allocation9 + $0x168] sm:$0xf]
        %v2643 = vld [vmem:[#allocation9 + $0x16c] sm:$0xf]
        %v2644 = vld [vmem:[#allocation9 + $0x170] sm:$0xf]
        %v2645 = vld [vmem:[#allocation9 + $0x174] sm:$0xf]
        %v2646 = vld [vmem:[#allocation9 + $0x178] sm:$0xf]
        %v2647 = vld [vmem:[#allocation9 + $0x17c] sm:$0xf]
        %v2696 = vunpack.c.l.b16 %v2600
        %v2697 = vunpack.c.l.b16 %v2601
        %v2698 = vunpack.c.l.b16 %v2602
        %v2699 = vunpack.c.l.b16 %v2603
        %v2700 = vunpack.c.l.b16 %v2604
        %v2701 = vunpack.c.l.b16 %v2605
        %v2702 = vunpack.c.l.b16 %v2606
        %v2703 = vunpack.c.l.b16 %v2607
        %v2704 = vunpack.c.l.b16 %v2608
        %v2705 = vunpack.c.l.b16 %v2609
        %v2706 = vunpack.c.l.b16 %v2610
        %v2707 = vunpack.c.l.b16 %v2611
        %v2708 = vunpack.c.l.b16 %v2612
        %v2709 = vunpack.c.l.b16 %v2613
        %v2710 = vunpack.c.l.b16 %v2614
        %v2711 = vunpack.c.l.b16 %v2615
        %v2712 = vunpack.c.l.b16 %v2616
        %v2713 = vunpack.c.l.b16 %v2617
        %v2714 = vunpack.c.l.b16 %v2618
        %v2715 = vunpack.c.l.b16 %v2619
        %v2716 = vunpack.c.l.b16 %v2620
        %v2717 = vunpack.c.l.b16 %v2621
        %v2718 = vunpack.c.l.b16 %v2622
        %v2719 = vunpack.c.l.b16 %v2623
        %v2720 = vunpack.c.l.b16 %v2624
        %v2721 = vunpack.c.l.b16 %v2625
        %v2722 = vunpack.c.l.b16 %v2626
        %v2723 = vunpack.c.l.b16 %v2627
        %v2724 = vunpack.c.l.b16 %v2628
        %v2725 = vunpack.c.l.b16 %v2629
        %v2726 = vunpack.c.l.b16 %v2630
        %v2727 = vunpack.c.l.b16 %v2631
        %v2728 = vunpack.c.l.b16 %v2632
        %v2729 = vunpack.c.l.b16 %v2633
        %v2730 = vunpack.c.l.b16 %v2634
        %v2731 = vunpack.c.l.b16 %v2635
        %v2732 = vunpack.c.l.b16 %v2636
        %v2733 = vunpack.c.l.b16 %v2637
        %v2734 = vunpack.c.l.b16 %v2638
        %v2735 = vunpack.c.l.b16 %v2639
        %v2736 = vunpack.c.l.b16 %v2640
        %v2737 = vunpack.c.l.b16 %v2641
        %v2738 = vunpack.c.l.b16 %v2642
        %v2739 = vunpack.c.l.b16 %v2643
        %v2740 = vunpack.c.l.b16 %v2644
        %v2741 = vunpack.c.l.b16 %v2645
        %v2742 = vunpack.c.l.b16 %v2646
        %v2743 = vunpack.c.l.b16 %v2647
        %v2744 = vpack.c.b16 %v2697, %v2696
        %v2745 = vpack.c.b16 %v2699, %v2698
        %v2746 = vpack.c.b16 %v2701, %v2700
        %v2747 = vpack.c.b16 %v2703, %v2702
        %v2748 = vpack.c.b16 %v2705, %v2704
        %v2749 = vpack.c.b16 %v2707, %v2706
        %v2750 = vpack.c.b16 %v2709, %v2708
        %v2751 = vpack.c.b16 %v2711, %v2710
        %v2752 = vpack.c.b16 %v2713, %v2712
        %v2753 = vpack.c.b16 %v2715, %v2714
        %v2754 = vpack.c.b16 %v2717, %v2716
        %v2755 = vpack.c.b16 %v2719, %v2718
        %v2756 = vpack.c.b16 %v2721, %v2720
        %v2757 = vpack.c.b16 %v2723, %v2722
        %v2758 = vpack.c.b16 %v2725, %v2724
        %v2759 = vpack.c.b16 %v2727, %v2726
        %v2760 = vpack.c.b16 %v2729, %v2728
        %v2761 = vpack.c.b16 %v2731, %v2730
        %v2762 = vpack.c.b16 %v2733, %v2732
        %v2763 = vpack.c.b16 %v2735, %v2734
        %v2764 = vpack.c.b16 %v2737, %v2736
        %v2765 = vpack.c.b16 %v2739, %v2738
        %v2766 = vpack.c.b16 %v2741, %v2740
        %v2767 = vpack.c.b16 %v2743, %v2742
        %2792 = vmatprep.subr.bf16.mxu0 0
        %2793 = vmatpush1.bf16.msra.mxu0 %v2744
        %2794 = vmatprep.subr.bf16.mxu0 0
        %2795 = vmatpush1.bf16.msra.mxu0 %v2745
        %2796 = vmatprep.subr.bf16.mxu0 0
        %2797 = vmatpush1.bf16.msra.mxu0 %v2746
        %2798 = vmatprep.subr.bf16.mxu0 0
        %2799 = vmatpush1.bf16.msra.mxu0 %v2747
        %2800 = vmatprep.subr.bf16.mxu0 0
        %2801 = vmatpush1.bf16.msra.mxu0 %v2748
        %2802 = vmatprep.subr.bf16.mxu0 0
        %2803 = vmatpush1.bf16.msra.mxu0 %v2749
        %2804 = vmatprep.subr.bf16.mxu0 0
        %2805 = vmatpush1.bf16.msra.mxu0 %v2750
        %2806 = vmatprep.subr.bf16.mxu0 0
        %2807 = vmatpush1.bf16.msra.mxu0 %v2751
        %2808 = vmatprep.subr.bf16.mxu0 0
        %2809 = vmatpush1.bf16.msra.mxu0 %v2752
        %2810 = vmatprep.subr.bf16.mxu0 0
        %2811 = vmatpush1.bf16.msra.mxu0 %v2753
        %2812 = vmatprep.subr.bf16.mxu0 0
        %2813 = vmatpush1.bf16.msra.mxu0 %v2754
        %2814 = vmatprep.subr.bf16.mxu0 0
        %2815 = vmatpush1.bf16.msra.mxu0 %v2755
        %2816 = vmatprep.subr.bf16.mxu0 0
        %2817 = vmatpush1.bf16.msra.mxu0 %v2756
        %2818 = vmatprep.subr.bf16.mxu0 0
        %2819 = vmatpush1.bf16.msra.mxu0 %v2757
        %2820 = vmatprep.subr.bf16.mxu0 0
        %2821 = vmatpush1.bf16.msra.mxu0 %v2758
        %2822 = vmatprep.subr.bf16.mxu0 0
        %2823 = vmatpush1.bf16.msra.mxu0 %v2759
        %2824 = vmatprep.mubr.bf16.mxu0 %v1331
        %2825 = vmatmul.mubr.bf16.gmra.mrb[0].mxu0 %v1314
        %v2826 = vpop.f32.mrb[0].mxu0
        %v2827 = vadd.f32 0.0, %v2826
        %v2828 = vpop.f32.mrb[0].mxu0
        %v2829 = vpop.f32.mrb[0].mxu0
        %v2830 = vadd.f32 0.0, %v2829
        %v2831 = vpop.f32.mrb[0].mxu0
        %2832 = vmatprep.mubr.bf16.mxu0 %v1372
        %2833 = vmatmul.mubr.bf16.gmra.mrb[0].mxu0 %v1355
        %v2834 = vpop.f32.mrb[0].mxu0
        %v2835 = vadd.f32 0.0, %v2834
        %v2836 = vpop.f32.mrb[0].mxu0
        %v2837 = vpop.f32.mrb[0].mxu0
        %v2838 = vadd.f32 0.0, %v2837
        %v2839 = vpop.f32.mrb[0].mxu0
        %2840 = vmatprep.mubr.bf16.mxu0 %v1413
        %2841 = vmatmul.mubr.bf16.gmra.mrb[0].mxu0 %v1396
        %v2842 = vpop.f32.mrb[0].mxu0
        %v2843 = vadd.f32 0.0, %v2842
        %v2844 = vpop.f32.mrb[0].mxu0
        %v2845 = vpop.f32.mrb[0].mxu0
        %v2846 = vadd.f32 0.0, %v2845
        %v2847 = vpop.f32.mrb[0].mxu0
        %2848 = vmatprep.mubr.bf16.mxu0 %v1454
        %2849 = vmatmul.mubr.bf16.gmra.mrb[0].mxu0 %v1437
        %v2850 = vpop.f32.mrb[0].mxu0
        %v2851 = vadd.f32 0.0, %v2850
        %v2852 = vpop.f32.mrb[0].mxu0
        %v2853 = vpop.f32.mrb[0].mxu0
        %v2854 = vadd.f32 0.0, %v2853
        %v2855 = vpop.f32.mrb[0].mxu0
        %2856 = vmatprep.mubr.bf16.mxu0 %v1495
        %2857 = vmatmul.mubr.bf16.gmra.mrb[0].mxu0 %v1478
        %v2858 = vpop.f32.mrb[0].mxu0
        %v2859 = vadd.f32 0.0, %v2858
        %v2860 = vpop.f32.mrb[0].mxu0
        %v2861 = vpop.f32.mrb[0].mxu0
        %v2862 = vadd.f32 0.0, %v2861
        %v2863 = vpop.f32.mrb[0].mxu0
        %2864 = vmatprep.mubr.bf16.mxu0 %v1536
        %2865 = vmatmul.mubr.bf16.gmra.mrb[0].mxu0 %v1519
        %v2866 = vpop.f32.mrb[0].mxu0
        %v2867 = vadd.f32 0.0, %v2866
        %v2868 = vpop.f32.mrb[0].mxu0
        %v2869 = vpop.f32.mrb[0].mxu0
        %v2870 = vadd.f32 0.0, %v2869
        %v2871 = vpop.f32.mrb[0].mxu0
        %2872 = vmatprep.mubr.bf16.mxu0 %v1577
        %2873 = vmatmul.mubr.bf16.gmra.mrb[0].mxu0 %v1560
        %v2874 = vpop.f32.mrb[0].mxu0
        %v2875 = vadd.f32 0.0, %v2874
        %v2876 = vpop.f32.mrb[0].mxu0
        %v2877 = vpop.f32.mrb[0].mxu0
        %v2878 = vadd.f32 0.0, %v2877
        %v2879 = vpop.f32.mrb[0].mxu0
        %2880 = vmatprep.mubr.bf16.mxu0 %v1618
        %2881 = vmatmul.mubr.bf16.gmra.mrb[0].mxu0 %v1601
        %v2882 = vpop.f32.mrb[0].mxu0
        %v2883 = vadd.f32 0.0, %v2882
        %v2884 = vpop.f32.mrb[0].mxu0
        %v2885 = vpop.f32.mrb[0].mxu0
        %v2886 = vadd.f32 0.0, %v2885
        %v2887 = vpop.f32.mrb[0].mxu0
        %2888 = vmatprep.mubr.bf16.mxu0 %v1659
        %2889 = vmatmul.mubr.bf16.gmra.mrb[0].mxu0 %v1642
        %v2890 = vpop.f32.mrb[0].mxu0
        %v2891 = vadd.f32 0.0, %v2890
        %v2892 = vpop.f32.mrb[0].mxu0
        %v2893 = vpop.f32.mrb[0].mxu0
        %v2894 = vadd.f32 0.0, %v2893
        %v2895 = vpop.f32.mrb[0].mxu0
        %2896 = vmatprep.mubr.bf16.mxu0 %v1700
        %2897 = vmatmul.mubr.bf16.gmra.mrb[0].mxu0 %v1683
        %v2898 = vpop.f32.mrb[0].mxu0
        %v2899 = vadd.f32 0.0, %v2898
        %v2900 = vpop.f32.mrb[0].mxu0
        %v2901 = vpop.f32.mrb[0].mxu0
        %v2902 = vadd.f32 0.0, %v2901
        %v2903 = vpop.f32.mrb[0].mxu0
        %2904 = vmatprep.mubr.bf16.mxu0 %v1741
        %2905 = vmatmul.mubr.bf16.gmra.mrb[0].mxu0 %v1724
        %v2906 = vpop.f32.mrb[0].mxu0
        %v2907 = vadd.f32 0.0, %v2906
        %v2908 = vpop.f32.mrb[0].mxu0
        %v2909 = vpop.f32.mrb[0].mxu0
        %v2910 = vadd.f32 0.0, %v2909
        %v2911 = vpop.f32.mrb[0].mxu0
        %2912 = vmatprep.mubr.bf16.mxu0 %v1782
        %2913 = vmatmul.mubr.bf16.gmra.mrb[0].mxu0 %v1765
        %v2914 = vpop.f32.mrb[0].mxu0
        %v2915 = vadd.f32 0.0, %v2914
        %v2916 = vpop.f32.mrb[0].mxu0
        %v2917 = vpop.f32.mrb[0].mxu0
        %v2918 = vadd.f32 0.0, %v2917
        %v2919 = vpop.f32.mrb[0].mxu0
        %2920 = vmatprep.mubr.bf16.mxu0 %v1823
        %2921 = vmatmul.mubr.bf16.gmra.mrb[0].mxu0 %v1806
        %v2922 = vpop.f32.mrb[0].mxu0
        %v2923 = vadd.f32 0.0, %v2922
        %v2924 = vpop.f32.mrb[0].mxu0
        %v2925 = vpop.f32.mrb[0].mxu0
        %v2926 = vadd.f32 0.0, %v2925
        %v2927 = vpop.f32.mrb[0].mxu0
        %2928 = vmatprep.mubr.bf16.mxu0 %v1864
        %2929 = vmatmul.mubr.bf16.gmra.mrb[0].mxu0 %v1847
        %v2930 = vpop.f32.mrb[0].mxu0
        %v2931 = vadd.f32 0.0, %v2930
        %v2932 = vpop.f32.mrb[0].mxu0
        %v2933 = vpop.f32.mrb[0].mxu0
        %v2934 = vadd.f32 0.0, %v2933
        %v2935 = vpop.f32.mrb[0].mxu0
        %2936 = vmatprep.mubr.bf16.mxu0 %v1905
        %2937 = vmatmul.mubr.bf16.gmra.mrb[0].mxu0 %v1888
        %v2938 = vpop.f32.mrb[0].mxu0
        %v2939 = vadd.f32 0.0, %v2938
        %v2940 = vpop.f32.mrb[0].mxu0
        %v2941 = vpop.f32.mrb[0].mxu0
        %v2942 = vadd.f32 0.0, %v2941
        %v2943 = vpop.f32.mrb[0].mxu0
        %2944 = vmatprep.mubr.bf16.mxu0 %v2579
        %2945 = vmatmul.mubr.bf16.gmra.mrb[0].mxu0 %v2562
        %v2946 = vpop.f32.mrb[0].mxu0
        %v2947 = vadd.f32 0.0, %v2946
        %v2948 = vpop.f32.mrb[0].mxu0
        %v2949 = vpop.f32.mrb[0].mxu0
        %v2950 = vadd.f32 0.0, %v2949
        %v2951 = vpop.f32.mrb[0].mxu0
        %2952 = vdwg.mxu0
        %2953 = vmatprep.subr.bf16.mxu0 0
        %2954 = vmatpush1.bf16.msra.mxu0 %v2760
        %2955 = vmatprep.subr.bf16.mxu0 0
        %2956 = vmatpush1.bf16.msra.mxu0 %v2761
        %2957 = vmatprep.subr.bf16.mxu0 0
        %2958 = vmatpush1.bf16.msra.mxu0 %v2762
        %2959 = vmatprep.subr.bf16.mxu0 0
        %2960 = vmatpush1.bf16.msra.mxu0 %v2763
        %2961 = vmatprep.subr.bf16.mxu0 0
        %2962 = vmatpush1.bf16.msra.mxu0 %v2764
        %2963 = vmatprep.subr.bf16.mxu0 0
        %2964 = vmatpush1.bf16.msra.mxu0 %v2765
        %2965 = vmatprep.subr.bf16.mxu0 0
        %2966 = vmatpush1.bf16.msra.mxu0 %v2766
        %2967 = vmatprep.subr.bf16.mxu0 0
        %2968 = vmatpush1.bf16.msra.mxu0 %v2767
        %2969 = vmatprep.subr.bf16.mxu0 0
        %2970 = vmatpush1.bf16.msra.mxu0 0
        %2971 = vmatprep.subr.bf16.mxu0 0
        %2972 = vmatpush1.bf16.msra.mxu0 0
        %2973 = vmatprep.subr.bf16.mxu0 0
        %2974 = vmatpush1.bf16.msra.mxu0 0
        %2975 = vmatprep.subr.bf16.mxu0 0
        %2976 = vmatpush1.bf16.msra.mxu0 0
        %2977 = vmatprep.subr.bf16.mxu0 0
        %2978 = vmatpush1.bf16.msra.mxu0 0
        %2979 = vmatprep.subr.bf16.mxu0 0
        %2980 = vmatpush1.bf16.msra.mxu0 0
        %2981 = vmatprep.subr.bf16.mxu0 0
        %2982 = vmatpush1.bf16.msra.mxu0 0
        %2983 = vmatprep.subr.bf16.mxu0 0
        %2984 = vmatpush1.bf16.msra.mxu0 0
        %2985 = vmatprep.mubr.bf16.mxu0 0
        %2986 = vmatmul.mubr.bf16.gmra.mrb[0].mxu0 %v1348
        %v2987 = vpop.f32.mrb[0].mxu0
        %v2988 = vadd.f32 %v2827, %v2987
        %v2989 = vpop.f32.mrb[0].mxu0
        %v2990 = vpop.f32.mrb[0].mxu0
        %v2991 = vadd.f32 %v2830, %v2990
        %v2992 = vpop.f32.mrb[0].mxu0
        %2993 = vmatprep.mubr.bf16.mxu0 0
        %2994 = vmatmul.mubr.bf16.gmra.mrb[0].mxu0 %v1389
        %v2995 = vpop.f32.mrb[0].mxu0
        %v2996 = vadd.f32 %v2835, %v2995
        %v2997 = vpop.f32.mrb[0].mxu0
        %v2998 = vpop.f32.mrb[0].mxu0
        %v2999 = vadd.f32 %v2838, %v2998
        %v3000 = vpop.f32.mrb[0].mxu0
        %3001 = vmatprep.mubr.bf16.mxu0 0
        %3002 = vmatmul.mubr.bf16.gmra.mrb[0].mxu0 %v1430
        %v3003 = vpop.f32.mrb[0].mxu0
        %v3004 = vadd.f32 %v2843, %v3003
        %v3005 = vpop.f32.mrb[0].mxu0
        %v3006 = vpop.f32.mrb[0].mxu0
        %v3007 = vadd.f32 %v2846, %v3006
        %v3008 = vpop.f32.mrb[0].mxu0
        %3009 = vmatprep.mubr.bf16.mxu0 0
        %3010 = vmatmul.mubr.bf16.gmra.mrb[0].mxu0 %v1471
        %v3011 = vpop.f32.mrb[0].mxu0
        %v3012 = vadd.f32 %v2851, %v3011
        %v3013 = vpop.f32.mrb[0].mxu0
        %v3014 = vpop.f32.mrb[0].mxu0
        %v3015 = vadd.f32 %v2854, %v3014
        %v3016 = vpop.f32.mrb[0].mxu0
        %3017 = vmatprep.mubr.bf16.mxu0 0
        %3018 = vmatmul.mubr.bf16.gmra.mrb[0].mxu0 %v1512
        %v3019 = vpop.f32.mrb[0].mxu0
        %v3020 = vadd.f32 %v2859, %v3019
        %v3021 = vpop.f32.mrb[0].mxu0
        %v3022 = vpop.f32.mrb[0].mxu0
        %v3023 = vadd.f32 %v2862, %v3022
        %v3024 = vpop.f32.mrb[0].mxu0
        %3025 = vmatprep.mubr.bf16.mxu0 0
        %3026 = vmatmul.mubr.bf16.gmra.mrb[0].mxu0 %v1553
        %v3027 = vpop.f32.mrb[0].mxu0
        %v3028 = vadd.f32 %v2867, %v3027
        %v3029 = vpop.f32.mrb[0].mxu0
        %v3030 = vpop.f32.mrb[0].mxu0
        %v3031 = vadd.f32 %v2870, %v3030
        %v3032 = vpop.f32.mrb[0].mxu0
        %3033 = vmatprep.mubr.bf16.mxu0 0
        %3034 = vmatmul.mubr.bf16.gmra.mrb[0].mxu0 %v1594
        %v3035 = vpop.f32.mrb[0].mxu0
        %v3036 = vadd.f32 %v2875, %v3035
        %v3037 = vpop.f32.mrb[0].mxu0
        %v3038 = vpop.f32.mrb[0].mxu0
        %v3039 = vadd.f32 %v2878, %v3038
        %v3040 = vpop.f32.mrb[0].mxu0
        %3041 = vmatprep.mubr.bf16.mxu0 0
        %3042 = vmatmul.mubr.bf16.gmra.mrb[0].mxu0 %v1635
        %v3043 = vpop.f32.mrb[0].mxu0
        %v3044 = vadd.f32 %v2883, %v3043
        %v3045 = vpop.f32.mrb[0].mxu0
        %v3046 = vpop.f32.mrb[0].mxu0
        %v3047 = vadd.f32 %v2886, %v3046
        %v3048 = vpop.f32.mrb[0].mxu0
        %3049 = vmatprep.mubr.bf16.mxu0 0
        %3050 = vmatmul.mubr.bf16.gmra.mrb[0].mxu0 %v1676
        %v3051 = vpop.f32.mrb[0].mxu0
        %v3052 = vadd.f32 %v2891, %v3051
        %v3053 = vpop.f32.mrb[0].mxu0
        %v3054 = vpop.f32.mrb[0].mxu0
        %v3055 = vadd.f32 %v2894, %v3054
        %v3056 = vpop.f32.mrb[0].mxu0
        %3057 = vmatprep.mubr.bf16.mxu0 0
        %3058 = vmatmul.mubr.bf16.gmra.mrb[0].mxu0 %v1717
        %v3059 = vpop.f32.mrb[0].mxu0
        %v3060 = vadd.f32 %v2899, %v3059
        %v3061 = vpop.f32.mrb[0].mxu0
        %v3062 = vpop.f32.mrb[0].mxu0
        %v3063 = vadd.f32 %v2902, %v3062
        %v3064 = vpop.f32.mrb[0].mxu0
        %3065 = vmatprep.mubr.bf16.mxu0 0
        %3066 = vmatmul.mubr.bf16.gmra.mrb[0].mxu0 %v1758
        %v3067 = vpop.f32.mrb[0].mxu0
        %v3068 = vadd.f32 %v2907, %v3067
        %v3069 = vpop.f32.mrb[0].mxu0
        %v3070 = vpop.f32.mrb[0].mxu0
        %v3071 = vadd.f32 %v2910, %v3070
        %v3072 = vpop.f32.mrb[0].mxu0
        %3073 = vmatprep.mubr.bf16.mxu0 0
        %3074 = vmatmul.mubr.bf16.gmra.mrb[0].mxu0 %v1799
        %v3075 = vpop.f32.mrb[0].mxu0
        %v3076 = vadd.f32 %v2915, %v3075
        %v3077 = vpop.f32.mrb[0].mxu0
        %v3078 = vpop.f32.mrb[0].mxu0
        %v3079 = vadd.f32 %v2918, %v3078
        %v3080 = vpop.f32.mrb[0].mxu0
        %3081 = vmatprep.mubr.bf16.mxu0 0
        %3082 = vmatmul.mubr.bf16.gmra.mrb[0].mxu0 %v1840
        %v3083 = vpop.f32.mrb[0].mxu0
        %v3084 = vadd.f32 %v2923, %v3083
        %v3085 = vpop.f32.mrb[0].mxu0
        %v3086 = vpop.f32.mrb[0].mxu0
        %v3087 = vadd.f32 %v2926, %v3086
        %v3088 = vpop.f32.mrb[0].mxu0
        %3089 = vmatprep.mubr.bf16.mxu0 0
        %3090 = vmatmul.mubr.bf16.gmra.mrb[0].mxu0 %v1881
        %v3091 = vpop.f32.mrb[0].mxu0
        %v3092 = vadd.f32 %v2931, %v3091
        %v3093 = vpop.f32.mrb[0].mxu0
        %v3094 = vpop.f32.mrb[0].mxu0
        %v3095 = vadd.f32 %v2934, %v3094
        %v3096 = vpop.f32.mrb[0].mxu0
        %3097 = vmatprep.mubr.bf16.mxu0 0
        %3098 = vmatmul.mubr.bf16.gmra.mrb[0].mxu0 %v1922
        %v3099 = vpop.f32.mrb[0].mxu0
        %v3100 = vadd.f32 %v2939, %v3099
        %v3101 = vpop.f32.mrb[0].mxu0
        %v3102 = vpop.f32.mrb[0].mxu0
        %v3103 = vadd.f32 %v2942, %v3102
        %v3104 = vpop.f32.mrb[0].mxu0
        %3105 = vmatprep.mubr.bf16.mxu0 0
        %3106 = vmatmul.mubr.bf16.gmra.mrb[0].mxu0 %v2596
        %v3107 = vpop.f32.mrb[0].mxu0
        %v3108 = vadd.f32 %v2947, %v3107
        %v3109 = vpop.f32.mrb[0].mxu0
        %v3110 = vpop.f32.mrb[0].mxu0
        %v3111 = vadd.f32 %v2950, %v3110
        %v3112 = vpop.f32.mrb[0].mxu0
        %3113 = vdwg.mxu0
        %v3114 = vadd.f32 %v2524, %v2988
        %v3115 = vadd.f32 %v2525, %v2991
        %v3116 = vadd.f32 %v2526, %v2996
        %v3117 = vadd.f32 %v2527, %v2999
        %v3118 = vadd.f32 %v2528, %v3004
        %v3119 = vadd.f32 %v2529, %v3007
        %v3120 = vadd.f32 %v2530, %v3012
        %v3121 = vadd.f32 %v2531, %v3015
        %v3122 = vadd.f32 %v2532, %v3020
        %v3123 = vadd.f32 %v2533, %v3023
        %v3124 = vadd.f32 %v2534, %v3028
        %v3125 = vadd.f32 %v2535, %v3031
        %v3126 = vadd.f32 %v2536, %v3036
        %v3127 = vadd.f32 %v2537, %v3039
        %v3128 = vadd.f32 %v2538, %v3044
        %v3129 = vadd.f32 %v2539, %v3047
        %v3130 = vadd.f32 %v2540, %v3052
        %v3131 = vadd.f32 %v2541, %v3055
        %v3132 = vadd.f32 %v2542, %v3060
        %v3133 = vadd.f32 %v2543, %v3063
        %v3134 = vadd.f32 %v2544, %v3068
        %v3135 = vadd.f32 %v2545, %v3071
        %v3136 = vadd.f32 %v2546, %v3076
        %v3137 = vadd.f32 %v2547, %v3079
        %v3138 = vadd.f32 %v2548, %v3084
        %v3139 = vadd.f32 %v2549, %v3087
        %v3140 = vadd.f32 %v2550, %v3092
        %v3141 = vadd.f32 %v2551, %v3095
        %v3142 = vadd.f32 %v2552, %v3100
        %v3143 = vadd.f32 %v2553, %v3103
        %v3144 = vadd.f32 %v2554, %v3108
        %v3145 = vadd.f32 %v2555, %v3111
        %3146 = vst [vmem:[#allocation5] sm:$0xff] %v3114
        %3147 = vst [vmem:[#allocation5 + $0x8] sm:$0xff] %v3115
        %3148 = vst [vmem:[#allocation5 + $0x10] sm:$0xff] %v3116
        %3149 = vst [vmem:[#allocation5 + $0x18] sm:$0xff] %v3117
        %3150 = vst [vmem:[#allocation5 + $0x20] sm:$0xff] %v3118
        %3151 = vst [vmem:[#allocation5 + $0x28] sm:$0xff] %v3119
        %3152 = vst [vmem:[#allocation5 + $0x30] sm:$0xff] %v3120
        %3153 = vst [vmem:[#allocation5 + $0x38] sm:$0xff] %v3121
        %3154 = vst [vmem:[#allocation5 + $0x40] sm:$0xff] %v3122
        %3155 = vst [vmem:[#allocation5 + $0x48] sm:$0xff] %v3123
        %3156 = vst [vmem:[#allocation5 + $0x50] sm:$0xff] %v3124
        %3157 = vst [vmem:[#allocation5 + $0x58] sm:$0xff] %v3125
        %3158 = vst [vmem:[#allocation5 + $0x60] sm:$0xff] %v3126
        %3159 = vst [vmem:[#allocation5 + $0x68] sm:$0xff] %v3127
        %3160 = vst [vmem:[#allocation5 + $0x70] sm:$0xff] %v3128
        %3161 = vst [vmem:[#allocation5 + $0x78] sm:$0xff] %v3129
        %3162 = vst [vmem:[#allocation5 + $0x80] sm:$0xff] %v3130
        %3163 = vst [vmem:[#allocation5 + $0x88] sm:$0xff] %v3131
        %3164 = vst [vmem:[#allocation5 + $0x90] sm:$0xff] %v3132
        %3165 = vst [vmem:[#allocation5 + $0x98] sm:$0xff] %v3133
        %3166 = vst [vmem:[#allocation5 + $0xa0] sm:$0xff] %v3134
        %3167 = vst [vmem:[#allocation5 + $0xa8] sm:$0xff] %v3135
        %3168 = vst [vmem:[#allocation5 + $0xb0] sm:$0xff] %v3136
        %3169 = vst [vmem:[#allocation5 + $0xb8] sm:$0xff] %v3137
        %3170 = vst [vmem:[#allocation5 + $0xc0] sm:$0xff] %v3138
        %3171 = vst [vmem:[#allocation5 + $0xc8] sm:$0xff] %v3139
        %3172 = vst [vmem:[#allocation5 + $0xd0] sm:$0xff] %v3140
        %3173 = vst [vmem:[#allocation5 + $0xd8] sm:$0xff] %v3141
        %3174 = vst [vmem:[#allocation5 + $0xe0] sm:$0xff] %v3142
        %3175 = vst [vmem:[#allocation5 + $0xe8] sm:$0xff] %v3143
        %3176 = vst [vmem:[#allocation5 + $0xf0] sm:$0xff] %v3144
        %3177 = vst [vmem:[#allocation5 + $0xf8] sm:$0xff] %v3145
        %v3178 = vld [vmem:[#allocation5] sm:$0xff]
        %v3179 = vld [vmem:[#allocation5 + $0x8] sm:$0xff]
        %v3180 = vld [vmem:[#allocation5 + $0x10] sm:$0xff]
        %v3181 = vld [vmem:[#allocation5 + $0x18] sm:$0xff]
        %v3182 = vld [vmem:[#allocation5 + $0x20] sm:$0xff]
        %v3183 = vld [vmem:[#allocation5 + $0x28] sm:$0xff]
        %v3184 = vld [vmem:[#allocation5 + $0x30] sm:$0xff]
        %v3185 = vld [vmem:[#allocation5 + $0x38] sm:$0xff]
        %v3186 = vld [vmem:[#allocation5 + $0x40] sm:$0xff]
        %v3187 = vld [vmem:[#allocation5 + $0x48] sm:$0xff]
        %v3188 = vld [vmem:[#allocation5 + $0x50] sm:$0xff]
        %v3189 = vld [vmem:[#allocation5 + $0x58] sm:$0xff]
        %v3190 = vld [vmem:[#allocation5 + $0x60] sm:$0xff]
        %v3191 = vld [vmem:[#allocation5 + $0x68] sm:$0xff]
        %v3192 = vld [vmem:[#allocation5 + $0x70] sm:$0xff]
        %v3193 = vld [vmem:[#allocation5 + $0x78] sm:$0xff]
        %v3194 = vld [vmem:[#allocation5 + $0x80] sm:$0xff]
        %v3195 = vld [vmem:[#allocation5 + $0x88] sm:$0xff]
        %v3196 = vld [vmem:[#allocation5 + $0x90] sm:$0xff]
        %v3197 = vld [vmem:[#allocation5 + $0x98] sm:$0xff]
        %v3198 = vld [vmem:[#allocation5 + $0xa0] sm:$0xff]
        %v3199 = vld [vmem:[#allocation5 + $0xa8] sm:$0xff]
        %v3200 = vld [vmem:[#allocation5 + $0xb0] sm:$0xff]
        %v3201 = vld [vmem:[#allocation5 + $0xb8] sm:$0xff]
        %v3202 = vld [vmem:[#allocation5 + $0xc0] sm:$0xff]
        %v3203 = vld [vmem:[#allocation5 + $0xc8] sm:$0xff]
        %v3204 = vld [vmem:[#allocation5 + $0xd0] sm:$0xff]
        %v3205 = vld [vmem:[#allocation5 + $0xd8] sm:$0xff]
        %v3206 = vld [vmem:[#allocation5 + $0xe0] sm:$0xff]
        %v3207 = vld [vmem:[#allocation5 + $0xe8] sm:$0xff]
        %v3208 = vld [vmem:[#allocation5 + $0xf0] sm:$0xff]
        %v3209 = vld [vmem:[#allocation5 + $0xf8] sm:$0xff]
        %v3210 = vrot.slane %v1161, 3
        %v3211 = vrot.slane %v1163, 4
        %v3212 = vor.u32 %v3210, %v3211
        %v3213 = vrot.slane %v1172, 3
        %v3214 = vrot.slane %v1168, 4
        %v3215 = vor.u32 %v3213, %v3214
        %v3216 = vsel %vm1266, %v3212, %v3215
        %v3218 = vshrl.u32 %v1171, 16
        %v3220 = vrot.slane %v3218, 3
        %v3221 = vshll.u32 %v1171, 16
        %v3223 = vrot.slane %v3221, 4
        %v3224 = vor.u32 %v3220, %v3223
        %v3226 = vshrl.u32 %v1174, 16
        %v3228 = vrot.slane %v3226, 3
        %v3229 = vshll.u32 %v1174, 16
        %v3231 = vrot.slane %v3229, 4
        %v3232 = vor.u32 %v3228, %v3231
        %v3233 = vsel %vm1266, %v3224, %v3232
        %v3235 = vshrl.u32 %v1265, 16
        %v3237 = vrot.slane %v3235, 3
        %v3238 = vshll.u32 %v1265, 16
        %v3240 = vrot.slane %v3238, 4
        %v3241 = vor.u32 %v3237, %v3240
        %v3243 = vshrl.u32 %v1264, 16
        %v3245 = vrot.slane %v3243, 3
        %v3246 = vshll.u32 %v1264, 16
        %v3248 = vrot.slane %v3246, 4
        %v3249 = vor.u32 %v3245, %v3248
        %v3250 = vsel %vm1266, %v3241, %v3249
        %v3254 = vld [vmem:[#allocation9 + $0x180] sm:$0xf]
        %v3255 = vld [vmem:[#allocation9 + $0x184] sm:$0xf]
        %v3256 = vld [vmem:[#allocation9 + $0x188] sm:$0xf]
        %v3257 = vld [vmem:[#allocation9 + $0x18c] sm:$0xf]
        %v3258 = vld [vmem:[#allocation9 + $0x190] sm:$0xf]
        %v3259 = vld [vmem:[#allocation9 + $0x194] sm:$0xf]
        %v3260 = vld [vmem:[#allocation9 + $0x198] sm:$0xf]
        %v3261 = vld [vmem:[#allocation9 + $0x19c] sm:$0xf]
        %v3262 = vld [vmem:[#allocation9 + $0x1a0] sm:$0xf]
        %v3263 = vld [vmem:[#allocation9 + $0x1a4] sm:$0xf]
        %v3264 = vld [vmem:[#allocation9 + $0x1a8] sm:$0xf]
        %v3265 = vld [vmem:[#allocation9 + $0x1ac] sm:$0xf]
        %v3266 = vld [vmem:[#allocation9 + $0x1b0] sm:$0xf]
        %v3267 = vld [vmem:[#allocation9 + $0x1b4] sm:$0xf]
        %v3268 = vld [vmem:[#allocation9 + $0x1b8] sm:$0xf]
        %v3269 = vld [vmem:[#allocation9 + $0x1bc] sm:$0xf]
        %v3270 = vld [vmem:[#allocation9 + $0x1c0] sm:$0xf]
        %v3271 = vld [vmem:[#allocation9 + $0x1c4] sm:$0xf]
        %v3272 = vld [vmem:[#allocation9 + $0x1c8] sm:$0xf]
        %v3273 = vld [vmem:[#allocation9 + $0x1cc] sm:$0xf]
        %v3274 = vld [vmem:[#allocation9 + $0x1d0] sm:$0xf]
        %v3275 = vld [vmem:[#allocation9 + $0x1d4] sm:$0xf]
        %v3276 = vld [vmem:[#allocation9 + $0x1d8] sm:$0xf]
        %v3277 = vld [vmem:[#allocation9 + $0x1dc] sm:$0xf]
        %v3278 = vld [vmem:[#allocation9 + $0x1e0] sm:$0xf]
        %v3279 = vld [vmem:[#allocation9 + $0x1e4] sm:$0xf]
        %v3280 = vld [vmem:[#allocation9 + $0x1e8] sm:$0xf]
        %v3281 = vld [vmem:[#allocation9 + $0x1ec] sm:$0xf]
        %v3282 = vld [vmem:[#allocation9 + $0x1f0] sm:$0xf]
        %v3283 = vld [vmem:[#allocation9 + $0x1f4] sm:$0xf]
        %v3284 = vld [vmem:[#allocation9 + $0x1f8] sm:$0xf]
        %v3285 = vld [vmem:[#allocation9 + $0x1fc] sm:$0xf]
        %v3286 = vld [vmem:[#allocation9 + $0x200] sm:$0xf]
        %v3287 = vld [vmem:[#allocation9 + $0x204] sm:$0xf]
        %v3288 = vld [vmem:[#allocation9 + $0x208] sm:$0xf]
        %v3289 = vld [vmem:[#allocation9 + $0x20c] sm:$0xf]
        %v3290 = vld [vmem:[#allocation9 + $0x210] sm:$0xf]
        %v3291 = vld [vmem:[#allocation9 + $0x214] sm:$0xf]
        %v3292 = vld [vmem:[#allocation9 + $0x218] sm:$0xf]
        %v3293 = vld [vmem:[#allocation9 + $0x21c] sm:$0xf]
        %v3294 = vld [vmem:[#allocation9 + $0x220] sm:$0xf]
        %v3295 = vld [vmem:[#allocation9 + $0x224] sm:$0xf]
        %v3296 = vld [vmem:[#allocation9 + $0x228] sm:$0xf]
        %v3297 = vld [vmem:[#allocation9 + $0x22c] sm:$0xf]
        %v3298 = vld [vmem:[#allocation9 + $0x230] sm:$0xf]
        %v3299 = vld [vmem:[#allocation9 + $0x234] sm:$0xf]
        %v3300 = vld [vmem:[#allocation9 + $0x238] sm:$0xf]
        %v3301 = vld [vmem:[#allocation9 + $0x23c] sm:$0xf]
        %v3350 = vunpack.c.l.b16 %v3254
        %v3351 = vunpack.c.l.b16 %v3255
        %v3352 = vunpack.c.l.b16 %v3256
        %v3353 = vunpack.c.l.b16 %v3257
        %v3354 = vunpack.c.l.b16 %v3258
        %v3355 = vunpack.c.l.b16 %v3259
        %v3356 = vunpack.c.l.b16 %v3260
        %v3357 = vunpack.c.l.b16 %v3261
        %v3358 = vunpack.c.l.b16 %v3262
        %v3359 = vunpack.c.l.b16 %v3263
        %v3360 = vunpack.c.l.b16 %v3264
        %v3361 = vunpack.c.l.b16 %v3265
        %v3362 = vunpack.c.l.b16 %v3266
        %v3363 = vunpack.c.l.b16 %v3267
        %v3364 = vunpack.c.l.b16 %v3268
        %v3365 = vunpack.c.l.b16 %v3269
        %v3366 = vunpack.c.l.b16 %v3270
        %v3367 = vunpack.c.l.b16 %v3271
        %v3368 = vunpack.c.l.b16 %v3272
        %v3369 = vunpack.c.l.b16 %v3273
        %v3370 = vunpack.c.l.b16 %v3274
        %v3371 = vunpack.c.l.b16 %v3275
        %v3372 = vunpack.c.l.b16 %v3276
        %v3373 = vunpack.c.l.b16 %v3277
        %v3374 = vunpack.c.l.b16 %v3278
        %v3375 = vunpack.c.l.b16 %v3279
        %v3376 = vunpack.c.l.b16 %v3280
        %v3377 = vunpack.c.l.b16 %v3281
        %v3378 = vunpack.c.l.b16 %v3282
        %v3379 = vunpack.c.l.b16 %v3283
        %v3380 = vunpack.c.l.b16 %v3284
        %v3381 = vunpack.c.l.b16 %v3285
        %v3382 = vunpack.c.l.b16 %v3286
        %v3383 = vunpack.c.l.b16 %v3287
        %v3384 = vunpack.c.l.b16 %v3288
        %v3385 = vunpack.c.l.b16 %v3289
        %v3386 = vunpack.c.l.b16 %v3290
        %v3387 = vunpack.c.l.b16 %v3291
        %v3388 = vunpack.c.l.b16 %v3292
        %v3389 = vunpack.c.l.b16 %v3293
        %v3390 = vunpack.c.l.b16 %v3294
        %v3391 = vunpack.c.l.b16 %v3295
        %v3392 = vunpack.c.l.b16 %v3296
        %v3393 = vunpack.c.l.b16 %v3297
        %v3394 = vunpack.c.l.b16 %v3298
        %v3395 = vunpack.c.l.b16 %v3299
        %v3396 = vunpack.c.l.b16 %v3300
        %v3397 = vunpack.c.l.b16 %v3301
        %v3398 = vpack.c.b16 %v3351, %v3350
        %v3399 = vpack.c.b16 %v3353, %v3352
        %v3400 = vpack.c.b16 %v3355, %v3354
        %v3401 = vpack.c.b16 %v3357, %v3356
        %v3402 = vpack.c.b16 %v3359, %v3358
        %v3403 = vpack.c.b16 %v3361, %v3360
        %v3404 = vpack.c.b16 %v3363, %v3362
        %v3405 = vpack.c.b16 %v3365, %v3364
        %v3406 = vpack.c.b16 %v3367, %v3366
        %v3407 = vpack.c.b16 %v3369, %v3368
        %v3408 = vpack.c.b16 %v3371, %v3370
        %v3409 = vpack.c.b16 %v3373, %v3372
        %v3410 = vpack.c.b16 %v3375, %v3374
        %v3411 = vpack.c.b16 %v3377, %v3376
        %v3412 = vpack.c.b16 %v3379, %v3378
        %v3413 = vpack.c.b16 %v3381, %v3380
        %v3414 = vpack.c.b16 %v3383, %v3382
        %v3415 = vpack.c.b16 %v3385, %v3384
        %v3416 = vpack.c.b16 %v3387, %v3386
        %v3417 = vpack.c.b16 %v3389, %v3388
        %v3418 = vpack.c.b16 %v3391, %v3390
        %v3419 = vpack.c.b16 %v3393, %v3392
        %v3420 = vpack.c.b16 %v3395, %v3394
        %v3421 = vpack.c.b16 %v3397, %v3396
        %3446 = vmatprep.subr.bf16.mxu0 0
        %3447 = vmatpush1.bf16.msra.mxu0 %v3398
        %3448 = vmatprep.subr.bf16.mxu0 0
        %3449 = vmatpush1.bf16.msra.mxu0 %v3399
        %3450 = vmatprep.subr.bf16.mxu0 0
        %3451 = vmatpush1.bf16.msra.mxu0 %v3400
        %3452 = vmatprep.subr.bf16.mxu0 0
        %3453 = vmatpush1.bf16.msra.mxu0 %v3401
        %3454 = vmatprep.subr.bf16.mxu0 0
        %3455 = vmatpush1.bf16.msra.mxu0 %v3402
        %3456 = vmatprep.subr.bf16.mxu0 0
        %3457 = vmatpush1.bf16.msra.mxu0 %v3403
        %3458 = vmatprep.subr.bf16.mxu0 0
        %3459 = vmatpush1.bf16.msra.mxu0 %v3404
        %3460 = vmatprep.subr.bf16.mxu0 0
        %3461 = vmatpush1.bf16.msra.mxu0 %v3405
        %3462 = vmatprep.subr.bf16.mxu0 0
        %3463 = vmatpush1.bf16.msra.mxu0 %v3406
        %3464 = vmatprep.subr.bf16.mxu0 0
        %3465 = vmatpush1.bf16.msra.mxu0 %v3407
        %3466 = vmatprep.subr.bf16.mxu0 0
        %3467 = vmatpush1.bf16.msra.mxu0 %v3408
        %3468 = vmatprep.subr.bf16.mxu0 0
        %3469 = vmatpush1.bf16.msra.mxu0 %v3409
        %3470 = vmatprep.subr.bf16.mxu0 0
        %3471 = vmatpush1.bf16.msra.mxu0 %v3410
        %3472 = vmatprep.subr.bf16.mxu0 0
        %3473 = vmatpush1.bf16.msra.mxu0 %v3411
        %3474 = vmatprep.subr.bf16.mxu0 0
        %3475 = vmatpush1.bf16.msra.mxu0 %v3412
        %3476 = vmatprep.subr.bf16.mxu0 0
        %3477 = vmatpush1.bf16.msra.mxu0 %v3413
        %3478 = vmatprep.mubr.bf16.mxu0 %v1372
        %3479 = vmatmul.mubr.bf16.gmra.mrb[0].mxu0 %v1355
        %v3480 = vpop.f32.mrb[0].mxu0
        %v3481 = vadd.f32 0.0, %v3480
        %v3482 = vpop.f32.mrb[0].mxu0
        %v3483 = vpop.f32.mrb[0].mxu0
        %v3484 = vadd.f32 0.0, %v3483
        %v3485 = vpop.f32.mrb[0].mxu0
        %3486 = vmatprep.mubr.bf16.mxu0 %v1413
        %3487 = vmatmul.mubr.bf16.gmra.mrb[0].mxu0 %v1396
        %v3488 = vpop.f32.mrb[0].mxu0
        %v3489 = vadd.f32 0.0, %v3488
        %v3490 = vpop.f32.mrb[0].mxu0
        %v3491 = vpop.f32.mrb[0].mxu0
        %v3492 = vadd.f32 0.0, %v3491
        %v3493 = vpop.f32.mrb[0].mxu0
        %3494 = vmatprep.mubr.bf16.mxu0 %v1454
        %3495 = vmatmul.mubr.bf16.gmra.mrb[0].mxu0 %v1437
        %v3496 = vpop.f32.mrb[0].mxu0
        %v3497 = vadd.f32 0.0, %v3496
        %v3498 = vpop.f32.mrb[0].mxu0
        %v3499 = vpop.f32.mrb[0].mxu0
        %v3500 = vadd.f32 0.0, %v3499
        %v3501 = vpop.f32.mrb[0].mxu0
        %3502 = vmatprep.mubr.bf16.mxu0 %v1495
        %3503 = vmatmul.mubr.bf16.gmra.mrb[0].mxu0 %v1478
        %v3504 = vpop.f32.mrb[0].mxu0
        %v3505 = vadd.f32 0.0, %v3504
        %v3506 = vpop.f32.mrb[0].mxu0
        %v3507 = vpop.f32.mrb[0].mxu0
        %v3508 = vadd.f32 0.0, %v3507
        %v3509 = vpop.f32.mrb[0].mxu0
        %3510 = vmatprep.mubr.bf16.mxu0 %v1536
        %3511 = vmatmul.mubr.bf16.gmra.mrb[0].mxu0 %v1519
        %v3512 = vpop.f32.mrb[0].mxu0
        %v3513 = vadd.f32 0.0, %v3512
        %v3514 = vpop.f32.mrb[0].mxu0
        %v3515 = vpop.f32.mrb[0].mxu0
        %v3516 = vadd.f32 0.0, %v3515
        %v3517 = vpop.f32.mrb[0].mxu0
        %3518 = vmatprep.mubr.bf16.mxu0 %v1577
        %3519 = vmatmul.mubr.bf16.gmra.mrb[0].mxu0 %v1560
        %v3520 = vpop.f32.mrb[0].mxu0
        %v3521 = vadd.f32 0.0, %v3520
        %v3522 = vpop.f32.mrb[0].mxu0
        %v3523 = vpop.f32.mrb[0].mxu0
        %v3524 = vadd.f32 0.0, %v3523
        %v3525 = vpop.f32.mrb[0].mxu0
        %3526 = vmatprep.mubr.bf16.mxu0 %v1618
        %3527 = vmatmul.mubr.bf16.gmra.mrb[0].mxu0 %v1601
        %v3528 = vpop.f32.mrb[0].mxu0
        %v3529 = vadd.f32 0.0, %v3528
        %v3530 = vpop.f32.mrb[0].mxu0
        %v3531 = vpop.f32.mrb[0].mxu0
        %v3532 = vadd.f32 0.0, %v3531
        %v3533 = vpop.f32.mrb[0].mxu0
        %3534 = vmatprep.mubr.bf16.mxu0 %v1659
        %3535 = vmatmul.mubr.bf16.gmra.mrb[0].mxu0 %v1642
        %v3536 = vpop.f32.mrb[0].mxu0
        %v3537 = vadd.f32 0.0, %v3536
        %v3538 = vpop.f32.mrb[0].mxu0
        %v3539 = vpop.f32.mrb[0].mxu0
        %v3540 = vadd.f32 0.0, %v3539
        %v3541 = vpop.f32.mrb[0].mxu0
        %3542 = vmatprep.mubr.bf16.mxu0 %v1700
        %3543 = vmatmul.mubr.bf16.gmra.mrb[0].mxu0 %v1683
        %v3544 = vpop.f32.mrb[0].mxu0
        %v3545 = vadd.f32 0.0, %v3544
        %v3546 = vpop.f32.mrb[0].mxu0
        %v3547 = vpop.f32.mrb[0].mxu0
        %v3548 = vadd.f32 0.0, %v3547
        %v3549 = vpop.f32.mrb[0].mxu0
        %3550 = vmatprep.mubr.bf16.mxu0 %v1741
        %3551 = vmatmul.mubr.bf16.gmra.mrb[0].mxu0 %v1724
        %v3552 = vpop.f32.mrb[0].mxu0
        %v3553 = vadd.f32 0.0, %v3552
        %v3554 = vpop.f32.mrb[0].mxu0
        %v3555 = vpop.f32.mrb[0].mxu0
        %v3556 = vadd.f32 0.0, %v3555
        %v3557 = vpop.f32.mrb[0].mxu0
        %3558 = vmatprep.mubr.bf16.mxu0 %v1782
        %3559 = vmatmul.mubr.bf16.gmra.mrb[0].mxu0 %v1765
        %v3560 = vpop.f32.mrb[0].mxu0
        %v3561 = vadd.f32 0.0, %v3560
        %v3562 = vpop.f32.mrb[0].mxu0
        %v3563 = vpop.f32.mrb[0].mxu0
        %v3564 = vadd.f32 0.0, %v3563
        %v3565 = vpop.f32.mrb[0].mxu0
        %3566 = vmatprep.mubr.bf16.mxu0 %v1823
        %3567 = vmatmul.mubr.bf16.gmra.mrb[0].mxu0 %v1806
        %v3568 = vpop.f32.mrb[0].mxu0
        %v3569 = vadd.f32 0.0, %v3568
        %v3570 = vpop.f32.mrb[0].mxu0
        %v3571 = vpop.f32.mrb[0].mxu0
        %v3572 = vadd.f32 0.0, %v3571
        %v3573 = vpop.f32.mrb[0].mxu0
        %3574 = vmatprep.mubr.bf16.mxu0 %v1864
        %3575 = vmatmul.mubr.bf16.gmra.mrb[0].mxu0 %v1847
        %v3576 = vpop.f32.mrb[0].mxu0
        %v3577 = vadd.f32 0.0, %v3576
        %v3578 = vpop.f32.mrb[0].mxu0
        %v3579 = vpop.f32.mrb[0].mxu0
        %v3580 = vadd.f32 0.0, %v3579
        %v3581 = vpop.f32.mrb[0].mxu0
        %3582 = vmatprep.mubr.bf16.mxu0 %v1905
        %3583 = vmatmul.mubr.bf16.gmra.mrb[0].mxu0 %v1888
        %v3584 = vpop.f32.mrb[0].mxu0
        %v3585 = vadd.f32 0.0, %v3584
        %v3586 = vpop.f32.mrb[0].mxu0
        %v3587 = vpop.f32.mrb[0].mxu0
        %v3588 = vadd.f32 0.0, %v3587
        %v3589 = vpop.f32.mrb[0].mxu0
        %3590 = vmatprep.mubr.bf16.mxu0 %v2579
        %3591 = vmatmul.mubr.bf16.gmra.mrb[0].mxu0 %v2562
        %v3592 = vpop.f32.mrb[0].mxu0
        %v3593 = vadd.f32 0.0, %v3592
        %v3594 = vpop.f32.mrb[0].mxu0
        %v3595 = vpop.f32.mrb[0].mxu0
        %v3596 = vadd.f32 0.0, %v3595
        %v3597 = vpop.f32.mrb[0].mxu0
        %3598 = vmatprep.mubr.bf16.mxu0 %v3233
        %3599 = vmatmul.mubr.bf16.gmra.mrb[0].mxu0 %v3216
        %v3600 = vpop.f32.mrb[0].mxu0
        %v3601 = vadd.f32 0.0, %v3600
        %v3602 = vpop.f32.mrb[0].mxu0
        %v3603 = vpop.f32.mrb[0].mxu0
        %v3604 = vadd.f32 0.0, %v3603
        %v3605 = vpop.f32.mrb[0].mxu0
        %3606 = vdwg.mxu0
        %3607 = vmatprep.subr.bf16.mxu0 0
        %3608 = vmatpush1.bf16.msra.mxu0 %v3414
        %3609 = vmatprep.subr.bf16.mxu0 0
        %3610 = vmatpush1.bf16.msra.mxu0 %v3415
        %3611 = vmatprep.subr.bf16.mxu0 0
        %3612 = vmatpush1.bf16.msra.mxu0 %v3416
        %3613 = vmatprep.subr.bf16.mxu0 0
        %3614 = vmatpush1.bf16.msra.mxu0 %v3417
        %3615 = vmatprep.subr.bf16.mxu0 0
        %3616 = vmatpush1.bf16.msra.mxu0 %v3418
        %3617 = vmatprep.subr.bf16.mxu0 0
        %3618 = vmatpush1.bf16.msra.mxu0 %v3419
        %3619 = vmatprep.subr.bf16.mxu0 0
        %3620 = vmatpush1.bf16.msra.mxu0 %v3420
        %3621 = vmatprep.subr.bf16.mxu0 0
        %3622 = vmatpush1.bf16.msra.mxu0 %v3421
        %3623 = vmatprep.subr.bf16.mxu0 0
        %3624 = vmatpush1.bf16.msra.mxu0 0
        %3625 = vmatprep.subr.bf16.mxu0 0
        %3626 = vmatpush1.bf16.msra.mxu0 0
        %3627 = vmatprep.subr.bf16.mxu0 0
        %3628 = vmatpush1.bf16.msra.mxu0 0
        %3629 = vmatprep.subr.bf16.mxu0 0
        %3630 = vmatpush1.bf16.msra.mxu0 0
        %3631 = vmatprep.subr.bf16.mxu0 0
        %3632 = vmatpush1.bf16.msra.mxu0 0
        %3633 = vmatprep.subr.bf16.mxu0 0
        %3634 = vmatpush1.bf16.msra.mxu0 0
        %3635 = vmatprep.subr.bf16.mxu0 0
        %3636 = vmatpush1.bf16.msra.mxu0 0
        %3637 = vmatprep.subr.bf16.mxu0 0
        %3638 = vmatpush1.bf16.msra.mxu0 0
        %3639 = vmatprep.mubr.bf16.mxu0 0
        %3640 = vmatmul.mubr.bf16.gmra.mrb[0].mxu0 %v1389
        %v3641 = vpop.f32.mrb[0].mxu0
        %v3642 = vadd.f32 %v3481, %v3641
        %v3643 = vpop.f32.mrb[0].mxu0
        %v3644 = vpop.f32.mrb[0].mxu0
        %v3645 = vadd.f32 %v3484, %v3644
        %v3646 = vpop.f32.mrb[0].mxu0
        %3647 = vmatprep.mubr.bf16.mxu0 0
        %3648 = vmatmul.mubr.bf16.gmra.mrb[0].mxu0 %v1430
        %v3649 = vpop.f32.mrb[0].mxu0
        %v3650 = vadd.f32 %v3489, %v3649
        %v3651 = vpop.f32.mrb[0].mxu0
        %v3652 = vpop.f32.mrb[0].mxu0
        %v3653 = vadd.f32 %v3492, %v3652
        %v3654 = vpop.f32.mrb[0].mxu0
        %3655 = vmatprep.mubr.bf16.mxu0 0
        %3656 = vmatmul.mubr.bf16.gmra.mrb[0].mxu0 %v1471
        %v3657 = vpop.f32.mrb[0].mxu0
        %v3658 = vadd.f32 %v3497, %v3657
        %v3659 = vpop.f32.mrb[0].mxu0
        %v3660 = vpop.f32.mrb[0].mxu0
        %v3661 = vadd.f32 %v3500, %v3660
        %v3662 = vpop.f32.mrb[0].mxu0
        %3663 = vmatprep.mubr.bf16.mxu0 0
        %3664 = vmatmul.mubr.bf16.gmra.mrb[0].mxu0 %v1512
        %v3665 = vpop.f32.mrb[0].mxu0
        %v3666 = vadd.f32 %v3505, %v3665
        %v3667 = vpop.f32.mrb[0].mxu0
        %v3668 = vpop.f32.mrb[0].mxu0
        %v3669 = vadd.f32 %v3508, %v3668
        %v3670 = vpop.f32.mrb[0].mxu0
        %3671 = vmatprep.mubr.bf16.mxu0 0
        %3672 = vmatmul.mubr.bf16.gmra.mrb[0].mxu0 %v1553
        %v3673 = vpop.f32.mrb[0].mxu0
        %v3674 = vadd.f32 %v3513, %v3673
        %v3675 = vpop.f32.mrb[0].mxu0
        %v3676 = vpop.f32.mrb[0].mxu0
        %v3677 = vadd.f32 %v3516, %v3676
        %v3678 = vpop.f32.mrb[0].mxu0
        %3679 = vmatprep.mubr.bf16.mxu0 0
        %3680 = vmatmul.mubr.bf16.gmra.mrb[0].mxu0 %v1594
        %v3681 = vpop.f32.mrb[0].mxu0
        %v3682 = vadd.f32 %v3521, %v3681
        %v3683 = vpop.f32.mrb[0].mxu0
        %v3684 = vpop.f32.mrb[0].mxu0
        %v3685 = vadd.f32 %v3524, %v3684
        %v3686 = vpop.f32.mrb[0].mxu0
        %3687 = vmatprep.mubr.bf16.mxu0 0
        %3688 = vmatmul.mubr.bf16.gmra.mrb[0].mxu0 %v1635
        %v3689 = vpop.f32.mrb[0].mxu0
        %v3690 = vadd.f32 %v3529, %v3689
        %v3691 = vpop.f32.mrb[0].mxu0
        %v3692 = vpop.f32.mrb[0].mxu0
        %v3693 = vadd.f32 %v3532, %v3692
        %v3694 = vpop.f32.mrb[0].mxu0
        %3695 = vmatprep.mubr.bf16.mxu0 0
        %3696 = vmatmul.mubr.bf16.gmra.mrb[0].mxu0 %v1676
        %v3697 = vpop.f32.mrb[0].mxu0
        %v3698 = vadd.f32 %v3537, %v3697
        %v3699 = vpop.f32.mrb[0].mxu0
        %v3700 = vpop.f32.mrb[0].mxu0
        %v3701 = vadd.f32 %v3540, %v3700
        %v3702 = vpop.f32.mrb[0].mxu0
        %3703 = vmatprep.mubr.bf16.mxu0 0
        %3704 = vmatmul.mubr.bf16.gmra.mrb[0].mxu0 %v1717
        %v3705 = vpop.f32.mrb[0].mxu0
        %v3706 = vadd.f32 %v3545, %v3705
        %v3707 = vpop.f32.mrb[0].mxu0
        %v3708 = vpop.f32.mrb[0].mxu0
        %v3709 = vadd.f32 %v3548, %v3708
        %v3710 = vpop.f32.mrb[0].mxu0
        %3711 = vmatprep.mubr.bf16.mxu0 0
        %3712 = vmatmul.mubr.bf16.gmra.mrb[0].mxu0 %v1758
        %v3713 = vpop.f32.mrb[0].mxu0
        %v3714 = vadd.f32 %v3553, %v3713
        %v3715 = vpop.f32.mrb[0].mxu0
        %v3716 = vpop.f32.mrb[0].mxu0
        %v3717 = vadd.f32 %v3556, %v3716
        %v3718 = vpop.f32.mrb[0].mxu0
        %3719 = vmatprep.mubr.bf16.mxu0 0
        %3720 = vmatmul.mubr.bf16.gmra.mrb[0].mxu0 %v1799
        %v3721 = vpop.f32.mrb[0].mxu0
        %v3722 = vadd.f32 %v3561, %v3721
        %v3723 = vpop.f32.mrb[0].mxu0
        %v3724 = vpop.f32.mrb[0].mxu0
        %v3725 = vadd.f32 %v3564, %v3724
        %v3726 = vpop.f32.mrb[0].mxu0
        %3727 = vmatprep.mubr.bf16.mxu0 0
        %3728 = vmatmul.mubr.bf16.gmra.mrb[0].mxu0 %v1840
        %v3729 = vpop.f32.mrb[0].mxu0
        %v3730 = vadd.f32 %v3569, %v3729
        %v3731 = vpop.f32.mrb[0].mxu0
        %v3732 = vpop.f32.mrb[0].mxu0
        %v3733 = vadd.f32 %v3572, %v3732
        %v3734 = vpop.f32.mrb[0].mxu0
        %3735 = vmatprep.mubr.bf16.mxu0 0
        %3736 = vmatmul.mubr.bf16.gmra.mrb[0].mxu0 %v1881
        %v3737 = vpop.f32.mrb[0].mxu0
        %v3738 = vadd.f32 %v3577, %v3737
        %v3739 = vpop.f32.mrb[0].mxu0
        %v3740 = vpop.f32.mrb[0].mxu0
        %v3741 = vadd.f32 %v3580, %v3740
        %v3742 = vpop.f32.mrb[0].mxu0
        %3743 = vmatprep.mubr.bf16.mxu0 0
        %3744 = vmatmul.mubr.bf16.gmra.mrb[0].mxu0 %v1922
        %v3745 = vpop.f32.mrb[0].mxu0
        %v3746 = vadd.f32 %v3585, %v3745
        %v3747 = vpop.f32.mrb[0].mxu0
        %v3748 = vpop.f32.mrb[0].mxu0
        %v3749 = vadd.f32 %v3588, %v3748
        %v3750 = vpop.f32.mrb[0].mxu0
        %3751 = vmatprep.mubr.bf16.mxu0 0
        %3752 = vmatmul.mubr.bf16.gmra.mrb[0].mxu0 %v2596
        %v3753 = vpop.f32.mrb[0].mxu0
        %v3754 = vadd.f32 %v3593, %v3753
        %v3755 = vpop.f32.mrb[0].mxu0
        %v3756 = vpop.f32.mrb[0].mxu0
        %v3757 = vadd.f32 %v3596, %v3756
        %v3758 = vpop.f32.mrb[0].mxu0
        %3759 = vmatprep.mubr.bf16.mxu0 0
        %3760 = vmatmul.mubr.bf16.gmra.mrb[0].mxu0 %v3250
        %v3761 = vpop.f32.mrb[0].mxu0
        %v3762 = vadd.f32 %v3601, %v3761
        %v3763 = vpop.f32.mrb[0].mxu0
        %v3764 = vpop.f32.mrb[0].mxu0
        %v3765 = vadd.f32 %v3604, %v3764
        %v3766 = vpop.f32.mrb[0].mxu0
        %3767 = vdwg.mxu0
        %v3768 = vadd.f32 %v3178, %v3642
        %v3769 = vadd.f32 %v3179, %v3645
        %v3770 = vadd.f32 %v3180, %v3650
        %v3771 = vadd.f32 %v3181, %v3653
        %v3772 = vadd.f32 %v3182, %v3658
        %v3773 = vadd.f32 %v3183, %v3661
        %v3774 = vadd.f32 %v3184, %v3666
        %v3775 = vadd.f32 %v3185, %v3669
        %v3776 = vadd.f32 %v3186, %v3674
        %v3777 = vadd.f32 %v3187, %v3677
        %v3778 = vadd.f32 %v3188, %v3682
        %v3779 = vadd.f32 %v3189, %v3685
        %v3780 = vadd.f32 %v3190, %v3690
        %v3781 = vadd.f32 %v3191, %v3693
        %v3782 = vadd.f32 %v3192, %v3698
        %v3783 = vadd.f32 %v3193, %v3701
        %v3784 = vadd.f32 %v3194, %v3706
        %v3785 = vadd.f32 %v3195, %v3709
        %v3786 = vadd.f32 %v3196, %v3714
        %v3787 = vadd.f32 %v3197, %v3717
        %v3788 = vadd.f32 %v3198, %v3722
        %v3789 = vadd.f32 %v3199, %v3725
        %v3790 = vadd.f32 %v3200, %v3730
        %v3791 = vadd.f32 %v3201, %v3733
        %v3792 = vadd.f32 %v3202, %v3738
        %v3793 = vadd.f32 %v3203, %v3741
        %v3794 = vadd.f32 %v3204, %v3746
        %v3795 = vadd.f32 %v3205, %v3749
        %v3796 = vadd.f32 %v3206, %v3754
        %v3797 = vadd.f32 %v3207, %v3757
        %v3798 = vadd.f32 %v3208, %v3762
        %v3799 = vadd.f32 %v3209, %v3765
        %3800 = vst [vmem:[#allocation5] sm:$0xff] %v3768
        %3801 = vst [vmem:[#allocation5 + $0x8] sm:$0xff] %v3769
        %3802 = vst [vmem:[#allocation5 + $0x10] sm:$0xff] %v3770
        %3803 = vst [vmem:[#allocation5 + $0x18] sm:$0xff] %v3771
        %3804 = vst [vmem:[#allocation5 + $0x20] sm:$0xff] %v3772
        %3805 = vst [vmem:[#allocation5 + $0x28] sm:$0xff] %v3773
        %3806 = vst [vmem:[#allocation5 + $0x30] sm:$0xff] %v3774
        %3807 = vst [vmem:[#allocation5 + $0x38] sm:$0xff] %v3775
        %3808 = vst [vmem:[#allocation5 + $0x40] sm:$0xff] %v3776
        %3809 = vst [vmem:[#allocation5 + $0x48] sm:$0xff] %v3777
        %3810 = vst [vmem:[#allocation5 + $0x50] sm:$0xff] %v3778
        %3811 = vst [vmem:[#allocation5 + $0x58] sm:$0xff] %v3779
        %3812 = vst [vmem:[#allocation5 + $0x60] sm:$0xff] %v3780
        %3813 = vst [vmem:[#allocation5 + $0x68] sm:$0xff] %v3781
        %3814 = vst [vmem:[#allocation5 + $0x70] sm:$0xff] %v3782
        %3815 = vst [vmem:[#allocation5 + $0x78] sm:$0xff] %v3783
        %3816 = vst [vmem:[#allocation5 + $0x80] sm:$0xff] %v3784
        %3817 = vst [vmem:[#allocation5 + $0x88] sm:$0xff] %v3785
        %3818 = vst [vmem:[#allocation5 + $0x90] sm:$0xff] %v3786
        %3819 = vst [vmem:[#allocation5 + $0x98] sm:$0xff] %v3787
        %3820 = vst [vmem:[#allocation5 + $0xa0] sm:$0xff] %v3788
        %3821 = vst [vmem:[#allocation5 + $0xa8] sm:$0xff] %v3789
        %3822 = vst [vmem:[#allocation5 + $0xb0] sm:$0xff] %v3790
        %3823 = vst [vmem:[#allocation5 + $0xb8] sm:$0xff] %v3791
        %3824 = vst [vmem:[#allocation5 + $0xc0] sm:$0xff] %v3792
        %3825 = vst [vmem:[#allocation5 + $0xc8] sm:$0xff] %v3793
        %3826 = vst [vmem:[#allocation5 + $0xd0] sm:$0xff] %v3794
        %3827 = vst [vmem:[#allocation5 + $0xd8] sm:$0xff] %v3795
        %3828 = vst [vmem:[#allocation5 + $0xe0] sm:$0xff] %v3796
        %3829 = vst [vmem:[#allocation5 + $0xe8] sm:$0xff] %v3797
        %3830 = vst [vmem:[#allocation5 + $0xf0] sm:$0xff] %v3798
        %3831 = vst [vmem:[#allocation5 + $0xf8] sm:$0xff] %v3799
        %v3832 = vld [vmem:[#allocation5] sm:$0xff]
        %v3833 = vld [vmem:[#allocation5 + $0x8] sm:$0xff]
        %v3834 = vld [vmem:[#allocation5 + $0x10] sm:$0xff]
        %v3835 = vld [vmem:[#allocation5 + $0x18] sm:$0xff]
        %v3836 = vld [vmem:[#allocation5 + $0x20] sm:$0xff]
        %v3837 = vld [vmem:[#allocation5 + $0x28] sm:$0xff]
        %v3838 = vld [vmem:[#allocation5 + $0x30] sm:$0xff]
        %v3839 = vld [vmem:[#allocation5 + $0x38] sm:$0xff]
        %v3840 = vld [vmem:[#allocation5 + $0x40] sm:$0xff]
        %v3841 = vld [vmem:[#allocation5 + $0x48] sm:$0xff]
        %v3842 = vld [vmem:[#allocation5 + $0x50] sm:$0xff]
        %v3843 = vld [vmem:[#allocation5 + $0x58] sm:$0xff]
        %v3844 = vld [vmem:[#allocation5 + $0x60] sm:$0xff]
        %v3845 = vld [vmem:[#allocation5 + $0x68] sm:$0xff]
        %v3846 = vld [vmem:[#allocation5 + $0x70] sm:$0xff]
        %v3847 = vld [vmem:[#allocation5 + $0x78] sm:$0xff]
        %v3848 = vld [vmem:[#allocation5 + $0x80] sm:$0xff]
        %v3849 = vld [vmem:[#allocation5 + $0x88] sm:$0xff]
        %v3850 = vld [vmem:[#allocation5 + $0x90] sm:$0xff]
        %v3851 = vld [vmem:[#allocation5 + $0x98] sm:$0xff]
        %v3852 = vld [vmem:[#allocation5 + $0xa0] sm:$0xff]
        %v3853 = vld [vmem:[#allocation5 + $0xa8] sm:$0xff]
        %v3854 = vld [vmem:[#allocation5 + $0xb0] sm:$0xff]
        %v3855 = vld [vmem:[#allocation5 + $0xb8] sm:$0xff]
        %v3856 = vld [vmem:[#allocation5 + $0xc0] sm:$0xff]
        %v3857 = vld [vmem:[#allocation5 + $0xc8] sm:$0xff]
        %v3858 = vld [vmem:[#allocation5 + $0xd0] sm:$0xff]
        %v3859 = vld [vmem:[#allocation5 + $0xd8] sm:$0xff]
        %v3860 = vld [vmem:[#allocation5 + $0xe0] sm:$0xff]
        %v3861 = vld [vmem:[#allocation5 + $0xe8] sm:$0xff]
        %v3862 = vld [vmem:[#allocation5 + $0xf0] sm:$0xff]
        %v3863 = vld [vmem:[#allocation5 + $0xf8] sm:$0xff]
        %v3864 = vmax.f32 %v3832, 0.0
        %v3865 = vmax.f32 %v3833, 0.0
        %v3866 = vmax.f32 %v3834, 0.0
        %v3867 = vmax.f32 %v3835, 0.0
        %v3868 = vmax.f32 %v3836, 0.0
        %v3869 = vmax.f32 %v3837, 0.0
        %v3870 = vmax.f32 %v3838, 0.0
        %v3871 = vmax.f32 %v3839, 0.0
        %v3872 = vmax.f32 %v3840, 0.0
        %v3873 = vmax.f32 %v3841, 0.0
        %v3874 = vmax.f32 %v3842, 0.0
        %v3875 = vmax.f32 %v3843, 0.0
        %v3876 = vmax.f32 %v3844, 0.0
        %v3877 = vmax.f32 %v3845, 0.0
        %v3878 = vmax.f32 %v3846, 0.0
        %v3879 = vmax.f32 %v3847, 0.0
        %v3880 = vmax.f32 %v3848, 0.0
        %v3881 = vmax.f32 %v3849, 0.0
        %v3882 = vmax.f32 %v3850, 0.0
        %v3883 = vmax.f32 %v3851, 0.0
        %v3884 = vmax.f32 %v3852, 0.0
        %v3885 = vmax.f32 %v3853, 0.0
        %v3886 = vmax.f32 %v3854, 0.0
        %v3887 = vmax.f32 %v3855, 0.0
        %v3888 = vmax.f32 %v3856, 0.0
        %v3889 = vmax.f32 %v3857, 0.0
        %v3890 = vmax.f32 %v3858, 0.0
        %v3891 = vmax.f32 %v3859, 0.0
        %v3892 = vmax.f32 %v3860, 0.0
        %v3893 = vmax.f32 %v3861, 0.0
        %v3894 = vmax.f32 %v3862, 0.0
        %v3895 = vmax.f32 %v3863, 0.0
        %v3896 = vpack.c.bf16 %v3865, %v3864
        %v3897 = vpack.c.bf16 %v3867, %v3866
        %v3898 = vpack.c.bf16 %v3869, %v3868
        %v3899 = vpack.c.bf16 %v3871, %v3870
        %v3900 = vpack.c.bf16 %v3873, %v3872
        %v3901 = vpack.c.bf16 %v3875, %v3874
        %v3902 = vpack.c.bf16 %v3877, %v3876
        %v3903 = vpack.c.bf16 %v3879, %v3878
        %v3904 = vpack.c.bf16 %v3881, %v3880
        %v3905 = vpack.c.bf16 %v3883, %v3882
        %v3906 = vpack.c.bf16 %v3885, %v3884
        %v3907 = vpack.c.bf16 %v3887, %v3886
        %v3908 = vpack.c.bf16 %v3889, %v3888
        %v3909 = vpack.c.bf16 %v3891, %v3890
        %v3910 = vpack.c.bf16 %v3893, %v3892
        %v3911 = vpack.c.bf16 %v3895, %v3894
        %v3928 = vunpack.c.l.b16 %v3896
        %v3929 = vunpack.c.h.b16 %v3896
        %v3930 = vunpack.c.l.b16 %v3897
        %v3931 = vunpack.c.h.b16 %v3897
        %v3932 = vunpack.c.l.b16 %v3898
        %v3933 = vunpack.c.h.b16 %v3898
        %v3934 = vunpack.c.l.b16 %v3899
        %v3935 = vunpack.c.h.b16 %v3899
        %v3936 = vunpack.c.l.b16 %v3900
        %v3937 = vunpack.c.h.b16 %v3900
        %v3938 = vunpack.c.l.b16 %v3901
        %v3939 = vunpack.c.h.b16 %v3901
        %v3940 = vunpack.c.l.b16 %v3902
        %v3941 = vunpack.c.h.b16 %v3902
        %v3942 = vunpack.c.l.b16 %v3903
        %v3943 = vunpack.c.h.b16 %v3903
        %v3944 = vunpack.c.l.b16 %v3904
        %v3945 = vunpack.c.h.b16 %v3904
        %v3946 = vunpack.c.l.b16 %v3905
        %v3947 = vunpack.c.h.b16 %v3905
        %v3948 = vunpack.c.l.b16 %v3906
        %v3949 = vunpack.c.h.b16 %v3906
        %v3950 = vunpack.c.l.b16 %v3907
        %v3951 = vunpack.c.h.b16 %v3907
        %v3952 = vunpack.c.l.b16 %v3908
        %v3953 = vunpack.c.h.b16 %v3908
        %v3954 = vunpack.c.l.b16 %v3909
        %v3955 = vunpack.c.h.b16 %v3909
        %v3956 = vunpack.c.l.b16 %v3910
        %v3957 = vunpack.c.h.b16 %v3910
        %v3958 = vunpack.c.l.b16 %v3911
        %v3959 = vunpack.c.h.b16 %v3911
        %v3960 = vpack.c.b16 %v3928, %v3928
        %v3961 = vpack.c.b16 %v3929, %v3929
        %v3962 = vpack.c.b16 %v3930, %v3930
        %v3963 = vpack.c.b16 %v3931, %v3931
        %v3964 = vpack.c.b16 %v3932, %v3932
        %v3965 = vpack.c.b16 %v3933, %v3933
        %v3966 = vpack.c.b16 %v3934, %v3934
        %v3967 = vpack.c.b16 %v3935, %v3935
        %v3968 = vpack.c.b16 %v3936, %v3936
        %v3969 = vpack.c.b16 %v3937, %v3937
        %v3970 = vpack.c.b16 %v3938, %v3938
        %v3971 = vpack.c.b16 %v3939, %v3939
        %v3972 = vpack.c.b16 %v3940, %v3940
        %v3973 = vpack.c.b16 %v3941, %v3941
        %v3974 = vpack.c.b16 %v3942, %v3942
        %v3975 = vpack.c.b16 %v3943, %v3943
        %v3976 = vpack.c.b16 %v3944, %v3944
        %v3977 = vpack.c.b16 %v3945, %v3945
        %v3978 = vpack.c.b16 %v3946, %v3946
        %v3979 = vpack.c.b16 %v3947, %v3947
        %v3980 = vpack.c.b16 %v3948, %v3948
        %v3981 = vpack.c.b16 %v3949, %v3949
        %v3982 = vpack.c.b16 %v3950, %v3950
        %v3983 = vpack.c.b16 %v3951, %v3951
        %v3984 = vpack.c.b16 %v3952, %v3952
        %v3985 = vpack.c.b16 %v3953, %v3953
        %v3986 = vpack.c.b16 %v3954, %v3954
        %v3987 = vpack.c.b16 %v3955, %v3955
        %v3988 = vpack.c.b16 %v3956, %v3956
        %v3989 = vpack.c.b16 %v3957, %v3957
        %v3990 = vpack.c.b16 %v3958, %v3958
        %v3991 = vpack.c.b16 %v3959, %v3959
        %4024 = vst [vmem:[%s220] sm:$0xf] %v3960
        %4025 = vst [vmem:[%s220 + $0x4] sm:$0xf] %v3961
        %4026 = vst [vmem:[%s220 + $0x8] sm:$0xf] %v3962
        %4027 = vst [vmem:[%s220 + $0xc] sm:$0xf] %v3963
        %4028 = vst [vmem:[%s220 + $0x10] sm:$0xf] %v3964
        %4029 = vst [vmem:[%s220 + $0x14] sm:$0xf] %v3965
        %4030 = vst [vmem:[%s220 + $0x18] sm:$0xf] %v3966
        %4031 = vst [vmem:[%s220 + $0x1c] sm:$0xf] %v3967
        %4032 = vst [vmem:[%s220 + $0x20] sm:$0xf] %v3968
        %4033 = vst [vmem:[%s220 + $0x24] sm:$0xf] %v3969
        %4034 = vst [vmem:[%s220 + $0x28] sm:$0xf] %v3970
        %4035 = vst [vmem:[%s220 + $0x2c] sm:$0xf] %v3971
        %4036 = vst [vmem:[%s220 + $0x30] sm:$0xf] %v3972
        %4037 = vst [vmem:[%s220 + $0x34] sm:$0xf] %v3973
        %4038 = vst [vmem:[%s220 + $0x38] sm:$0xf] %v3974
        %4039 = vst [vmem:[%s220 + $0x3c] sm:$0xf] %v3975
        %4040 = vst [vmem:[%s220 + $0x40] sm:$0xf] %v3976
        %4041 = vst [vmem:[%s220 + $0x44] sm:$0xf] %v3977
        %4042 = vst [vmem:[%s220 + $0x48] sm:$0xf] %v3978
        %4043 = vst [vmem:[%s220 + $0x4c] sm:$0xf] %v3979
        %4044 = vst [vmem:[%s220 + $0x50] sm:$0xf] %v3980
        %4045 = vst [vmem:[%s220 + $0x54] sm:$0xf] %v3981
        %4046 = vst [vmem:[%s220 + $0x58] sm:$0xf] %v3982
        %4047 = vst [vmem:[%s220 + $0x5c] sm:$0xf] %v3983
        %4048 = vst [vmem:[%s220 + $0x60] sm:$0xf] %v3984
        %4049 = vst [vmem:[%s220 + $0x64] sm:$0xf] %v3985
        %4050 = vst [vmem:[%s220 + $0x68] sm:$0xf] %v3986
        %4051 = vst [vmem:[%s220 + $0x6c] sm:$0xf] %v3987
        %4052 = vst [vmem:[%s220 + $0x70] sm:$0xf] %v3988
        %4053 = vst [vmem:[%s220 + $0x74] sm:$0xf] %v3989
        %4054 = vst [vmem:[%s220 + $0x78] sm:$0xf] %v3990
        %4055 = vst [vmem:[%s220 + $0x7c] sm:$0xf] %v3991
        %s4056 = sand.u32 %s127, 1
        %s4057 = scalar_lea.sflag [#allocation8], %s4056
        %s4058 = sand.u32 %s127, 1
        %s4059 = smul.addr %s4058, 128
        %s4060 = scalar_lea.vmem [#allocation11], %s4059
        // Predicated region
        $region57: #{tpu_custom_call.1} parent=35 // pred_check
          %p4061 = pneg %p137
        $region58: #{tpu_custom_call.1} parent=35 // pred_check_branch
          %4063 = sbr.rel (%p4061) target = $region60
        $region59: #{tpu_custom_call.1} parent=35 // pred_region
          %s4064 = smul.u32 16, %s26
          %s4066 = ssub.s32 2048, 2048
          %4067 = vsyncadd %s4057, %s4066
          %s4068 = smul.addr %s4064, 2
          %s4069 = smul.addr %s25, 32
          %s4070 = sadd.s32 %s4068, %s4069
          %s4071 = smul.addr %s4070, 64
          %s4072 = scalar_lea.hbm %s5, %s4071
          %s4073 = sshll.u32 %s4060, 4
          %s4074 = int_to_ptr.vmem [resolvable:$true] %s4073
          %4079 = dma.vmem_to_hbm [thread:$0]  %s4074, 2048, %s4072, %s4057, 64, 64, 4
        $region60: #{tpu_custom_call.1} parent=35 // pred_fallthru
          _
      $region36: #{tpu_custom_call.1} parent=5 // pred_fallthru
        _
      %p4080 = scmp.le.s32.totalorder 2, %s16
      // Predicated region
      $region61: #{tpu_custom_call.1} parent=5 // pred_check
        %p4081 = pneg %p4080
      $region62: #{tpu_custom_call.1} parent=5 // pred_check_branch
        %4083 = sbr.rel (%p4081) target = $region64
      $region63: #{tpu_custom_call.1} parent=5 // pred_region
        %s4084 = ssub.s32 %s16, 2
        // Predicated region
        $region65: #{tpu_custom_call.1} parent=63 // pred_check
          %p4085 = pneg %p143
        $region66: #{tpu_custom_call.1} parent=63 // pred_check_branch
          %4087 = sbr.rel (%p4085) target = $region68
        $region67: #{tpu_custom_call.1} parent=63 // pred_region
          %s4088 = sand.u32 %s128, 1
          %s4089 = scalar_lea.sflag [#allocation8], %s4088
          %s4090 = sand.u32 %s128, 1
          %s4091 = smul.addr %s4090, 128
          %s4092 = scalar_lea.vmem [#allocation11], %s4091
          %4093 = dma.done %s4089, 2048
        $region68: #{tpu_custom_call.1} parent=63 // pred_fallthru
          _
      $region64: #{tpu_custom_call.1} parent=5 // pred_fallthru
        _
    $region6: #{tpu_custom_call.1} parent=1 // loop_footer
      %s20 = sadd.s32 1, %s16
    $region7: #{tpu_custom_call.1} parent=1 // loop_footer_branch
      %15 = sbr.rel target = $region3
    $region8: #{tpu_custom_call.1} parent=1 // loop_exit
      _
    %4094 = vsyncpa [#allocation7], 1
    %s4095 = scalar_lea.sflag [#allocation7], 1
    %4096 = vsyncpa %s4095, 1
    %4097 = vsyncpa [#allocation10], 1
    %4098 = vsyncpa [#allocation8], 1
    %s4099 = scalar_lea.sflag [#allocation8], 1
    %4100 = vsyncpa %s4099, 1
  %4101 = vsyncmov [#allocation3]
  %s4102 = vpop.sfrf %4101
  %p4103 = scmp.eq.s32.totalorder %s4102, 0
  %p4104 = pneg %p4103
  %4106 = shalt.err (%p4104)
  %s4107 = scalar_lea.sflag [#allocation3], 1
  %4108 = vsyncmov %s4107
  %s4109 = vpop.sfrf %4108
  %p4110 = scmp.eq.s32.totalorder %s4109, 0
  %p4111 = pneg %p4110
  %4113 = shalt.err (%p4111)

</llo_original>
